<compile_context>
chip_gen: v5e
topology: v5e:2x2
jax: 0.10.0
libtpu: 0.0.40
codegen_flags: <defaults>
</compile_context>

<pallas_src>
import functools

import jax
import jax.numpy as jnp
import numpy as np
from jax import lax
from jax.experimental import pallas as pl
from jax.experimental.pallas import tpu as pltpu

EPS = 1e-5  # PyTorch BatchNorm2d default


def _bottleneck_kernel(stride, has_shortcut, *refs):
    refs = list(refs)
    x_ref = refs.pop(0)
    xs_ref = refs.pop(0) if (has_shortcut and stride > 1) else None
    w1_ref, s1_ref, b1_ref = refs.pop(0), refs.pop(0), refs.pop(0)
    w2_ref, s2_ref, b2_ref = refs.pop(0), refs.pop(0), refs.pop(0)
    w3_ref, s3_ref, b3_ref = refs.pop(0), refs.pop(0), refs.pop(0)
    if has_shortcut:
        ws_ref, ss_ref, bs_ref = refs.pop(0), refs.pop(0), refs.pop(0)
    o_ref, pad_ref = refs.pop(0), refs.pop(0)

    H, W, Cin = x_ref.shape[1], x_ref.shape[2], x_ref.shape[3]
    P = w1_ref.shape[1]
    Cout = w3_ref.shape[1]
    Ho = (H - 1) // stride + 1
    Wo = (W - 1) // stride + 1

    # ---- re-zero only the 1-pixel halo of the persistent pad scratch ---------------
    # (interior is fully overwritten below; cheap: ~4/W of a full-buffer zero)
    pad_ref[0:1, :, :] = jnp.zeros((1, W + 2, P), pad_ref.dtype)
    pad_ref[H + 1:H + 2, :, :] = jnp.zeros((1, W + 2, P), pad_ref.dtype)
    pad_ref[1:H + 1, 0:1, :] = jnp.zeros((H, 1, P), pad_ref.dtype)
    pad_ref[1:H + 1, W + 1:W + 2, :] = jnp.zeros((H, 1, P), pad_ref.dtype)

    x = x_ref[0]                                   # (H, W, Cin), bf16
    xf = x.reshape(H * W, Cin)

    # ---- conv1 (1x1) + bn1 + relu: bf16 MXU, f32 accumulate/epilogue ---------------
    o1 = jnp.dot(xf, w1_ref[...], preferred_element_type=jnp.float32)
    o1 = jnp.maximum(o1 * s1_ref[...] + b1_ref[...], 0.0)            # (H*W, P) f32
    pad_ref[1:H + 1, 1:W + 1, :] = o1.reshape(H, W, P).astype(pad_ref.dtype)

    # ---- conv2 (3x3, stride, padding=1) + bn2 + relu -------------------------------
    # kj taps folded into the contraction: per kernel row ki, one matmul with K = 3P.
    acc = jnp.zeros((Ho * Wo, P), jnp.float32)
    for ki in range(3):
        if stride == 1:
            taps = [pad_ref[ki:ki + Ho, kj:kj + Wo, :] for kj in range(3)]
        else:
            taps = [pad_ref[pl.ds(ki, Ho, stride), pl.ds(kj, Wo, stride), :]
                    for kj in range(3)]
        row_op = jnp.concatenate(taps, axis=-1).reshape(Ho * Wo, 3 * P)  # bf16
        acc = acc + jnp.dot(row_op, w2_ref[ki], preferred_element_type=jnp.float32)
    o2 = jnp.maximum(acc * s2_ref[...] + b2_ref[...], 0.0)           # (Ho*Wo, P) f32

    # ---- conv3 (1x1) + bn3 ----------------------------------------------------------
    o3 = jnp.dot(o2.astype(w3_ref.dtype), w3_ref[...],
                 preferred_element_type=jnp.float32)
    o3 = o3 * s3_ref[...] + b3_ref[...]                              # (Ho*Wo, Cout)

    # ---- shortcut -------------------------------------------------------------------
    if has_shortcut:
        xsf = xf if stride == 1 else xs_ref[0].reshape(Ho * Wo, Cin)
        sc = jnp.dot(xsf, ws_ref[...], preferred_element_type=jnp.float32)
        sc = sc * ss_ref[...] + bs_ref[...]
    else:
        sc = xf.astype(jnp.float32)   # identity path: stride == 1 and Cin == Cout

    out = jnp.maximum(o3 + sc, 0.0)
    o_ref[0] = out.reshape(Ho, Wo, Cout).astype(o_ref.dtype)


def _fold_bn(gamma, beta, mean, var):
    scale = gamma / jnp.sqrt(var + EPS)
    bias = beta - mean * scale
    return (scale.reshape(1, -1).astype(jnp.float32),
            bias.reshape(1, -1).astype(jnp.float32))


def bottleneck_forward(x_nchw, params, stride):
    """x_nchw: (N, Cin, H, W) float32.  Returns (N, 4*planes, Ho, Wo) float32."""
    N, Cin, H, W = x_nchw.shape
    P = params["w1"].shape[0]          # planes (conv1 weight is OIHW: (P, Cin, 1, 1))
    Cout = params["w3"].shape[0]       # 4 * planes
    Ho = (H - 1) // stride + 1
    Wo = (W - 1) // stride + 1
    has_shortcut = (stride != 1) or (Cin != Cout)

    cdt = jnp.bfloat16  # MXU operand dtype

    # NCHW -> NHWC (bf16); weights OIHW -> matmul-friendly bf16 layouts (XLA glue).
    x = jnp.transpose(x_nchw, (0, 2, 3, 1)).astype(cdt)
    w1 = jnp.transpose(params["w1"][:, :, 0, 0], (1, 0)).astype(cdt)            # (Cin, P)
    w2 = jnp.transpose(params["w2"], (2, 3, 1, 0)).reshape(3, 3 * P, P).astype(cdt)  # (3, 3P, P)
    w3 = jnp.transpose(params["w3"][:, :, 0, 0], (1, 0)).astype(cdt)            # (P, Cout)
    s1, b1 = _fold_bn(params["g1"], params["be1"], params["m1"], params["v1"])
    s2, b2 = _fold_bn(params["g2"], params["be2"], params["m2"], params["v2"])
    s3, b3 = _fold_bn(params["g3"], params["be3"], params["m3"], params["v3"])

    c2 = lambda n: (0, 0)
    c3 = lambda n: (0, 0, 0)

    inputs = [x]
    in_specs = [pl.BlockSpec((1, H, W, Cin), lambda n: (n, 0, 0, 0))]
    if has_shortcut and stride > 1:
        # Pre-stride the shortcut input with XLA instead of [::stride] inside the kernel.
        xs = x[:, ::stride, ::stride, :]
        inputs.append(xs)
        in_specs.append(pl.BlockSpec((1, Ho, Wo, Cin), lambda n: (n, 0, 0, 0)))

    inputs += [w1, s1, b1, w2, s2, b2, w3, s3, b3]
    in_specs += [
        pl.BlockSpec((Cin, P), c2), pl.BlockSpec((1, P), c2), pl.BlockSpec((1, P), c2),
        pl.BlockSpec((3, 3 * P, P), c3), pl.BlockSpec((1, P), c2), pl.BlockSpec((1, P), c2),
        pl.BlockSpec((P, Cout), c2), pl.BlockSpec((1, Cout), c2), pl.BlockSpec((1, Cout), c2),
    ]
    if has_shortcut:
        ws = jnp.transpose(params["ws"][:, :, 0, 0], (1, 0)).astype(cdt)        # (Cin, Cout)
        ss, bs = _fold_bn(params["gs"], params["bes"], params["ms"], params["vs"])
        inputs += [ws, ss, bs]
        in_specs += [pl.BlockSpec((Cin, Cout), c2),
                     pl.BlockSpec((1, Cout), c2), pl.BlockSpec((1, Cout), c2)]

    kernel = functools.partial(_bottleneck_kernel, stride, has_shortcut)

    out_nhwc = pl.pallas_call(
        kernel,
        out_shape=jax.ShapeDtypeStruct((N, Ho, Wo, Cout), jnp.float32),
        grid_spec=pltpu.PrefetchScalarGridSpec(
            num_scalar_prefetch=0,
            grid=(N,),
            in_specs=in_specs,
            out_specs=pl.BlockSpec((1, Ho, Wo, Cout), lambda n: (n, 0, 0, 0)),
            scratch_shapes=[pltpu.VMEM((H + 2, W + 2, P), cdt)],
        ),
        compiler_params=pltpu.CompilerParams(
            dimension_semantics=("parallel",),
            vmem_limit_bytes=48 * 1024 * 1024,
        ),
    )(*inputs)

    return jnp.transpose(out_nhwc, (0, 3, 1, 2))


# --------------------------- pure-JAX reference (NCHW, f32, like PyTorch) -----------
def _conv_nchw(x, w, stride=1, padding=0):
    return lax.conv_general_dilated(
        x, w, (stride, stride), [(padding, padding), (padding, padding)],
        dimension_numbers=("NCHW", "OIHW", "NCHW"))


def _bn_nchw(x, g, b, m, v):
    s = (g / jnp.sqrt(v + EPS)).reshape(1, -1, 1, 1)
    return (x - m.reshape(1, -1, 1, 1)) * s + b.reshape(1, -1, 1, 1)


def bottleneck_reference(x, p, stride):
    out = jax.nn.relu(_bn_nchw(_conv_nchw(x, p["w1"]), p["g1"], p["be1"], p["m1"], p["v1"]))
    out = jax.nn.relu(_bn_nchw(_conv_nchw(out, p["w2"], stride, 1), p["g2"], p["be2"], p["m2"], p["v2"]))
    out = _bn_nchw(_conv_nchw(out, p["w3"]), p["g3"], p["be3"], p["m3"], p["v3"])
    Cin, Cout = x.shape[1], p["w3"].shape[0]
    if stride != 1 or Cin != Cout:
        sc = _bn_nchw(_conv_nchw(x, p["ws"], stride), p["gs"], p["bes"], p["ms"], p["vs"])
    else:
        sc = x
    return jax.nn.relu(out + sc)


# ----------------------------------- demo --------------------------------------------
def make_params(key, in_planes, planes):
    exp = 4
    ks = jax.random.split(key, 20)

    def w(k, shape):
        return (0.1 * jax.random.normal(k, shape)).astype(jnp.float32)

    def bn(k, c):
        k1, k2, k3, k4 = jax.random.split(k, 4)
        return (jax.random.uniform(k1, (c,), minval=0.5, maxval=1.5).astype(jnp.float32),
                (0.1 * jax.random.normal(k2, (c,))).astype(jnp.float32),
                (0.1 * jax.random.normal(k3, (c,))).astype(jnp.float32),
                jax.random.uniform(k4, (c,), minval=0.5, maxval=1.5).astype(jnp.float32))

    p = {}
    p["w1"] = w(ks[0], (planes, in_planes, 1, 1))
    p["g1"], p["be1"], p["m1"], p["v1"] = bn(ks[1], planes)
    p["w2"] = w(ks[2], (planes, planes, 3, 3))
    p["g2"], p["be2"], p["m2"], p["v2"] = bn(ks[3], planes)
    p["w3"] = w(ks[4], (exp * planes, planes, 1, 1))
    p["g3"], p["be3"], p["m3"], p["v3"] = bn(ks[5], exp * planes)
    p["ws"] = w(ks[6], (exp * planes, in_planes, 1, 1))
    p["gs"], p["bes"], p["ms"], p["vs"] = bn(ks[7], exp * planes)
    return p


if __name__ == "__main__":
    key = jax.random.PRNGKey(0)

    # Two small configs, both lane-dense on the output (Cout = 4*planes = 128):
    #   (a) projection shortcut (Cin != 4*planes), (b) identity shortcut (Cin == 4*planes).
    configs = [
        # (N, in_planes, planes, H, W, stride)
        (2, 64, 32, 16, 16, 1),
        (2, 128, 32, 16, 16, 1),
    ]

    for (N, in_planes, planes, H, W, stride) in configs:
        kx, kp, key = jax.random.split(key, 3)
        x = jax.random.normal(kx, (N, in_planes, H, W), dtype=jnp.float32)
        params = make_params(kp, in_planes, planes)

        out = jax.block_until_ready(bottleneck_forward(x, params, stride))
        ref = jax.block_until_ready(bottleneck_reference(x, params, stride))

        Ho = (H - 1) // stride + 1
        Wo = (W - 1) // stride + 1
        assert out.shape == ref.shape == (N, 4 * planes, Ho, Wo)
        # bf16 MXU operands (f32 accumulation) => looser tolerance than pure-f32.
        np.testing.assert_allclose(np.asarray(out), np.asarray(ref), rtol=5e-2, atol=5e-2)

    print("KERNEL_OK")
</pallas_src>

<mosaic_0001>
module attributes {stable_mosaic.version = 11 : i64} {
  func.func @_bottleneck_kernel(%arg0: i32, %arg1: memref<1x16x16x64xbf16, #tpu.memory_space<vmem>>, %arg2: memref<64x32xbf16, #tpu.memory_space<vmem>>, %arg3: memref<1x32xf32, #tpu.memory_space<vmem>>, %arg4: memref<1x32xf32, #tpu.memory_space<vmem>>, %arg5: memref<3x96x32xbf16, #tpu.memory_space<vmem>>, %arg6: memref<1x32xf32, #tpu.memory_space<vmem>>, %arg7: memref<1x32xf32, #tpu.memory_space<vmem>>, %arg8: memref<32x128xbf16, #tpu.memory_space<vmem>>, %arg9: memref<1x128xf32, #tpu.memory_space<vmem>>, %arg10: memref<1x128xf32, #tpu.memory_space<vmem>>, %arg11: memref<64x128xbf16, #tpu.memory_space<vmem>>, %arg12: memref<1x128xf32, #tpu.memory_space<vmem>>, %arg13: memref<1x128xf32, #tpu.memory_space<vmem>>, %arg14: memref<1x16x16x128xf32, #tpu.memory_space<vmem>>, %arg15: memref<18x18x32xbf16, #tpu.memory_space<vmem>>) attributes {dimension_semantics = [#tpu.dimension_semantics<parallel>], iteration_bounds = array<i64: 2>, scalar_prefetch = 0 : i64, scratch_operands = 1 : i64, tpu.core_type = #tpu.core_type<tc>, window_params = [{transform_indices = @transform_0, window_bounds = array<i64: 1, 16, 16, 64>}, {pipeline_mode = #tpu.pipeline_mode<synchronous>, transform_indices = @transform_1, window_bounds = array<i64: 64, 32>}, {pipeline_mode = #tpu.pipeline_mode<synchronous>, transform_indices = @transform_2, window_bounds = array<i64: 1, 32>}, {pipeline_mode = #tpu.pipeline_mode<synchronous>, transform_indices = @transform_3, window_bounds = array<i64: 1, 32>}, {pipeline_mode = #tpu.pipeline_mode<synchronous>, transform_indices = @transform_4, window_bounds = array<i64: 3, 96, 32>}, {pipeline_mode = #tpu.pipeline_mode<synchronous>, transform_indices = @transform_5, window_bounds = array<i64: 1, 32>}, {pipeline_mode = #tpu.pipeline_mode<synchronous>, transform_indices = @transform_6, window_bounds = array<i64: 1, 32>}, {pipeline_mode = #tpu.pipeline_mode<synchronous>, transform_indices = @transform_7, window_bounds = array<i64: 32, 128>}, {pipeline_mode = #tpu.pipeline_mode<synchronous>, transform_indices = @transform_8, window_bounds = array<i64: 1, 128>}, {pipeline_mode = #tpu.pipeline_mode<synchronous>, transform_indices = @transform_9, window_bounds = array<i64: 1, 128>}, {pipeline_mode = #tpu.pipeline_mode<synchronous>, transform_indices = @transform_10, window_bounds = array<i64: 64, 128>}, {pipeline_mode = #tpu.pipeline_mode<synchronous>, transform_indices = @transform_11, window_bounds = array<i64: 1, 128>}, {pipeline_mode = #tpu.pipeline_mode<synchronous>, transform_indices = @transform_12, window_bounds = array<i64: 1, 128>}, {transform_indices = @transform_13, window_bounds = array<i64: 1, 16, 16, 128>}]} {
    %cst = arith.constant 0.000000e+00 : bf16
    %0 = vector.broadcast %cst : bf16 to vector<1x18x32xbf16>
    %c0 = arith.constant 0 : index
    %c0_0 = arith.constant 0 : index
    %c0_1 = arith.constant 0 : index
    %1 = vector.load %arg15[%c0, %c0_0, %c0_1] : memref<18x18x32xbf16, #tpu.memory_space<vmem>>, vector<1x18x32xbf16>
    tpu.vector_store %arg15[%c0, %c0_0, %c0_1], %0 {strides = array<i32>} : memref<18x18x32xbf16, #tpu.memory_space<vmem>>, vector<1x18x32xbf16>,
    %cst_2 = arith.constant 0.000000e+00 : bf16
    %2 = vector.broadcast %cst_2 : bf16 to vector<1x18x32xbf16>
    %c17 = arith.constant 17 : index
    %c0_3 = arith.constant 0 : index
    %c0_4 = arith.constant 0 : index
    %3 = vector.load %arg15[%c17, %c0_3, %c0_4] : memref<18x18x32xbf16, #tpu.memory_space<vmem>>, vector<1x18x32xbf16>
    tpu.vector_store %arg15[%c17, %c0_3, %c0_4], %2 {strides = array<i32>} : memref<18x18x32xbf16, #tpu.memory_space<vmem>>, vector<1x18x32xbf16>,
    %cst_5 = arith.constant 0.000000e+00 : bf16
    %4 = vector.broadcast %cst_5 : bf16 to vector<16x1x32xbf16>
    %c1 = arith.constant 1 : index
    %c0_6 = arith.constant 0 : index
    %c0_7 = arith.constant 0 : index
    %5 = vector.load %arg15[%c1, %c0_6, %c0_7] : memref<18x18x32xbf16, #tpu.memory_space<vmem>>, vector<16x1x32xbf16>
    tpu.vector_store %arg15[%c1, %c0_6, %c0_7], %4 {strides = array<i32>} : memref<18x18x32xbf16, #tpu.memory_space<vmem>>, vector<16x1x32xbf16>,
    %cst_8 = arith.constant 0.000000e+00 : bf16
    %6 = vector.broadcast %cst_8 : bf16 to vector<16x1x32xbf16>
    %c1_9 = arith.constant 1 : index
    %c17_10 = arith.constant 17 : index
    %c0_11 = arith.constant 0 : index
    %7 = vector.load %arg15[%c1_9, %c17_10, %c0_11] : memref<18x18x32xbf16, #tpu.memory_space<vmem>>, vector<16x1x32xbf16>
    tpu.vector_store %arg15[%c1_9, %c17_10, %c0_11], %6 {strides = array<i32>} : memref<18x18x32xbf16, #tpu.memory_space<vmem>>, vector<16x1x32xbf16>,
    %c0_12 = arith.constant 0 : index
    %c0_13 = arith.constant 0 : index
    %c0_14 = arith.constant 0 : index
    %c0_15 = arith.constant 0 : index
    %8 = vector.load %arg1[%c0_12, %c0_13, %c0_14, %c0_15] : memref<1x16x16x64xbf16, #tpu.memory_space<vmem>>, vector<1x16x16x64xbf16>
    %9 = vector.shape_cast %8 : vector<1x16x16x64xbf16> to vector<16x16x64xbf16>
    %10 = vector.shape_cast %9 : vector<16x16x64xbf16> to vector<256x64xbf16>
    %c0_16 = arith.constant 0 : index
    %c0_17 = arith.constant 0 : index
    %11 = vector.load %arg2[%c0_16, %c0_17] : memref<64x32xbf16, #tpu.memory_space<vmem>>, vector<64x32xbf16>
    %cst_18 = arith.constant dense<0.000000e+00> : vector<256x32xf32>
    %12 = tpu.matmul %10, %11, %cst_18 {dimension_numbers = #tpu.dot_dimension_numbers<[1], [0], [0], [1], [0, 0, 1, 1], [], []>} : vector<256x64xbf16>, vector<64x32xbf16>, vector<256x32xf32> -> vector<256x32xf32>
    %c0_19 = arith.constant 0 : index
    %c0_20 = arith.constant 0 : index
    %13 = vector.load %arg3[%c0_19, %c0_20] : memref<1x32xf32, #tpu.memory_space<vmem>>, vector<1x32xf32>
    %14 = vector.broadcast %13 : vector<1x32xf32> to vector<256x32xf32>
    %15 = arith.mulf %12, %14 : vector<256x32xf32>
    %c0_21 = arith.constant 0 : index
    %c0_22 = arith.constant 0 : index
    %16 = vector.load %arg4[%c0_21, %c0_22] : memref<1x32xf32, #tpu.memory_space<vmem>>, vector<1x32xf32>
    %17 = vector.broadcast %16 : vector<1x32xf32> to vector<256x32xf32>
    %18 = arith.addf %15, %17 : vector<256x32xf32>
    %cst_23 = arith.constant 0.000000e+00 : f32
    %19 = vector.broadcast %cst_23 : f32 to vector<256x32xf32>
    %20 = arith.maximumf %18, %19 : vector<256x32xf32>
    %21 = vector.shape_cast %20 : vector<256x32xf32> to vector<16x16x32xf32>
    %22 = arith.truncf %21 : vector<16x16x32xf32> to vector<16x16x32xbf16>
    %c1_24 = arith.constant 1 : index
    %c1_25 = arith.constant 1 : index
    %c0_26 = arith.constant 0 : index
    %23 = vector.load %arg15[%c1_24, %c1_25, %c0_26] : memref<18x18x32xbf16, #tpu.memory_space<vmem>>, vector<16x16x32xbf16>
    tpu.vector_store %arg15[%c1_24, %c1_25, %c0_26], %22 {strides = array<i32>} : memref<18x18x32xbf16, #tpu.memory_space<vmem>>, vector<16x16x32xbf16>,
    %cst_27 = arith.constant 0.000000e+00 : f32
    %24 = vector.broadcast %cst_27 : f32 to vector<256x32xf32>
    %c0_28 = arith.constant 0 : index
    %c0_29 = arith.constant 0 : index
    %c0_30 = arith.constant 0 : index
    %25 = vector.load %arg15[%c0_28, %c0_29, %c0_30] : memref<18x18x32xbf16, #tpu.memory_space<vmem>>, vector<16x16x32xbf16>
    %c0_31 = arith.constant 0 : index
    %c1_32 = arith.constant 1 : index
    %c0_33 = arith.constant 0 : index
    %26 = vector.load %arg15[%c0_31, %c1_32, %c0_33] : memref<18x18x32xbf16, #tpu.memory_space<vmem>>, vector<16x16x32xbf16>
    %c0_34 = arith.constant 0 : index
    %c2 = arith.constant 2 : index
    %c0_35 = arith.constant 0 : index
    %27 = vector.load %arg15[%c0_34, %c2, %c0_35] : memref<18x18x32xbf16, #tpu.memory_space<vmem>>, vector<16x16x32xbf16>
    %28 = tpu.concatenate %25, %26, %27 in 2 : vector<16x16x32xbf16>, vector<16x16x32xbf16>, vector<16x16x32xbf16> -> vector<16x16x96xbf16>
    %29 = vector.shape_cast %28 : vector<16x16x96xbf16> to vector<256x96xbf16>
    %c0_36 = arith.constant 0 : index
    %c0_37 = arith.constant 0 : index
    %c0_38 = arith.constant 0 : index
    %30 = vector.load %arg5[%c0_36, %c0_37, %c0_38] : memref<3x96x32xbf16, #tpu.memory_space<vmem>>, vector<1x96x32xbf16>
    %31 = vector.shape_cast %30 : vector<1x96x32xbf16> to vector<96x32xbf16>
    %cst_39 = arith.constant dense<0.000000e+00> : vector<256x32xf32>
    %32 = tpu.matmul %29, %31, %cst_39 {dimension_numbers = #tpu.dot_dimension_numbers<[1], [0], [0], [1], [0, 0, 1, 1], [], []>} : vector<256x96xbf16>, vector<96x32xbf16>, vector<256x32xf32> -> vector<256x32xf32>
    %33 = arith.addf %24, %32 : vector<256x32xf32>
    %c1_40 = arith.constant 1 : index
    %c0_41 = arith.constant 0 : index
    %c0_42 = arith.constant 0 : index
    %34 = vector.load %arg15[%c1_40, %c0_41, %c0_42] : memref<18x18x32xbf16, #tpu.memory_space<vmem>>, vector<16x16x32xbf16>
    %c1_43 = arith.constant 1 : index
    %c1_44 = arith.constant 1 : index
    %c0_45 = arith.constant 0 : index
    %35 = vector.load %arg15[%c1_43, %c1_44, %c0_45] : memref<18x18x32xbf16, #tpu.memory_space<vmem>>, vector<16x16x32xbf16>
    %c1_46 = arith.constant 1 : index
    %c2_47 = arith.constant 2 : index
    %c0_48 = arith.constant 0 : index
    %36 = vector.load %arg15[%c1_46, %c2_47, %c0_48] : memref<18x18x32xbf16, #tpu.memory_space<vmem>>, vector<16x16x32xbf16>
    %37 = tpu.concatenate %34, %35, %36 in 2 : vector<16x16x32xbf16>, vector<16x16x32xbf16>, vector<16x16x32xbf16> -> vector<16x16x96xbf16>
    %38 = vector.shape_cast %37 : vector<16x16x96xbf16> to vector<256x96xbf16>
    %c1_49 = arith.constant 1 : index
    %c0_50 = arith.constant 0 : index
    %c0_51 = arith.constant 0 : index
    %39 = vector.load %arg5[%c1_49, %c0_50, %c0_51] : memref<3x96x32xbf16, #tpu.memory_space<vmem>>, vector<1x96x32xbf16>
    %40 = vector.shape_cast %39 : vector<1x96x32xbf16> to vector<96x32xbf16>
    %cst_52 = arith.constant dense<0.000000e+00> : vector<256x32xf32>
    %41 = tpu.matmul %38, %40, %cst_52 {dimension_numbers = #tpu.dot_dimension_numbers<[1], [0], [0], [1], [0, 0, 1, 1], [], []>} : vector<256x96xbf16>, vector<96x32xbf16>, vector<256x32xf32> -> vector<256x32xf32>
    %42 = arith.addf %33, %41 : vector<256x32xf32>
    %c2_53 = arith.constant 2 : index
    %c0_54 = arith.constant 0 : index
    %c0_55 = arith.constant 0 : index
    %43 = vector.load %arg15[%c2_53, %c0_54, %c0_55] : memref<18x18x32xbf16, #tpu.memory_space<vmem>>, vector<16x16x32xbf16>
    %c2_56 = arith.constant 2 : index
    %c1_57 = arith.constant 1 : index
    %c0_58 = arith.constant 0 : index
    %44 = vector.load %arg15[%c2_56, %c1_57, %c0_58] : memref<18x18x32xbf16, #tpu.memory_space<vmem>>, vector<16x16x32xbf16>
    %c2_59 = arith.constant 2 : index
    %c2_60 = arith.constant 2 : index
    %c0_61 = arith.constant 0 : index
    %45 = vector.load %arg15[%c2_59, %c2_60, %c0_61] : memref<18x18x32xbf16, #tpu.memory_space<vmem>>, vector<16x16x32xbf16>
    %46 = tpu.concatenate %43, %44, %45 in 2 : vector<16x16x32xbf16>, vector<16x16x32xbf16>, vector<16x16x32xbf16> -> vector<16x16x96xbf16>
    %47 = vector.shape_cast %46 : vector<16x16x96xbf16> to vector<256x96xbf16>
    %c2_62 = arith.constant 2 : index
    %c0_63 = arith.constant 0 : index
    %c0_64 = arith.constant 0 : index
    %48 = vector.load %arg5[%c2_62, %c0_63, %c0_64] : memref<3x96x32xbf16, #tpu.memory_space<vmem>>, vector<1x96x32xbf16>
    %49 = vector.shape_cast %48 : vector<1x96x32xbf16> to vector<96x32xbf16>
    %cst_65 = arith.constant dense<0.000000e+00> : vector<256x32xf32>
    %50 = tpu.matmul %47, %49, %cst_65 {dimension_numbers = #tpu.dot_dimension_numbers<[1], [0], [0], [1], [0, 0, 1, 1], [], []>} : vector<256x96xbf16>, vector<96x32xbf16>, vector<256x32xf32> -> vector<256x32xf32>
    %51 = arith.addf %42, %50 : vector<256x32xf32>
    %c0_66 = arith.constant 0 : index
    %c0_67 = arith.constant 0 : index
    %52 = vector.load %arg6[%c0_66, %c0_67] : memref<1x32xf32, #tpu.memory_space<vmem>>, vector<1x32xf32>
    %53 = vector.broadcast %52 : vector<1x32xf32> to vector<256x32xf32>
    %54 = arith.mulf %51, %53 : vector<256x32xf32>
    %c0_68 = arith.constant 0 : index
    %c0_69 = arith.constant 0 : index
    %55 = vector.load %arg7[%c0_68, %c0_69] : memref<1x32xf32, #tpu.memory_space<vmem>>, vector<1x32xf32>
    %56 = vector.broadcast %55 : vector<1x32xf32> to vector<256x32xf32>
    %57 = arith.addf %54, %56 : vector<256x32xf32>
    %cst_70 = arith.constant 0.000000e+00 : f32
    %58 = vector.broadcast %cst_70 : f32 to vector<256x32xf32>
    %59 = arith.maximumf %57, %58 : vector<256x32xf32>
    %60 = arith.truncf %59 : vector<256x32xf32> to vector<256x32xbf16>
    %c0_71 = arith.constant 0 : index
    %c0_72 = arith.constant 0 : index
    %61 = vector.load %arg8[%c0_71, %c0_72] : memref<32x128xbf16, #tpu.memory_space<vmem>>, vector<32x128xbf16>
    %cst_73 = arith.constant dense<0.000000e+00> : vector<256x128xf32>
    %62 = tpu.matmul %60, %61, %cst_73 {dimension_numbers = #tpu.dot_dimension_numbers<[1], [0], [0], [1], [0, 0, 1, 1], [], []>} : vector<256x32xbf16>, vector<32x128xbf16>, vector<256x128xf32> -> vector<256x128xf32>
    %c0_74 = arith.constant 0 : index
    %c0_75 = arith.constant 0 : index
    %63 = vector.load %arg9[%c0_74, %c0_75] : memref<1x128xf32, #tpu.memory_space<vmem>>, vector<1x128xf32>
    %64 = vector.broadcast %63 : vector<1x128xf32> to vector<256x128xf32>
    %65 = arith.mulf %62, %64 : vector<256x128xf32>
    %c0_76 = arith.constant 0 : index
    %c0_77 = arith.constant 0 : index
    %66 = vector.load %arg10[%c0_76, %c0_77] : memref<1x128xf32, #tpu.memory_space<vmem>>, vector<1x128xf32>
    %67 = vector.broadcast %66 : vector<1x128xf32> to vector<256x128xf32>
    %68 = arith.addf %65, %67 : vector<256x128xf32>
    %c0_78 = arith.constant 0 : index
    %c0_79 = arith.constant 0 : index
    %69 = vector.load %arg11[%c0_78, %c0_79] : memref<64x128xbf16, #tpu.memory_space<vmem>>, vector<64x128xbf16>
    %cst_80 = arith.constant dense<0.000000e+00> : vector<256x128xf32>
    %70 = tpu.matmul %10, %69, %cst_80 {dimension_numbers = #tpu.dot_dimension_numbers<[1], [0], [0], [1], [0, 0, 1, 1], [], []>} : vector<256x64xbf16>, vector<64x128xbf16>, vector<256x128xf32> -> vector<256x128xf32>
    %c0_81 = arith.constant 0 : index
    %c0_82 = arith.constant 0 : index
    %71 = vector.load %arg12[%c0_81, %c0_82] : memref<1x128xf32, #tpu.memory_space<vmem>>, vector<1x128xf32>
    %72 = vector.broadcast %71 : vector<1x128xf32> to vector<256x128xf32>
    %73 = arith.mulf %70, %72 : vector<256x128xf32>
    %c0_83 = arith.constant 0 : index
    %c0_84 = arith.constant 0 : index
    %74 = vector.load %arg13[%c0_83, %c0_84] : memref<1x128xf32, #tpu.memory_space<vmem>>, vector<1x128xf32>
    %75 = vector.broadcast %74 : vector<1x128xf32> to vector<256x128xf32>
    %76 = arith.addf %73, %75 : vector<256x128xf32>
    %77 = arith.addf %68, %76 : vector<256x128xf32>
    %cst_85 = arith.constant 0.000000e+00 : f32
    %78 = vector.broadcast %cst_85 : f32 to vector<256x128xf32>
    %79 = arith.maximumf %77, %78 : vector<256x128xf32>
    %80 = vector.shape_cast %79 : vector<256x128xf32> to vector<16x16x128xf32>
    %c0_86 = arith.constant 0 : index
    %c0_87 = arith.constant 0 : index
    %c0_88 = arith.constant 0 : index
    %c0_89 = arith.constant 0 : index
    %81 = vector.load %arg14[%c0_86, %c0_87, %c0_88, %c0_89] : memref<1x16x16x128xf32, #tpu.memory_space<vmem>>, vector<1x16x16x128xf32>
    %82 = vector.shape_cast %81 : vector<1x16x16x128xf32> to vector<16x16x128xf32>
    %83 = vector.shape_cast %80 : vector<16x16x128xf32> to vector<1x16x16x128xf32>
    tpu.vector_store %arg14[%c0_86, %c0_87, %c0_88, %c0_89], %83 {strides = array<i32>} : memref<1x16x16x128xf32, #tpu.memory_space<vmem>>, vector<1x16x16x128xf32>,
    return
  }
  func.func @transform_0(%arg0: i32) -> (i32, i32, i32, i32) {
    %c0_i32 = arith.constant 0 : i32
    %c0_i32_0 = arith.constant 0 : i32
    %c0_i32_1 = arith.constant 0 : i32
    %c0_i32_2 = arith.constant 0 : i32
    return %arg0, %c0_i32, %c0_i32_0, %c0_i32_1 : i32, i32, i32, i32
  }
  func.func @transform_1(%arg0: i32) -> (i32, i32) {
    %c0_i32 = arith.constant 0 : i32
    %c0_i32_0 = arith.constant 0 : i32
    %c0_i32_1 = arith.constant 0 : i32
    return %c0_i32, %c0_i32_0 : i32, i32
  }
  func.func @transform_2(%arg0: i32) -> (i32, i32) {
    %c0_i32 = arith.constant 0 : i32
    %c0_i32_0 = arith.constant 0 : i32
    %c0_i32_1 = arith.constant 0 : i32
    return %c0_i32, %c0_i32_0 : i32, i32
  }
  func.func @transform_3(%arg0: i32) -> (i32, i32) {
    %c0_i32 = arith.constant 0 : i32
    %c0_i32_0 = arith.constant 0 : i32
    %c0_i32_1 = arith.constant 0 : i32
    return %c0_i32, %c0_i32_0 : i32, i32
  }
  func.func @transform_4(%arg0: i32) -> (i32, i32, i32) {
    %c0_i32 = arith.constant 0 : i32
    %c0_i32_0 = arith.constant 0 : i32
    %c0_i32_1 = arith.constant 0 : i32
    %c0_i32_2 = arith.constant 0 : i32
    return %c0_i32, %c0_i32_0, %c0_i32_1 : i32, i32, i32
  }
  func.func @transform_5(%arg0: i32) -> (i32, i32) {
    %c0_i32 = arith.constant 0 : i32
    %c0_i32_0 = arith.constant 0 : i32
    %c0_i32_1 = arith.constant 0 : i32
    return %c0_i32, %c0_i32_0 : i32, i32
  }
  func.func @transform_6(%arg0: i32) -> (i32, i32) {
    %c0_i32 = arith.constant 0 : i32
    %c0_i32_0 = arith.constant 0 : i32
    %c0_i32_1 = arith.constant 0 : i32
    return %c0_i32, %c0_i32_0 : i32, i32
  }
  func.func @transform_7(%arg0: i32) -> (i32, i32) {
    %c0_i32 = arith.constant 0 : i32
    %c0_i32_0 = arith.constant 0 : i32
    %c0_i32_1 = arith.constant 0 : i32
    return %c0_i32, %c0_i32_0 : i32, i32
  }
  func.func @transform_8(%arg0: i32) -> (i32, i32) {
    %c0_i32 = arith.constant 0 : i32
    %c0_i32_0 = arith.constant 0 : i32
    %c0_i32_1 = arith.constant 0 : i32
    return %c0_i32, %c0_i32_0 : i32, i32
  }
  func.func @transform_9(%arg0: i32) -> (i32, i32) {
    %c0_i32 = arith.constant 0 : i32
    %c0_i32_0 = arith.constant 0 : i32
    %c0_i32_1 = arith.constant 0 : i32
    return %c0_i32, %c0_i32_0 : i32, i32
  }
  func.func @transform_10(%arg0: i32) -> (i32, i32) {
    %c0_i32 = arith.constant 0 : i32
    %c0_i32_0 = arith.constant 0 : i32
    %c0_i32_1 = arith.constant 0 : i32
    return %c0_i32, %c0_i32_0 : i32, i32
  }
  func.func @transform_11(%arg0: i32) -> (i32, i32) {
    %c0_i32 = arith.constant 0 : i32
    %c0_i32_0 = arith.constant 0 : i32
    %c0_i32_1 = arith.constant 0 : i32
    return %c0_i32, %c0_i32_0 : i32, i32
  }
  func.func @transform_12(%arg0: i32) -> (i32, i32) {
    %c0_i32 = arith.constant 0 : i32
    %c0_i32_0 = arith.constant 0 : i32
    %c0_i32_1 = arith.constant 0 : i32
    return %c0_i32, %c0_i32_0 : i32, i32
  }
  func.func @transform_13(%arg0: i32) -> (i32, i32, i32, i32) {
    %c0_i32 = arith.constant 0 : i32
    %c0_i32_0 = arith.constant 0 : i32
    %c0_i32_1 = arith.constant 0 : i32
    %c0_i32_2 = arith.constant 0 : i32
    return %arg0, %c0_i32, %c0_i32_0, %c0_i32_1 : i32, i32, i32, i32
  }
}

</mosaic_0001>

<llo_original>
// kernel: tpu_custom_call.1
$region0: #{tpu_custom_call.1}
  #allocation0 [shape = 'u32[]', space=smem, size = 0x4, offset = 0x4, fixed_abs, tag = 'smem constant byte address 0x4 - core index']
  #allocation1 [shape = 'u32[72,128]{1,0:T(1,128)}', space=vmem, size = 0x9000, scoped, tag = 'internal scratch']
  #allocation2 [shape = 'bf16[18,18,32]{2,1,0:T(8,128)(2,1)}', space=vmem, size = 0x1b000, scoped, tag = 'scratch operand']
  %s0 = inlined_call_operand.hbm [shape: bf16[2,16,16,64], index: 0, kind: input, shape index: {}]
  %s1 = inlined_call_operand.vmem [shape: bf16[64,32], index: 1, kind: input, shape index: {}]
  %s2 = inlined_call_operand.vmem [shape: f32[1,32], index: 2, kind: input, shape index: {}]
  %s3 = inlined_call_operand.vmem [shape: f32[1,32], index: 3, kind: input, shape index: {}]
  %s4 = inlined_call_operand.vmem [shape: bf16[3,96,32], index: 4, kind: input, shape index: {}]
  %s5 = inlined_call_operand.vmem [shape: f32[1,32], index: 5, kind: input, shape index: {}]
  %s6 = inlined_call_operand.vmem [shape: f32[1,32], index: 6, kind: input, shape index: {}]
  %s7 = inlined_call_operand.vmem [shape: bf16[32,128], index: 7, kind: input, shape index: {}]
  %s8 = inlined_call_operand.vmem [shape: f32[1,128], index: 8, kind: input, shape index: {}]
  %s9 = inlined_call_operand.vmem [shape: f32[1,128], index: 9, kind: input, shape index: {}]
  %s10 = inlined_call_operand.vmem [shape: bf16[64,128], index: 10, kind: input, shape index: {}]
  %s11 = inlined_call_operand.vmem [shape: f32[1,128], index: 11, kind: input, shape index: {}]
  %s12 = inlined_call_operand.vmem [shape: f32[1,128], index: 12, kind: input, shape index: {}]
  %s13 = inlined_call_operand.hbm [shape: f32[2,16,16,128], index: 13, kind: output, shape index: {}]
  %s14 = sld [smem:[#allocation0]]
  $region89: #{tpu_custom_call.1} parent=0
    _
  %s16 = ssub.s32 1, %s14
  %s17 = scalar_select 0, %s16, %s14
  $region1: #{tpu_custom_call.1} parent=0
    #allocation3 [shape = 'u8[131072]{0}', space=vmem, size = 0x20000, scoped, tag = 'input window, operand 0']
    #allocation4 [shape = 's32[2]{0}', space=sflag, size = 0x8, scoped, tag = 'scoped memory for tpu_custom_call.1']
    #allocation5 [shape = 's32[2]{0}', space=sflag, size = 0x8, scoped, tag = 'scoped memory for tpu_custom_call.1']
    #allocation6 [shape = 'u8[262144]{0}', space=vmem, size = 0x40000, scoped, tag = 'output window, operand 0']
    %18 = vsyncpa [#allocation4], 0
    %s19 = scalar_lea.sflag [#allocation4], 1
    %20 = vsyncpa %s19, 0
    %21 = vsyncpa [#allocation5], 0
    %s22 = scalar_lea.sflag [#allocation5], 1
    %23 = vsyncpa %s22, 0
    loop: start=0, step=1, limit=4
    $region2: #{tpu_custom_call.1} parent=1 // loop_pre_header
      _
    $region3: #{tpu_custom_call.1} parent=1 // loop_header
      %s25 = sphi 0, %s29
      %p26 = scmp.ge.s32.totalorder %s25, 4
      %s35 = sphi 0, %s37
      %s38 = sphi 0, %s35
      %s39 = sphi 0, %s38
      %s55 = sphi 0, %s39
      %s59 = sphi 0, %s59
      %s61 = sphi 0, %s59
      %s62 = sphi 0, %s61
      %s76 = sphi 0, %s62
      %s80 = sphi 0, %s80
      %s82 = sphi 0, %s80
      %s83 = sphi 0, %s82
      %s97 = sphi 0, %s83
      %s101 = sphi 0, %s101
      %s103 = sphi 0, %s101
      %s104 = sphi 0, %s103
      %s118 = sphi 0, %s104
      %s122 = sphi 0, %s122
      %s124 = sphi 0, %s122
      %s125 = sphi 0, %s124
      %s139 = sphi 0, %s125
      %s143 = sphi 0, %s143
      %s145 = sphi 0, %s143
      %s146 = sphi 0, %s145
      %s160 = sphi 0, %s146
      %s164 = sphi 0, %s164
      %s166 = sphi 0, %s164
      %s167 = sphi 0, %s166
      %s181 = sphi 0, %s167
      %s185 = sphi 0, %s185
      %s187 = sphi 0, %s185
      %s188 = sphi 0, %s187
      %s202 = sphi 0, %s188
      %s206 = sphi 0, %s206
      %s208 = sphi 0, %s206
      %s209 = sphi 0, %s208
      %s223 = sphi 0, %s209
      %s227 = sphi 0, %s227
      %s229 = sphi 0, %s227
      %s230 = sphi 0, %s229
      %s244 = sphi 0, %s230
      %s248 = sphi 0, %s248
      %s250 = sphi 0, %s248
      %s251 = sphi 0, %s250
      %s265 = sphi 0, %s251
      %s269 = sphi 0, %s269
      %s271 = sphi 0, %s269
      %s272 = sphi 0, %s271
      %s286 = sphi 0, %s272
      %s290 = sphi 0, %s290
      %s292 = sphi 0, %s290
      %s293 = sphi 0, %s292
      %s307 = sphi 0, %s293
      %s313 = sphi 0, %s315
      %s316 = sphi 0, %s313
      %s317 = sphi 0, %s316
      %s333 = sphi 0, %s317
    $region4: #{tpu_custom_call.1} parent=1 // loop_header_branch
      %28 = sbr.rel (%p26) target = $region8
    $region5: #{tpu_custom_call.1} parent=1 // loop_body
      %s30 = ssub.s32 %s25, 1
      %s31 = ssub.s32 %s25, 2
      %s32 = sadd.s32 %s25, 1
      %s33 = ssub.s32 %s25, %s32
      %p34 = scmp.eq.s32.totalorder %s33, 0
      %s36 = sadd.s32 %s35, 1
      %s37 = scalar_select %p34, %s35, %s36
      %p40 = pneg %p34
      %p41 = scmp.eq.s32.totalorder %s25, 1
      %p42 = por %p40, %p41
      %p43 = scmp.ne.s32.totalorder %s35, %s38
      %p44 = scmp.eq.s32.totalorder %s25, 0
      %p45 = por %p43, %p44
      %p46 = scmp.ne.s32.totalorder %s35, %s38
      %p47 = scmp.eq.s32.totalorder %s30, 1
      %p48 = por %p46, %p47
      %p49 = scmp.ne.s32.totalorder %s38, %s39
      %p50 = scmp.eq.s32.totalorder %s30, 0
      %p51 = por %p49, %p50
      %p52 = scmp.ne.s32.totalorder %s38, %s39
      %p53 = scmp.eq.s32.totalorder %s31, 1
      %p54 = por %p52, %p53
      %p56 = scmp.ne.s32.totalorder %s39, %s55
      %p57 = scmp.eq.s32.totalorder %s31, 0
      %p58 = por %p56, %p57
      %s60 = sadd.s32 %s59, 1
      %p63 = scmp.eq.s32.totalorder %s25, 1
      %p64 = scmp.ne.s32.totalorder %s59, %s61
      %p65 = scmp.eq.s32.totalorder %s25, 0
      %p66 = por %p64, %p65
      %p67 = scmp.ne.s32.totalorder %s59, %s61
      %p68 = scmp.eq.s32.totalorder %s30, 1
      %p69 = por %p67, %p68
      %p70 = scmp.ne.s32.totalorder %s61, %s62
      %p71 = scmp.eq.s32.totalorder %s30, 0
      %p72 = por %p70, %p71
      %p73 = scmp.ne.s32.totalorder %s61, %s62
      %p74 = scmp.eq.s32.totalorder %s31, 1
      %p75 = por %p73, %p74
      %p77 = scmp.ne.s32.totalorder %s62, %s76
      %p78 = scmp.eq.s32.totalorder %s31, 0
      %p79 = por %p77, %p78
      %s81 = sadd.s32 %s80, 1
      %p84 = scmp.eq.s32.totalorder %s25, 1
      %p85 = scmp.ne.s32.totalorder %s80, %s82
      %p86 = scmp.eq.s32.totalorder %s25, 0
      %p87 = por %p85, %p86
      %p88 = scmp.ne.s32.totalorder %s80, %s82
      %p89 = scmp.eq.s32.totalorder %s30, 1
      %p90 = por %p88, %p89
      %p91 = scmp.ne.s32.totalorder %s82, %s83
      %p92 = scmp.eq.s32.totalorder %s30, 0
      %p93 = por %p91, %p92
      %p94 = scmp.ne.s32.totalorder %s82, %s83
      %p95 = scmp.eq.s32.totalorder %s31, 1
      %p96 = por %p94, %p95
      %p98 = scmp.ne.s32.totalorder %s83, %s97
      %p99 = scmp.eq.s32.totalorder %s31, 0
      %p100 = por %p98, %p99
      %s102 = sadd.s32 %s101, 1
      %p105 = scmp.eq.s32.totalorder %s25, 1
      %p106 = scmp.ne.s32.totalorder %s101, %s103
      %p107 = scmp.eq.s32.totalorder %s25, 0
      %p108 = por %p106, %p107
      %p109 = scmp.ne.s32.totalorder %s101, %s103
      %p110 = scmp.eq.s32.totalorder %s30, 1
      %p111 = por %p109, %p110
      %p112 = scmp.ne.s32.totalorder %s103, %s104
      %p113 = scmp.eq.s32.totalorder %s30, 0
      %p114 = por %p112, %p113
      %p115 = scmp.ne.s32.totalorder %s103, %s104
      %p116 = scmp.eq.s32.totalorder %s31, 1
      %p117 = por %p115, %p116
      %p119 = scmp.ne.s32.totalorder %s104, %s118
      %p120 = scmp.eq.s32.totalorder %s31, 0
      %p121 = por %p119, %p120
      %s123 = sadd.s32 %s122, 1
      %p126 = scmp.eq.s32.totalorder %s25, 1
      %p127 = scmp.ne.s32.totalorder %s122, %s124
      %p128 = scmp.eq.s32.totalorder %s25, 0
      %p129 = por %p127, %p128
      %p130 = scmp.ne.s32.totalorder %s122, %s124
      %p131 = scmp.eq.s32.totalorder %s30, 1
      %p132 = por %p130, %p131
      %p133 = scmp.ne.s32.totalorder %s124, %s125
      %p134 = scmp.eq.s32.totalorder %s30, 0
      %p135 = por %p133, %p134
      %p136 = scmp.ne.s32.totalorder %s124, %s125
      %p137 = scmp.eq.s32.totalorder %s31, 1
      %p138 = por %p136, %p137
      %p140 = scmp.ne.s32.totalorder %s125, %s139
      %p141 = scmp.eq.s32.totalorder %s31, 0
      %p142 = por %p140, %p141
      %s144 = sadd.s32 %s143, 1
      %p147 = scmp.eq.s32.totalorder %s25, 1
      %p148 = scmp.ne.s32.totalorder %s143, %s145
      %p149 = scmp.eq.s32.totalorder %s25, 0
      %p150 = por %p148, %p149
      %p151 = scmp.ne.s32.totalorder %s143, %s145
      %p152 = scmp.eq.s32.totalorder %s30, 1
      %p153 = por %p151, %p152
      %p154 = scmp.ne.s32.totalorder %s145, %s146
      %p155 = scmp.eq.s32.totalorder %s30, 0
      %p156 = por %p154, %p155
      %p157 = scmp.ne.s32.totalorder %s145, %s146
      %p158 = scmp.eq.s32.totalorder %s31, 1
      %p159 = por %p157, %p158
      %p161 = scmp.ne.s32.totalorder %s146, %s160
      %p162 = scmp.eq.s32.totalorder %s31, 0
      %p163 = por %p161, %p162
      %s165 = sadd.s32 %s164, 1
      %p168 = scmp.eq.s32.totalorder %s25, 1
      %p169 = scmp.ne.s32.totalorder %s164, %s166
      %p170 = scmp.eq.s32.totalorder %s25, 0
      %p171 = por %p169, %p170
      %p172 = scmp.ne.s32.totalorder %s164, %s166
      %p173 = scmp.eq.s32.totalorder %s30, 1
      %p174 = por %p172, %p173
      %p175 = scmp.ne.s32.totalorder %s166, %s167
      %p176 = scmp.eq.s32.totalorder %s30, 0
      %p177 = por %p175, %p176
      %p178 = scmp.ne.s32.totalorder %s166, %s167
      %p179 = scmp.eq.s32.totalorder %s31, 1
      %p180 = por %p178, %p179
      %p182 = scmp.ne.s32.totalorder %s167, %s181
      %p183 = scmp.eq.s32.totalorder %s31, 0
      %p184 = por %p182, %p183
      %s186 = sadd.s32 %s185, 1
      %p189 = scmp.eq.s32.totalorder %s25, 1
      %p190 = scmp.ne.s32.totalorder %s185, %s187
      %p191 = scmp.eq.s32.totalorder %s25, 0
      %p192 = por %p190, %p191
      %p193 = scmp.ne.s32.totalorder %s185, %s187
      %p194 = scmp.eq.s32.totalorder %s30, 1
      %p195 = por %p193, %p194
      %p196 = scmp.ne.s32.totalorder %s187, %s188
      %p197 = scmp.eq.s32.totalorder %s30, 0
      %p198 = por %p196, %p197
      %p199 = scmp.ne.s32.totalorder %s187, %s188
      %p200 = scmp.eq.s32.totalorder %s31, 1
      %p201 = por %p199, %p200
      %p203 = scmp.ne.s32.totalorder %s188, %s202
      %p204 = scmp.eq.s32.totalorder %s31, 0
      %p205 = por %p203, %p204
      %s207 = sadd.s32 %s206, 1
      %p210 = scmp.eq.s32.totalorder %s25, 1
      %p211 = scmp.ne.s32.totalorder %s206, %s208
      %p212 = scmp.eq.s32.totalorder %s25, 0
      %p213 = por %p211, %p212
      %p214 = scmp.ne.s32.totalorder %s206, %s208
      %p215 = scmp.eq.s32.totalorder %s30, 1
      %p216 = por %p214, %p215
      %p217 = scmp.ne.s32.totalorder %s208, %s209
      %p218 = scmp.eq.s32.totalorder %s30, 0
      %p219 = por %p217, %p218
      %p220 = scmp.ne.s32.totalorder %s208, %s209
      %p221 = scmp.eq.s32.totalorder %s31, 1
      %p222 = por %p220, %p221
      %p224 = scmp.ne.s32.totalorder %s209, %s223
      %p225 = scmp.eq.s32.totalorder %s31, 0
      %p226 = por %p224, %p225
      %s228 = sadd.s32 %s227, 1
      %p231 = scmp.eq.s32.totalorder %s25, 1
      %p232 = scmp.ne.s32.totalorder %s227, %s229
      %p233 = scmp.eq.s32.totalorder %s25, 0
      %p234 = por %p232, %p233
      %p235 = scmp.ne.s32.totalorder %s227, %s229
      %p236 = scmp.eq.s32.totalorder %s30, 1
      %p237 = por %p235, %p236
      %p238 = scmp.ne.s32.totalorder %s229, %s230
      %p239 = scmp.eq.s32.totalorder %s30, 0
      %p240 = por %p238, %p239
      %p241 = scmp.ne.s32.totalorder %s229, %s230
      %p242 = scmp.eq.s32.totalorder %s31, 1
      %p243 = por %p241, %p242
      %p245 = scmp.ne.s32.totalorder %s230, %s244
      %p246 = scmp.eq.s32.totalorder %s31, 0
      %p247 = por %p245, %p246
      %s249 = sadd.s32 %s248, 1
      %p252 = scmp.eq.s32.totalorder %s25, 1
      %p253 = scmp.ne.s32.totalorder %s248, %s250
      %p254 = scmp.eq.s32.totalorder %s25, 0
      %p255 = por %p253, %p254
      %p256 = scmp.ne.s32.totalorder %s248, %s250
      %p257 = scmp.eq.s32.totalorder %s30, 1
      %p258 = por %p256, %p257
      %p259 = scmp.ne.s32.totalorder %s250, %s251
      %p260 = scmp.eq.s32.totalorder %s30, 0
      %p261 = por %p259, %p260
      %p262 = scmp.ne.s32.totalorder %s250, %s251
      %p263 = scmp.eq.s32.totalorder %s31, 1
      %p264 = por %p262, %p263
      %p266 = scmp.ne.s32.totalorder %s251, %s265
      %p267 = scmp.eq.s32.totalorder %s31, 0
      %p268 = por %p266, %p267
      %s270 = sadd.s32 %s269, 1
      %p273 = scmp.eq.s32.totalorder %s25, 1
      %p274 = scmp.ne.s32.totalorder %s269, %s271
      %p275 = scmp.eq.s32.totalorder %s25, 0
      %p276 = por %p274, %p275
      %p277 = scmp.ne.s32.totalorder %s269, %s271
      %p278 = scmp.eq.s32.totalorder %s30, 1
      %p279 = por %p277, %p278
      %p280 = scmp.ne.s32.totalorder %s271, %s272
      %p281 = scmp.eq.s32.totalorder %s30, 0
      %p282 = por %p280, %p281
      %p283 = scmp.ne.s32.totalorder %s271, %s272
      %p284 = scmp.eq.s32.totalorder %s31, 1
      %p285 = por %p283, %p284
      %p287 = scmp.ne.s32.totalorder %s272, %s286
      %p288 = scmp.eq.s32.totalorder %s31, 0
      %p289 = por %p287, %p288
      %s291 = sadd.s32 %s290, 1
      %p294 = scmp.eq.s32.totalorder %s25, 1
      %p295 = scmp.ne.s32.totalorder %s290, %s292
      %p296 = scmp.eq.s32.totalorder %s25, 0
      %p297 = por %p295, %p296
      %p298 = scmp.ne.s32.totalorder %s290, %s292
      %p299 = scmp.eq.s32.totalorder %s30, 1
      %p300 = por %p298, %p299
      %p301 = scmp.ne.s32.totalorder %s292, %s293
      %p302 = scmp.eq.s32.totalorder %s30, 0
      %p303 = por %p301, %p302
      %p304 = scmp.ne.s32.totalorder %s292, %s293
      %p305 = scmp.eq.s32.totalorder %s31, 1
      %p306 = por %p304, %p305
      %p308 = scmp.ne.s32.totalorder %s293, %s307
      %p309 = scmp.eq.s32.totalorder %s31, 0
      %p310 = por %p308, %p309
      %s311 = ssub.s32 %s25, %s32
      %p312 = scmp.eq.s32.totalorder %s311, 0
      %s314 = sadd.s32 %s313, 1
      %s315 = scalar_select %p312, %s313, %s314
      %p318 = pneg %p312
      %p319 = scmp.eq.s32.totalorder %s25, 1
      %p320 = por %p318, %p319
      %p321 = scmp.ne.s32.totalorder %s313, %s316
      %p322 = scmp.eq.s32.totalorder %s25, 0
      %p323 = por %p321, %p322
      %p324 = scmp.ne.s32.totalorder %s313, %s316
      %p325 = scmp.eq.s32.totalorder %s30, 1
      %p326 = por %p324, %p325
      %p327 = scmp.ne.s32.totalorder %s316, %s317
      %p328 = scmp.eq.s32.totalorder %s30, 0
      %p329 = por %p327, %p328
      %p330 = scmp.ne.s32.totalorder %s316, %s317
      %p331 = scmp.eq.s32.totalorder %s31, 1
      %p332 = por %p330, %p331
      %p334 = scmp.ne.s32.totalorder %s317, %s333
      %p335 = scmp.eq.s32.totalorder %s31, 0
      %p336 = por %p334, %p335
      %p337 = scmp.le.s32.totalorder 1, %s25
      %p338 = scmp.lt.s32.totalorder %s25, 3
      %p339 = pnand %p337, %p338
      %p340 = pneg %p339
      // Predicated region
      $region9: #{tpu_custom_call.1} parent=5 // pred_check
        _
      $region10: #{tpu_custom_call.1} parent=5 // pred_check_branch
        %342 = sbr.rel (%p339) target = $region12
      $region11: #{tpu_custom_call.1} parent=5 // pred_region
        %s343 = ssub.s32 %s25, 1
        // Predicated region
        $region13: #{tpu_custom_call.1} parent=11 // pred_check
          %p344 = pneg %p72
        $region14: #{tpu_custom_call.1} parent=11 // pred_check_branch
          %346 = sbr.rel (%p344) target = $region16
        $region15: #{tpu_custom_call.1} parent=11 // pred_region
          _
        $region16: #{tpu_custom_call.1} parent=11 // pred_fallthru
          _
        // Predicated region
        $region17: #{tpu_custom_call.1} parent=11 // pred_check
          %p347 = pneg %p93
        $region18: #{tpu_custom_call.1} parent=11 // pred_check_branch
          %349 = sbr.rel (%p347) target = $region20
        $region19: #{tpu_custom_call.1} parent=11 // pred_region
          _
        $region20: #{tpu_custom_call.1} parent=11 // pred_fallthru
          _
        // Predicated region
        $region21: #{tpu_custom_call.1} parent=11 // pred_check
          %p350 = pneg %p114
        $region22: #{tpu_custom_call.1} parent=11 // pred_check_branch
          %352 = sbr.rel (%p350) target = $region24
        $region23: #{tpu_custom_call.1} parent=11 // pred_region
          _
        $region24: #{tpu_custom_call.1} parent=11 // pred_fallthru
          _
        // Predicated region
        $region25: #{tpu_custom_call.1} parent=11 // pred_check
          %p353 = pneg %p135
        $region26: #{tpu_custom_call.1} parent=11 // pred_check_branch
          %355 = sbr.rel (%p353) target = $region28
        $region27: #{tpu_custom_call.1} parent=11 // pred_region
          _
        $region28: #{tpu_custom_call.1} parent=11 // pred_fallthru
          _
        // Predicated region
        $region29: #{tpu_custom_call.1} parent=11 // pred_check
          %p356 = pneg %p156
        $region30: #{tpu_custom_call.1} parent=11 // pred_check_branch
          %358 = sbr.rel (%p356) target = $region32
        $region31: #{tpu_custom_call.1} parent=11 // pred_region
          _
        $region32: #{tpu_custom_call.1} parent=11 // pred_fallthru
          _
        // Predicated region
        $region33: #{tpu_custom_call.1} parent=11 // pred_check
          %p359 = pneg %p177
        $region34: #{tpu_custom_call.1} parent=11 // pred_check_branch
          %361 = sbr.rel (%p359) target = $region36
        $region35: #{tpu_custom_call.1} parent=11 // pred_region
          _
        $region36: #{tpu_custom_call.1} parent=11 // pred_fallthru
          _
        // Predicated region
        $region37: #{tpu_custom_call.1} parent=11 // pred_check
          %p362 = pneg %p198
        $region38: #{tpu_custom_call.1} parent=11 // pred_check_branch
          %364 = sbr.rel (%p362) target = $region40
        $region39: #{tpu_custom_call.1} parent=11 // pred_region
          _
        $region40: #{tpu_custom_call.1} parent=11 // pred_fallthru
          _
        // Predicated region
        $region41: #{tpu_custom_call.1} parent=11 // pred_check
          %p365 = pneg %p219
        $region42: #{tpu_custom_call.1} parent=11 // pred_check_branch
          %367 = sbr.rel (%p365) target = $region44
        $region43: #{tpu_custom_call.1} parent=11 // pred_region
          _
        $region44: #{tpu_custom_call.1} parent=11 // pred_fallthru
          _
        // Predicated region
        $region45: #{tpu_custom_call.1} parent=11 // pred_check
          %p368 = pneg %p240
        $region46: #{tpu_custom_call.1} parent=11 // pred_check_branch
          %370 = sbr.rel (%p368) target = $region48
        $region47: #{tpu_custom_call.1} parent=11 // pred_region
          _
        $region48: #{tpu_custom_call.1} parent=11 // pred_fallthru
          _
        // Predicated region
        $region49: #{tpu_custom_call.1} parent=11 // pred_check
          %p371 = pneg %p261
        $region50: #{tpu_custom_call.1} parent=11 // pred_check_branch
          %373 = sbr.rel (%p371) target = $region52
        $region51: #{tpu_custom_call.1} parent=11 // pred_region
          _
        $region52: #{tpu_custom_call.1} parent=11 // pred_fallthru
          _
        // Predicated region
        $region53: #{tpu_custom_call.1} parent=11 // pred_check
          %p374 = pneg %p282
        $region54: #{tpu_custom_call.1} parent=11 // pred_check_branch
          %376 = sbr.rel (%p374) target = $region56
        $region55: #{tpu_custom_call.1} parent=11 // pred_region
          _
        $region56: #{tpu_custom_call.1} parent=11 // pred_fallthru
          _
        // Predicated region
        $region57: #{tpu_custom_call.1} parent=11 // pred_check
          %p377 = pneg %p303
        $region58: #{tpu_custom_call.1} parent=11 // pred_check_branch
          %379 = sbr.rel (%p377) target = $region60
        $region59: #{tpu_custom_call.1} parent=11 // pred_region
          _
        $region60: #{tpu_custom_call.1} parent=11 // pred_fallthru
          _
      $region12: #{tpu_custom_call.1} parent=5 // pred_fallthru
        _
      %p380 = scmp.lt.s32.totalorder %s25, 2
      // Predicated region
      $region61: #{tpu_custom_call.1} parent=5 // pred_check
        %p381 = pneg %p380
      $region62: #{tpu_custom_call.1} parent=5 // pred_check_branch
        %383 = sbr.rel (%p381) target = $region64
      $region63: #{tpu_custom_call.1} parent=5 // pred_region
        // Predicated region
        $region65: #{tpu_custom_call.1} parent=63 // pred_check
          %p384 = pneg %p45
        $region66: #{tpu_custom_call.1} parent=63 // pred_check_branch
          %386 = sbr.rel (%p384) target = $region68
        $region67: #{tpu_custom_call.1} parent=63 // pred_region
          %s387 = sand.u32 %s35, 1
          %s388 = scalar_lea.sflag [#allocation4], %s387
          %s389 = sand.u32 %s35, 1
          %s390 = smul.addr %s389, 128
          %s391 = scalar_lea.vmem [#allocation3], %s390
          %393 = vsyncadd %s388, 0
          %s394 = smul.addr %s25, 32
          %s395 = smul.addr %s394, 4
          %s396 = scalar_lea.hbm %s0, %s395
          %s397 = sshll.u32 %s396, 4
          %s398 = int_to_ptr.hbm [resolvable:$true] %s397
          %s399 = sshll.u32 %s391, 4
          %s400 = int_to_ptr.vmem [resolvable:$true] %s399
          %405 = dma.hbm_to_vmem [thread:$0]  %s398, 2048, %s400, %s388, 64, 64, 4
        $region68: #{tpu_custom_call.1} parent=63 // pred_fallthru
          _
      $region64: #{tpu_custom_call.1} parent=5 // pred_fallthru
        _
      %p406 = scmp.le.s32.totalorder 1, %s25
      %p407 = scmp.lt.s32.totalorder %s25, 3
      %p408 = pnand %p406, %p407
      %p409 = pneg %p408
      // Predicated region
      $region69: #{tpu_custom_call.1} parent=5 // pred_check
        _
      $region70: #{tpu_custom_call.1} parent=5 // pred_check_branch
        %411 = sbr.rel (%p408) target = $region72
      $region71: #{tpu_custom_call.1} parent=5 // pred_region
        %s412 = ssub.s32 %s25, 1
        %s413 = sand.u32 %s38, 1
        %s414 = scalar_lea.sflag [#allocation4], %s413
        %s415 = sand.u32 %s38, 1
        %s416 = smul.addr %s415, 128
        %s417 = scalar_lea.vmem [#allocation3], %s416
        // Predicated region
        $region73: #{tpu_custom_call.1} parent=71 // pred_check
          %p418 = pneg %p51
        $region74: #{tpu_custom_call.1} parent=71 // pred_check_branch
          %420 = sbr.rel (%p418) target = $region76
        $region75: #{tpu_custom_call.1} parent=71 // pred_region
          %422 = dma.done %s414, 2048
        $region76: #{tpu_custom_call.1} parent=71 // pred_fallthru
          _
        %s423 = sand.u32 %s38, 1
        %s424 = scalar_lea.sflag [#allocation4], %s423
        %s425 = sand.u32 %s38, 1
        %s426 = smul.addr %s425, 128
        %s427 = scalar_lea.vmem [#allocation3], %s426
        %p428 = pneg %p51
        %p429 = pneg %p48
        %p430 = pneg %p72
        %p431 = pneg %p69
        %p432 = pneg %p93
        %p433 = pneg %p90
        %p434 = pneg %p114
        %p435 = pneg %p111
        %p436 = pneg %p135
        %p437 = pneg %p132
        %p438 = pneg %p156
        %p439 = pneg %p153
        %p440 = pneg %p177
        %p441 = pneg %p174
        %p442 = pneg %p198
        %p443 = pneg %p195
        %p444 = pneg %p219
        %p445 = pneg %p216
        %p446 = pneg %p240
        %p447 = pneg %p237
        %p448 = pneg %p261
        %p449 = pneg %p258
        %p450 = pneg %p282
        %p451 = pneg %p279
        %p452 = pneg %p303
        %p453 = pneg %p300
        %p454 = pneg %p329
        %p455 = pneg %p326
        %s456 = sand.u32 %s316, 1
        %s457 = scalar_lea.sflag [#allocation5], %s456
        %s458 = sand.u32 %s316, 1
        %s459 = smul.addr %s458, 256
        %s460 = scalar_lea.vmem [#allocation6], %s459
        %vm462 = vcmask 257024
        %463 = vst.msk [vmem:[#allocation2] sm:$0xf] %vm462, 0
        %464 = vst.msk [vmem:[#allocation2 + $0x4] sm:$0xf] %vm462, 0
        %vm465 = vcmask 253952
        %466 = vst.msk [vmem:[#allocation2 + $0x8] sm:$0x1] %vm465, 0
        %s467 = scalar_lea.vmem [#allocation2], 204
        %468 = vst.msk [vmem:[%s467] sm:$0xf] %vm462, 0
        %469 = vst.msk [vmem:[%s467 + $0x4] sm:$0xf] %vm462, 0
        %470 = vst.msk [vmem:[%s467 + $0x8] sm:$0x1] %vm465, 0
        %s471 = scalar_lea.vmem [#allocation2], 12
        %vm472 = vcmask 253952
        %vm473 = vsmask.f32 256
        %vm474 = vmand %vm472, %vm473
        %v475 = vld [vmem:[%s471] sm:$0x1]
        %v476 = vsel %vm474, 0, %v475
        %477 = vst [vmem:[%s471] sm:$0x1] %v476
        %v478 = vld [vmem:[%s471 + $0xc] sm:$0x1]
        %v479 = vsel %vm474, 0, %v478
        %480 = vst [vmem:[%s471 + $0xc] sm:$0x1] %v479
        %v481 = vld [vmem:[%s471 + $0x18] sm:$0x1]
        %v482 = vsel %vm474, 0, %v481
        %483 = vst [vmem:[%s471 + $0x18] sm:$0x1] %v482
        %v484 = vld [vmem:[%s471 + $0x24] sm:$0x1]
        %v485 = vsel %vm474, 0, %v484
        %486 = vst [vmem:[%s471 + $0x24] sm:$0x1] %v485
        %v487 = vld [vmem:[%s471 + $0x30] sm:$0x1]
        %v488 = vsel %vm474, 0, %v487
        %489 = vst [vmem:[%s471 + $0x30] sm:$0x1] %v488
        %v490 = vld [vmem:[%s471 + $0x3c] sm:$0x1]
        %v491 = vsel %vm474, 0, %v490
        %492 = vst [vmem:[%s471 + $0x3c] sm:$0x1] %v491
        %v493 = vld [vmem:[%s471 + $0x48] sm:$0x1]
        %v494 = vsel %vm474, 0, %v493
        %495 = vst [vmem:[%s471 + $0x48] sm:$0x1] %v494
        %v496 = vld [vmem:[%s471 + $0x54] sm:$0x1]
        %v497 = vsel %vm474, 0, %v496
        %498 = vst [vmem:[%s471 + $0x54] sm:$0x1] %v497
        %v499 = vld [vmem:[%s471 + $0x60] sm:$0x1]
        %v500 = vsel %vm474, 0, %v499
        %501 = vst [vmem:[%s471 + $0x60] sm:$0x1] %v500
        %v502 = vld [vmem:[%s471 + $0x6c] sm:$0x1]
        %v503 = vsel %vm474, 0, %v502
        %504 = vst [vmem:[%s471 + $0x6c] sm:$0x1] %v503
        %v505 = vld [vmem:[%s471 + $0x78] sm:$0x1]
        %v506 = vsel %vm474, 0, %v505
        %507 = vst [vmem:[%s471 + $0x78] sm:$0x1] %v506
        %v508 = vld [vmem:[%s471 + $0x84] sm:$0x1]
        %v509 = vsel %vm474, 0, %v508
        %510 = vst [vmem:[%s471 + $0x84] sm:$0x1] %v509
        %v511 = vld [vmem:[%s471 + $0x90] sm:$0x1]
        %v512 = vsel %vm474, 0, %v511
        %513 = vst [vmem:[%s471 + $0x90] sm:$0x1] %v512
        %v514 = vld [vmem:[%s471 + $0x9c] sm:$0x1]
        %v515 = vsel %vm474, 0, %v514
        %516 = vst [vmem:[%s471 + $0x9c] sm:$0x1] %v515
        %v517 = vld [vmem:[%s471 + $0xa8] sm:$0x1]
        %v518 = vsel %vm474, 0, %v517
        %519 = vst [vmem:[%s471 + $0xa8] sm:$0x1] %v518
        %v520 = vld [vmem:[%s471 + $0xb4] sm:$0x1]
        %v521 = vsel %vm474, 0, %v520
        %522 = vst [vmem:[%s471 + $0xb4] sm:$0x1] %v521
        %vm523 = vsmask.f32 7938
        %vm524 = vmand %vm472, %vm523
        %v525 = vld [vmem:[%s471 + $0x8] sm:$0x1]
        %v526 = vsel %vm524, 0, %v525
        %527 = vst [vmem:[%s471 + $0x8] sm:$0x1] %v526
        %v528 = vld [vmem:[%s471 + $0x14] sm:$0x1]
        %v529 = vsel %vm524, 0, %v528
        %530 = vst [vmem:[%s471 + $0x14] sm:$0x1] %v529
        %v531 = vld [vmem:[%s471 + $0x20] sm:$0x1]
        %v532 = vsel %vm524, 0, %v531
        %533 = vst [vmem:[%s471 + $0x20] sm:$0x1] %v532
        %v534 = vld [vmem:[%s471 + $0x2c] sm:$0x1]
        %v535 = vsel %vm524, 0, %v534
        %536 = vst [vmem:[%s471 + $0x2c] sm:$0x1] %v535
        %v537 = vld [vmem:[%s471 + $0x38] sm:$0x1]
        %v538 = vsel %vm524, 0, %v537
        %539 = vst [vmem:[%s471 + $0x38] sm:$0x1] %v538
        %v540 = vld [vmem:[%s471 + $0x44] sm:$0x1]
        %v541 = vsel %vm524, 0, %v540
        %542 = vst [vmem:[%s471 + $0x44] sm:$0x1] %v541
        %v543 = vld [vmem:[%s471 + $0x50] sm:$0x1]
        %v544 = vsel %vm524, 0, %v543
        %545 = vst [vmem:[%s471 + $0x50] sm:$0x1] %v544
        %v546 = vld [vmem:[%s471 + $0x5c] sm:$0x1]
        %v547 = vsel %vm524, 0, %v546
        %548 = vst [vmem:[%s471 + $0x5c] sm:$0x1] %v547
        %v549 = vld [vmem:[%s471 + $0x68] sm:$0x1]
        %v550 = vsel %vm524, 0, %v549
        %551 = vst [vmem:[%s471 + $0x68] sm:$0x1] %v550
        %v552 = vld [vmem:[%s471 + $0x74] sm:$0x1]
        %v553 = vsel %vm524, 0, %v552
        %554 = vst [vmem:[%s471 + $0x74] sm:$0x1] %v553
        %v555 = vld [vmem:[%s471 + $0x80] sm:$0x1]
        %v556 = vsel %vm524, 0, %v555
        %557 = vst [vmem:[%s471 + $0x80] sm:$0x1] %v556
        %v558 = vld [vmem:[%s471 + $0x8c] sm:$0x1]
        %v559 = vsel %vm524, 0, %v558
        %560 = vst [vmem:[%s471 + $0x8c] sm:$0x1] %v559
        %v561 = vld [vmem:[%s471 + $0x98] sm:$0x1]
        %v562 = vsel %vm524, 0, %v561
        %563 = vst [vmem:[%s471 + $0x98] sm:$0x1] %v562
        %v564 = vld [vmem:[%s471 + $0xa4] sm:$0x1]
        %v565 = vsel %vm524, 0, %v564
        %566 = vst [vmem:[%s471 + $0xa4] sm:$0x1] %v565
        %v567 = vld [vmem:[%s471 + $0xb0] sm:$0x1]
        %v568 = vsel %vm524, 0, %v567
        %569 = vst [vmem:[%s471 + $0xb0] sm:$0x1] %v568
        %v570 = vld [vmem:[%s471 + $0xbc] sm:$0x1]
        %v571 = vsel %vm524, 0, %v570
        %572 = vst [vmem:[%s471 + $0xbc] sm:$0x1] %v571
        %v573 = vld [vmem:[%s417] sm:$0xf]
        %v574 = vld [vmem:[%s417 + $0x4] sm:$0xf]
        %v575 = vld [vmem:[%s417 + $0x8] sm:$0xf]
        %v576 = vld [vmem:[%s417 + $0xc] sm:$0xf]
        %v577 = vld [vmem:[%s417 + $0x10] sm:$0xf]
        %v578 = vld [vmem:[%s417 + $0x14] sm:$0xf]
        %v579 = vld [vmem:[%s417 + $0x18] sm:$0xf]
        %v580 = vld [vmem:[%s417 + $0x1c] sm:$0xf]
        %v581 = vld [vmem:[%s417 + $0x20] sm:$0xf]
        %v582 = vld [vmem:[%s417 + $0x24] sm:$0xf]
        %v583 = vld [vmem:[%s417 + $0x28] sm:$0xf]
        %v584 = vld [vmem:[%s417 + $0x2c] sm:$0xf]
        %v585 = vld [vmem:[%s417 + $0x30] sm:$0xf]
        %v586 = vld [vmem:[%s417 + $0x34] sm:$0xf]
        %v587 = vld [vmem:[%s417 + $0x38] sm:$0xf]
        %v588 = vld [vmem:[%s417 + $0x3c] sm:$0xf]
        %v589 = vld [vmem:[%s417 + $0x40] sm:$0xf]
        %v590 = vld [vmem:[%s417 + $0x44] sm:$0xf]
        %v591 = vld [vmem:[%s417 + $0x48] sm:$0xf]
        %v592 = vld [vmem:[%s417 + $0x4c] sm:$0xf]
        %v593 = vld [vmem:[%s417 + $0x50] sm:$0xf]
        %v594 = vld [vmem:[%s417 + $0x54] sm:$0xf]
        %v595 = vld [vmem:[%s417 + $0x58] sm:$0xf]
        %v596 = vld [vmem:[%s417 + $0x5c] sm:$0xf]
        %v597 = vld [vmem:[%s417 + $0x60] sm:$0xf]
        %v598 = vld [vmem:[%s417 + $0x64] sm:$0xf]
        %v599 = vld [vmem:[%s417 + $0x68] sm:$0xf]
        %v600 = vld [vmem:[%s417 + $0x6c] sm:$0xf]
        %v601 = vld [vmem:[%s417 + $0x70] sm:$0xf]
        %v602 = vld [vmem:[%s417 + $0x74] sm:$0xf]
        %v603 = vld [vmem:[%s417 + $0x78] sm:$0xf]
        %v604 = vld [vmem:[%s417 + $0x7c] sm:$0xf]
        %v605 = vld [vmem:[%s1] sm:$0xf]
        %v606 = vld [vmem:[%s1 + $0x4] sm:$0xf]
        %v607 = vld [vmem:[%s1 + $0x8] sm:$0xf]
        %v608 = vld [vmem:[%s1 + $0xc] sm:$0xf]
        %v609 = vld [vmem:[%s1 + $0x10] sm:$0xf]
        %v610 = vld [vmem:[%s1 + $0x14] sm:$0xf]
        %v611 = vld [vmem:[%s1 + $0x18] sm:$0xf]
        %v612 = vld [vmem:[%s1 + $0x1c] sm:$0xf]
        %v645 = vunpack.c.l.b16 %v573
        %v646 = vunpack.c.l.b16 %v574
        %v647 = vunpack.c.l.b16 %v575
        %v648 = vunpack.c.l.b16 %v576
        %v649 = vunpack.c.l.b16 %v577
        %v650 = vunpack.c.l.b16 %v578
        %v651 = vunpack.c.l.b16 %v579
        %v652 = vunpack.c.l.b16 %v580
        %v653 = vunpack.c.l.b16 %v581
        %v654 = vunpack.c.l.b16 %v582
        %v655 = vunpack.c.l.b16 %v583
        %v656 = vunpack.c.l.b16 %v584
        %v657 = vunpack.c.l.b16 %v585
        %v658 = vunpack.c.l.b16 %v586
        %v659 = vunpack.c.l.b16 %v587
        %v660 = vunpack.c.l.b16 %v588
        %v661 = vunpack.c.l.b16 %v589
        %v662 = vunpack.c.l.b16 %v590
        %v663 = vunpack.c.l.b16 %v591
        %v664 = vunpack.c.l.b16 %v592
        %v665 = vunpack.c.l.b16 %v593
        %v666 = vunpack.c.l.b16 %v594
        %v667 = vunpack.c.l.b16 %v595
        %v668 = vunpack.c.l.b16 %v596
        %v669 = vunpack.c.l.b16 %v597
        %v670 = vunpack.c.l.b16 %v598
        %v671 = vunpack.c.l.b16 %v599
        %v672 = vunpack.c.l.b16 %v600
        %v673 = vunpack.c.l.b16 %v601
        %v674 = vunpack.c.l.b16 %v602
        %v675 = vunpack.c.l.b16 %v603
        %v676 = vunpack.c.l.b16 %v604
        %v677 = vpack.c.b16 %v646, %v645
        %v678 = vpack.c.b16 %v648, %v647
        %v679 = vpack.c.b16 %v650, %v649
        %v680 = vpack.c.b16 %v652, %v651
        %v681 = vpack.c.b16 %v654, %v653
        %v682 = vpack.c.b16 %v656, %v655
        %v683 = vpack.c.b16 %v658, %v657
        %v684 = vpack.c.b16 %v660, %v659
        %v685 = vpack.c.b16 %v662, %v661
        %v686 = vpack.c.b16 %v664, %v663
        %v687 = vpack.c.b16 %v666, %v665
        %v688 = vpack.c.b16 %v668, %v667
        %v689 = vpack.c.b16 %v670, %v669
        %v690 = vpack.c.b16 %v672, %v671
        %v691 = vpack.c.b16 %v674, %v673
        %v692 = vpack.c.b16 %v676, %v675
        %v701 = vunpack.c.l.b16 %v605
        %v702 = vunpack.c.l.b16 %v606
        %v703 = vunpack.c.l.b16 %v607
        %v704 = vunpack.c.l.b16 %v608
        %v705 = vunpack.c.l.b16 %v609
        %v706 = vunpack.c.l.b16 %v610
        %v707 = vunpack.c.l.b16 %v611
        %v708 = vunpack.c.l.b16 %v612
        %v709 = vpack.c.b16 %v702, %v701
        %v710 = vpack.c.b16 %v704, %v703
        %v711 = vpack.c.b16 %v706, %v705
        %v712 = vpack.c.b16 %v708, %v707
        %vm717 = vcmask 523264
        %v719 = vsel %vm717, %v677, 0
        %v722 = vsel %vm717, %v678, 0
        %v725 = vsel %vm717, %v679, 0
        %v728 = vsel %vm717, %v680, 0
        %v731 = vsel %vm717, %v681, 0
        %v734 = vsel %vm717, %v682, 0
        %v737 = vsel %vm717, %v683, 0
        %v740 = vsel %vm717, %v684, 0
        %v743 = vsel %vm717, %v685, 0
        %v746 = vsel %vm717, %v686, 0
        %v749 = vsel %vm717, %v687, 0
        %v752 = vsel %vm717, %v688, 0
        %v755 = vsel %vm717, %v689, 0
        %v758 = vsel %vm717, %v690, 0
        %v761 = vsel %vm717, %v691, 0
        %v764 = vsel %vm717, %v692, 0
        %766 = vmatpush.bf16.msra.mxu0 0
        %767 = vmatpush.bf16.msra.mxu0 0
        %768 = vmatpush.bf16.msra.mxu0 0
        %769 = vmatpush.bf16.msra.mxu0 0
        %770 = vmatpush.bf16.msra.mxu0 %v712
        %771 = vmatpush.bf16.msra.mxu0 %v711
        %772 = vmatpush.bf16.msra.mxu0 %v710
        %773 = vmatpush.bf16.msra.mxu0 %v709
        %774 = vmatmul.bf16.gmra.mxu0 %v719
        %v775 = vpop.f32.mrf.mxu0
        %v776 = vadd.f32 0.0, %v775
        %v777 = vpop.f32.mrf.mxu0
        %v778 = vadd.f32 0.0, %v777
        %779 = vmatmul.bf16.gmra.mxu0 %v722
        %v780 = vpop.f32.mrf.mxu0
        %v781 = vadd.f32 0.0, %v780
        %v782 = vpop.f32.mrf.mxu0
        %v783 = vadd.f32 0.0, %v782
        %784 = vmatmul.bf16.gmra.mxu0 %v725
        %v785 = vpop.f32.mrf.mxu0
        %v786 = vadd.f32 0.0, %v785
        %v787 = vpop.f32.mrf.mxu0
        %v788 = vadd.f32 0.0, %v787
        %789 = vmatmul.bf16.gmra.mxu0 %v728
        %v790 = vpop.f32.mrf.mxu0
        %v791 = vadd.f32 0.0, %v790
        %v792 = vpop.f32.mrf.mxu0
        %v793 = vadd.f32 0.0, %v792
        %794 = vmatmul.bf16.gmra.mxu0 %v731
        %v795 = vpop.f32.mrf.mxu0
        %v796 = vadd.f32 0.0, %v795
        %v797 = vpop.f32.mrf.mxu0
        %v798 = vadd.f32 0.0, %v797
        %799 = vmatmul.bf16.gmra.mxu0 %v734
        %v800 = vpop.f32.mrf.mxu0
        %v801 = vadd.f32 0.0, %v800
        %v802 = vpop.f32.mrf.mxu0
        %v803 = vadd.f32 0.0, %v802
        %804 = vmatmul.bf16.gmra.mxu0 %v737
        %v805 = vpop.f32.mrf.mxu0
        %v806 = vadd.f32 0.0, %v805
        %v807 = vpop.f32.mrf.mxu0
        %v808 = vadd.f32 0.0, %v807
        %809 = vmatmul.bf16.gmra.mxu0 %v740
        %v810 = vpop.f32.mrf.mxu0
        %v811 = vadd.f32 0.0, %v810
        %v812 = vpop.f32.mrf.mxu0
        %v813 = vadd.f32 0.0, %v812
        %814 = vmatmul.bf16.gmra.mxu0 %v743
        %v815 = vpop.f32.mrf.mxu0
        %v816 = vadd.f32 0.0, %v815
        %v817 = vpop.f32.mrf.mxu0
        %v818 = vadd.f32 0.0, %v817
        %819 = vmatmul.bf16.gmra.mxu0 %v746
        %v820 = vpop.f32.mrf.mxu0
        %v821 = vadd.f32 0.0, %v820
        %v822 = vpop.f32.mrf.mxu0
        %v823 = vadd.f32 0.0, %v822
        %824 = vmatmul.bf16.gmra.mxu0 %v749
        %v825 = vpop.f32.mrf.mxu0
        %v826 = vadd.f32 0.0, %v825
        %v827 = vpop.f32.mrf.mxu0
        %v828 = vadd.f32 0.0, %v827
        %829 = vmatmul.bf16.gmra.mxu0 %v752
        %v830 = vpop.f32.mrf.mxu0
        %v831 = vadd.f32 0.0, %v830
        %v832 = vpop.f32.mrf.mxu0
        %v833 = vadd.f32 0.0, %v832
        %834 = vmatmul.bf16.gmra.mxu0 %v755
        %v835 = vpop.f32.mrf.mxu0
        %v836 = vadd.f32 0.0, %v835
        %v837 = vpop.f32.mrf.mxu0
        %v838 = vadd.f32 0.0, %v837
        %839 = vmatmul.bf16.gmra.mxu0 %v758
        %v840 = vpop.f32.mrf.mxu0
        %v841 = vadd.f32 0.0, %v840
        %v842 = vpop.f32.mrf.mxu0
        %v843 = vadd.f32 0.0, %v842
        %844 = vmatmul.bf16.gmra.mxu0 %v761
        %v845 = vpop.f32.mrf.mxu0
        %v846 = vadd.f32 0.0, %v845
        %v847 = vpop.f32.mrf.mxu0
        %v848 = vadd.f32 0.0, %v847
        %849 = vmatmul.bf16.gmra.mxu0 %v764
        %v850 = vpop.f32.mrf.mxu0
        %v851 = vadd.f32 0.0, %v850
        %v852 = vpop.f32.mrf.mxu0
        %v853 = vadd.f32 0.0, %v852
        %854 = vdwg.mxu0
        %v855 = vld [vmem:[%s2] sm:$0x1]
        %v857 = vperm.slane %v855, 0
        %v859 = vmul.f32 %v776, %v857
        %v860 = vmul.f32 %v778, %v857
        %v861 = vmul.f32 %v781, %v857
        %v862 = vmul.f32 %v783, %v857
        %v863 = vmul.f32 %v786, %v857
        %v864 = vmul.f32 %v788, %v857
        %v865 = vmul.f32 %v791, %v857
        %v866 = vmul.f32 %v793, %v857
        %v867 = vmul.f32 %v796, %v857
        %v868 = vmul.f32 %v798, %v857
        %v869 = vmul.f32 %v801, %v857
        %v870 = vmul.f32 %v803, %v857
        %v871 = vmul.f32 %v806, %v857
        %v872 = vmul.f32 %v808, %v857
        %v873 = vmul.f32 %v811, %v857
        %v874 = vmul.f32 %v813, %v857
        %v875 = vmul.f32 %v816, %v857
        %v876 = vmul.f32 %v818, %v857
        %v877 = vmul.f32 %v821, %v857
        %v878 = vmul.f32 %v823, %v857
        %v879 = vmul.f32 %v826, %v857
        %v880 = vmul.f32 %v828, %v857
        %v881 = vmul.f32 %v831, %v857
        %v882 = vmul.f32 %v833, %v857
        %v883 = vmul.f32 %v836, %v857
        %v884 = vmul.f32 %v838, %v857
        %v885 = vmul.f32 %v841, %v857
        %v886 = vmul.f32 %v843, %v857
        %v887 = vmul.f32 %v846, %v857
        %v888 = vmul.f32 %v848, %v857
        %v889 = vmul.f32 %v851, %v857
        %v890 = vmul.f32 %v853, %v857
        %v891 = vld [vmem:[%s3] sm:$0x1]
        %v893 = vperm.slane %v891, 0
        %v895 = vadd.f32 %v859, %v893
        %v896 = vadd.f32 %v860, %v893
        %v897 = vadd.f32 %v861, %v893
        %v898 = vadd.f32 %v862, %v893
        %v899 = vadd.f32 %v863, %v893
        %v900 = vadd.f32 %v864, %v893
        %v901 = vadd.f32 %v865, %v893
        %v902 = vadd.f32 %v866, %v893
        %v903 = vadd.f32 %v867, %v893
        %v904 = vadd.f32 %v868, %v893
        %v905 = vadd.f32 %v869, %v893
        %v906 = vadd.f32 %v870, %v893
        %v907 = vadd.f32 %v871, %v893
        %v908 = vadd.f32 %v872, %v893
        %v909 = vadd.f32 %v873, %v893
        %v910 = vadd.f32 %v874, %v893
        %v911 = vadd.f32 %v875, %v893
        %v912 = vadd.f32 %v876, %v893
        %v913 = vadd.f32 %v877, %v893
        %v914 = vadd.f32 %v878, %v893
        %v915 = vadd.f32 %v879, %v893
        %v916 = vadd.f32 %v880, %v893
        %v917 = vadd.f32 %v881, %v893
        %v918 = vadd.f32 %v882, %v893
        %v919 = vadd.f32 %v883, %v893
        %v920 = vadd.f32 %v884, %v893
        %v921 = vadd.f32 %v885, %v893
        %v922 = vadd.f32 %v886, %v893
        %v923 = vadd.f32 %v887, %v893
        %v924 = vadd.f32 %v888, %v893
        %v925 = vadd.f32 %v889, %v893
        %v926 = vadd.f32 %v890, %v893
        %v927 = vmax.f32 %v895, 0.0
        %v928 = vmax.f32 %v896, 0.0
        %v929 = vmax.f32 %v897, 0.0
        %v930 = vmax.f32 %v898, 0.0
        %v931 = vmax.f32 %v899, 0.0
        %v932 = vmax.f32 %v900, 0.0
        %v933 = vmax.f32 %v901, 0.0
        %v934 = vmax.f32 %v902, 0.0
        %v935 = vmax.f32 %v903, 0.0
        %v936 = vmax.f32 %v904, 0.0
        %v937 = vmax.f32 %v905, 0.0
        %v938 = vmax.f32 %v906, 0.0
        %v939 = vmax.f32 %v907, 0.0
        %v940 = vmax.f32 %v908, 0.0
        %v941 = vmax.f32 %v909, 0.0
        %v942 = vmax.f32 %v910, 0.0
        %v943 = vmax.f32 %v911, 0.0
        %v944 = vmax.f32 %v912, 0.0
        %v945 = vmax.f32 %v913, 0.0
        %v946 = vmax.f32 %v914, 0.0
        %v947 = vmax.f32 %v915, 0.0
        %v948 = vmax.f32 %v916, 0.0
        %v949 = vmax.f32 %v917, 0.0
        %v950 = vmax.f32 %v918, 0.0
        %v951 = vmax.f32 %v919, 0.0
        %v952 = vmax.f32 %v920, 0.0
        %v953 = vmax.f32 %v921, 0.0
        %v954 = vmax.f32 %v922, 0.0
        %v955 = vmax.f32 %v923, 0.0
        %v956 = vmax.f32 %v924, 0.0
        %v957 = vmax.f32 %v925, 0.0
        %v958 = vmax.f32 %v926, 0.0
        %v959 = vpack.c.bf16 %v927, %v927
        %v960 = vpack.c.bf16 %v928, %v928
        %v961 = vpack.c.bf16 %v929, %v929
        %v962 = vpack.c.bf16 %v930, %v930
        %v963 = vpack.c.bf16 %v931, %v931
        %v964 = vpack.c.bf16 %v932, %v932
        %v965 = vpack.c.bf16 %v933, %v933
        %v966 = vpack.c.bf16 %v934, %v934
        %v967 = vpack.c.bf16 %v935, %v935
        %v968 = vpack.c.bf16 %v936, %v936
        %v969 = vpack.c.bf16 %v937, %v937
        %v970 = vpack.c.bf16 %v938, %v938
        %v971 = vpack.c.bf16 %v939, %v939
        %v972 = vpack.c.bf16 %v940, %v940
        %v973 = vpack.c.bf16 %v941, %v941
        %v974 = vpack.c.bf16 %v942, %v942
        %v975 = vpack.c.bf16 %v943, %v943
        %v976 = vpack.c.bf16 %v944, %v944
        %v977 = vpack.c.bf16 %v945, %v945
        %v978 = vpack.c.bf16 %v946, %v946
        %v979 = vpack.c.bf16 %v947, %v947
        %v980 = vpack.c.bf16 %v948, %v948
        %v981 = vpack.c.bf16 %v949, %v949
        %v982 = vpack.c.bf16 %v950, %v950
        %v983 = vpack.c.bf16 %v951, %v951
        %v984 = vpack.c.bf16 %v952, %v952
        %v985 = vpack.c.bf16 %v953, %v953
        %v986 = vpack.c.bf16 %v954, %v954
        %v987 = vpack.c.bf16 %v955, %v955
        %v988 = vpack.c.bf16 %v956, %v956
        %v989 = vpack.c.bf16 %v957, %v957
        %v990 = vpack.c.bf16 %v958, %v958
        %vm991 = vsmask.f32 4368
        %vm992 = vmor %vm473, %vm991
        %v994 = vshrl.u32 %v959, 16
        %v996 = vrot.slane %v994, 7
        %v997 = vshll.u32 %v959, 16
        %v999 = vor.u32 %v996, %v997
        %v1000 = vrot.slane %v996, 4
        %v1002 = vshrl.u32 %v960, 16
        %v1004 = vrot.slane %v1002, 7
        %v1005 = vshll.u32 %v960, 16
        %v1007 = vor.u32 %v1004, %v1005
        %v1008 = vsel %vm992, %v1000, %v1007
        %v1009 = vrot.slane %v1004, 4
        %v1011 = vshrl.u32 %v961, 16
        %v1013 = vrot.slane %v1011, 7
        %v1014 = vshll.u32 %v961, 16
        %v1016 = vor.u32 %v1013, %v1014
        %v1017 = vrot.slane %v1013, 4
        %v1019 = vshrl.u32 %v962, 16
        %v1021 = vrot.slane %v1019, 7
        %v1022 = vshll.u32 %v962, 16
        %v1024 = vor.u32 %v1021, %v1022
        %v1025 = vsel %vm992, %v1017, %v1024
        %v1026 = vrot.slane %v1021, 4
        %v1028 = vshrl.u32 %v963, 16
        %v1030 = vrot.slane %v1028, 7
        %v1031 = vshll.u32 %v963, 16
        %v1033 = vor.u32 %v1030, %v1031
        %v1034 = vrot.slane %v1030, 4
        %v1036 = vshrl.u32 %v964, 16
        %v1038 = vrot.slane %v1036, 7
        %v1039 = vshll.u32 %v964, 16
        %v1041 = vor.u32 %v1038, %v1039
        %v1042 = vsel %vm992, %v1034, %v1041
        %v1043 = vrot.slane %v1038, 4
        %v1045 = vshrl.u32 %v965, 16
        %v1047 = vrot.slane %v1045, 7
        %v1048 = vshll.u32 %v965, 16
        %v1050 = vor.u32 %v1047, %v1048
        %v1051 = vrot.slane %v1047, 4
        %v1053 = vshrl.u32 %v966, 16
        %v1055 = vrot.slane %v1053, 7
        %v1056 = vshll.u32 %v966, 16
        %v1058 = vor.u32 %v1055, %v1056
        %v1059 = vsel %vm992, %v1051, %v1058
        %v1060 = vrot.slane %v1055, 4
        %v1062 = vshrl.u32 %v967, 16
        %v1064 = vrot.slane %v1062, 7
        %v1065 = vshll.u32 %v967, 16
        %v1067 = vor.u32 %v1064, %v1065
        %v1068 = vrot.slane %v1064, 4
        %v1070 = vshrl.u32 %v968, 16
        %v1072 = vrot.slane %v1070, 7
        %v1073 = vshll.u32 %v968, 16
        %v1075 = vor.u32 %v1072, %v1073
        %v1076 = vsel %vm992, %v1068, %v1075
        %v1077 = vrot.slane %v1072, 4
        %v1079 = vshrl.u32 %v969, 16
        %v1081 = vrot.slane %v1079, 7
        %v1082 = vshll.u32 %v969, 16
        %v1084 = vor.u32 %v1081, %v1082
        %v1085 = vrot.slane %v1081, 4
        %v1087 = vshrl.u32 %v970, 16
        %v1089 = vrot.slane %v1087, 7
        %v1090 = vshll.u32 %v970, 16
        %v1092 = vor.u32 %v1089, %v1090
        %v1093 = vsel %vm992, %v1085, %v1092
        %v1094 = vrot.slane %v1089, 4
        %v1096 = vshrl.u32 %v971, 16
        %v1098 = vrot.slane %v1096, 7
        %v1099 = vshll.u32 %v971, 16
        %v1101 = vor.u32 %v1098, %v1099
        %v1102 = vrot.slane %v1098, 4
        %v1104 = vshrl.u32 %v972, 16
        %v1106 = vrot.slane %v1104, 7
        %v1107 = vshll.u32 %v972, 16
        %v1109 = vor.u32 %v1106, %v1107
        %v1110 = vsel %vm992, %v1102, %v1109
        %v1111 = vrot.slane %v1106, 4
        %v1113 = vshrl.u32 %v973, 16
        %v1115 = vrot.slane %v1113, 7
        %v1116 = vshll.u32 %v973, 16
        %v1118 = vor.u32 %v1115, %v1116
        %v1119 = vrot.slane %v1115, 4
        %v1121 = vshrl.u32 %v974, 16
        %v1123 = vrot.slane %v1121, 7
        %v1124 = vshll.u32 %v974, 16
        %v1126 = vor.u32 %v1123, %v1124
        %v1127 = vsel %vm992, %v1119, %v1126
        %v1128 = vrot.slane %v1123, 4
        %v1130 = vshrl.u32 %v975, 16
        %v1132 = vrot.slane %v1130, 7
        %v1133 = vshll.u32 %v975, 16
        %v1135 = vor.u32 %v1132, %v1133
        %v1136 = vrot.slane %v1132, 4
        %v1138 = vshrl.u32 %v976, 16
        %v1140 = vrot.slane %v1138, 7
        %v1141 = vshll.u32 %v976, 16
        %v1143 = vor.u32 %v1140, %v1141
        %v1144 = vsel %vm992, %v1136, %v1143
        %v1145 = vrot.slane %v1140, 4
        %v1147 = vshrl.u32 %v977, 16
        %v1149 = vrot.slane %v1147, 7
        %v1150 = vshll.u32 %v977, 16
        %v1152 = vor.u32 %v1149, %v1150
        %v1153 = vrot.slane %v1149, 4
        %v1155 = vshrl.u32 %v978, 16
        %v1157 = vrot.slane %v1155, 7
        %v1158 = vshll.u32 %v978, 16
        %v1160 = vor.u32 %v1157, %v1158
        %v1161 = vsel %vm992, %v1153, %v1160
        %v1162 = vrot.slane %v1157, 4
        %v1164 = vshrl.u32 %v979, 16
        %v1166 = vrot.slane %v1164, 7
        %v1167 = vshll.u32 %v979, 16
        %v1169 = vor.u32 %v1166, %v1167
        %v1170 = vrot.slane %v1166, 4
        %v1172 = vshrl.u32 %v980, 16
        %v1174 = vrot.slane %v1172, 7
        %v1175 = vshll.u32 %v980, 16
        %v1177 = vor.u32 %v1174, %v1175
        %v1178 = vsel %vm992, %v1170, %v1177
        %v1179 = vrot.slane %v1174, 4
        %v1181 = vshrl.u32 %v981, 16
        %v1183 = vrot.slane %v1181, 7
        %v1184 = vshll.u32 %v981, 16
        %v1186 = vor.u32 %v1183, %v1184
        %v1187 = vrot.slane %v1183, 4
        %v1189 = vshrl.u32 %v982, 16
        %v1191 = vrot.slane %v1189, 7
        %v1192 = vshll.u32 %v982, 16
        %v1194 = vor.u32 %v1191, %v1192
        %v1195 = vsel %vm992, %v1187, %v1194
        %v1196 = vrot.slane %v1191, 4
        %v1198 = vshrl.u32 %v983, 16
        %v1200 = vrot.slane %v1198, 7
        %v1201 = vshll.u32 %v983, 16
        %v1203 = vor.u32 %v1200, %v1201
        %v1204 = vrot.slane %v1200, 4
        %v1206 = vshrl.u32 %v984, 16
        %v1208 = vrot.slane %v1206, 7
        %v1209 = vshll.u32 %v984, 16
        %v1211 = vor.u32 %v1208, %v1209
        %v1212 = vsel %vm992, %v1204, %v1211
        %v1213 = vrot.slane %v1208, 4
        %v1215 = vshrl.u32 %v985, 16
        %v1217 = vrot.slane %v1215, 7
        %v1218 = vshll.u32 %v985, 16
        %v1220 = vor.u32 %v1217, %v1218
        %v1221 = vrot.slane %v1217, 4
        %v1223 = vshrl.u32 %v986, 16
        %v1225 = vrot.slane %v1223, 7
        %v1226 = vshll.u32 %v986, 16
        %v1228 = vor.u32 %v1225, %v1226
        %v1229 = vsel %vm992, %v1221, %v1228
        %v1230 = vrot.slane %v1225, 4
        %v1232 = vshrl.u32 %v987, 16
        %v1234 = vrot.slane %v1232, 7
        %v1235 = vshll.u32 %v987, 16
        %v1237 = vor.u32 %v1234, %v1235
        %v1238 = vrot.slane %v1234, 4
        %v1240 = vshrl.u32 %v988, 16
        %v1242 = vrot.slane %v1240, 7
        %v1243 = vshll.u32 %v988, 16
        %v1245 = vor.u32 %v1242, %v1243
        %v1246 = vsel %vm992, %v1238, %v1245
        %v1247 = vrot.slane %v1242, 4
        %v1249 = vshrl.u32 %v989, 16
        %v1251 = vrot.slane %v1249, 7
        %v1252 = vshll.u32 %v989, 16
        %v1254 = vor.u32 %v1251, %v1252
        %v1255 = vrot.slane %v1251, 4
        %v1257 = vshrl.u32 %v990, 16
        %v1259 = vrot.slane %v1257, 7
        %v1260 = vshll.u32 %v990, 16
        %v1262 = vor.u32 %v1259, %v1260
        %v1263 = vsel %vm992, %v1255, %v1262
        %v1264 = vrot.slane %v1259, 4
        %vm1313 = vcmask 257024
        %vm1314 = vmand %vm1313, %vm523
        %v1315 = vld [vmem:[%s471] sm:$0xf]
        %v1316 = vsel %vm1314, %v999, %v1315
        %1317 = vst [vmem:[%s471] sm:$0xf] %v1316
        %1318 = vst.msk [vmem:[%s471 + $0x4] sm:$0xf] %vm462, %v1008
        %v1319 = vld [vmem:[%s471 + $0x8] sm:$0x1]
        %v1320 = vsel %vm474, %v1009, %v1319
        %1321 = vst [vmem:[%s471 + $0x8] sm:$0x1] %v1320
        %v1322 = vld [vmem:[%s471 + $0xc] sm:$0xf]
        %v1323 = vsel %vm1314, %v1016, %v1322
        %1324 = vst [vmem:[%s471 + $0xc] sm:$0xf] %v1323
        %1325 = vst.msk [vmem:[%s471 + $0x10] sm:$0xf] %vm462, %v1025
        %v1326 = vld [vmem:[%s471 + $0x14] sm:$0x1]
        %v1327 = vsel %vm474, %v1026, %v1326
        %1328 = vst [vmem:[%s471 + $0x14] sm:$0x1] %v1327
        %v1329 = vld [vmem:[%s471 + $0x18] sm:$0xf]
        %v1330 = vsel %vm1314, %v1033, %v1329
        %1331 = vst [vmem:[%s471 + $0x18] sm:$0xf] %v1330
        %1332 = vst.msk [vmem:[%s471 + $0x1c] sm:$0xf] %vm462, %v1042
        %v1333 = vld [vmem:[%s471 + $0x20] sm:$0x1]
        %v1334 = vsel %vm474, %v1043, %v1333
        %1335 = vst [vmem:[%s471 + $0x20] sm:$0x1] %v1334
        %v1336 = vld [vmem:[%s471 + $0x24] sm:$0xf]
        %v1337 = vsel %vm1314, %v1050, %v1336
        %1338 = vst [vmem:[%s471 + $0x24] sm:$0xf] %v1337
        %1339 = vst.msk [vmem:[%s471 + $0x28] sm:$0xf] %vm462, %v1059
        %v1340 = vld [vmem:[%s471 + $0x2c] sm:$0x1]
        %v1341 = vsel %vm474, %v1060, %v1340
        %1342 = vst [vmem:[%s471 + $0x2c] sm:$0x1] %v1341
        %v1343 = vld [vmem:[%s471 + $0x30] sm:$0xf]
        %v1344 = vsel %vm1314, %v1067, %v1343
        %1345 = vst [vmem:[%s471 + $0x30] sm:$0xf] %v1344
        %1346 = vst.msk [vmem:[%s471 + $0x34] sm:$0xf] %vm462, %v1076
        %v1347 = vld [vmem:[%s471 + $0x38] sm:$0x1]
        %v1348 = vsel %vm474, %v1077, %v1347
        %1349 = vst [vmem:[%s471 + $0x38] sm:$0x1] %v1348
        %v1350 = vld [vmem:[%s471 + $0x3c] sm:$0xf]
        %v1351 = vsel %vm1314, %v1084, %v1350
        %1352 = vst [vmem:[%s471 + $0x3c] sm:$0xf] %v1351
        %1353 = vst.msk [vmem:[%s471 + $0x40] sm:$0xf] %vm462, %v1093
        %v1354 = vld [vmem:[%s471 + $0x44] sm:$0x1]
        %v1355 = vsel %vm474, %v1094, %v1354
        %1356 = vst [vmem:[%s471 + $0x44] sm:$0x1] %v1355
        %v1357 = vld [vmem:[%s471 + $0x48] sm:$0xf]
        %v1358 = vsel %vm1314, %v1101, %v1357
        %1359 = vst [vmem:[%s471 + $0x48] sm:$0xf] %v1358
        %1360 = vst.msk [vmem:[%s471 + $0x4c] sm:$0xf] %vm462, %v1110
        %v1361 = vld [vmem:[%s471 + $0x50] sm:$0x1]
        %v1362 = vsel %vm474, %v1111, %v1361
        %1363 = vst [vmem:[%s471 + $0x50] sm:$0x1] %v1362
        %v1364 = vld [vmem:[%s471 + $0x54] sm:$0xf]
        %v1365 = vsel %vm1314, %v1118, %v1364
        %1366 = vst [vmem:[%s471 + $0x54] sm:$0xf] %v1365
        %1367 = vst.msk [vmem:[%s471 + $0x58] sm:$0xf] %vm462, %v1127
        %v1368 = vld [vmem:[%s471 + $0x5c] sm:$0x1]
        %v1369 = vsel %vm474, %v1128, %v1368
        %1370 = vst [vmem:[%s471 + $0x5c] sm:$0x1] %v1369
        %v1371 = vld [vmem:[%s471 + $0x60] sm:$0xf]
        %v1372 = vsel %vm1314, %v1135, %v1371
        %1373 = vst [vmem:[%s471 + $0x60] sm:$0xf] %v1372
        %1374 = vst.msk [vmem:[%s471 + $0x64] sm:$0xf] %vm462, %v1144
        %v1375 = vld [vmem:[%s471 + $0x68] sm:$0x1]
        %v1376 = vsel %vm474, %v1145, %v1375
        %1377 = vst [vmem:[%s471 + $0x68] sm:$0x1] %v1376
        %v1378 = vld [vmem:[%s471 + $0x6c] sm:$0xf]
        %v1379 = vsel %vm1314, %v1152, %v1378
        %1380 = vst [vmem:[%s471 + $0x6c] sm:$0xf] %v1379
        %1381 = vst.msk [vmem:[%s471 + $0x70] sm:$0xf] %vm462, %v1161
        %v1382 = vld [vmem:[%s471 + $0x74] sm:$0x1]
        %v1383 = vsel %vm474, %v1162, %v1382
        %1384 = vst [vmem:[%s471 + $0x74] sm:$0x1] %v1383
        %v1385 = vld [vmem:[%s471 + $0x78] sm:$0xf]
        %v1386 = vsel %vm1314, %v1169, %v1385
        %1387 = vst [vmem:[%s471 + $0x78] sm:$0xf] %v1386
        %1388 = vst.msk [vmem:[%s471 + $0x7c] sm:$0xf] %vm462, %v1178
        %v1389 = vld [vmem:[%s471 + $0x80] sm:$0x1]
        %v1390 = vsel %vm474, %v1179, %v1389
        %1391 = vst [vmem:[%s471 + $0x80] sm:$0x1] %v1390
        %v1392 = vld [vmem:[%s471 + $0x84] sm:$0xf]
        %v1393 = vsel %vm1314, %v1186, %v1392
        %1394 = vst [vmem:[%s471 + $0x84] sm:$0xf] %v1393
        %1395 = vst.msk [vmem:[%s471 + $0x88] sm:$0xf] %vm462, %v1195
        %v1396 = vld [vmem:[%s471 + $0x8c] sm:$0x1]
        %v1397 = vsel %vm474, %v1196, %v1396
        %1398 = vst [vmem:[%s471 + $0x8c] sm:$0x1] %v1397
        %v1399 = vld [vmem:[%s471 + $0x90] sm:$0xf]
        %v1400 = vsel %vm1314, %v1203, %v1399
        %1401 = vst [vmem:[%s471 + $0x90] sm:$0xf] %v1400
        %1402 = vst.msk [vmem:[%s471 + $0x94] sm:$0xf] %vm462, %v1212
        %v1403 = vld [vmem:[%s471 + $0x98] sm:$0x1]
        %v1404 = vsel %vm474, %v1213, %v1403
        %1405 = vst [vmem:[%s471 + $0x98] sm:$0x1] %v1404
        %v1406 = vld [vmem:[%s471 + $0x9c] sm:$0xf]
        %v1407 = vsel %vm1314, %v1220, %v1406
        %1408 = vst [vmem:[%s471 + $0x9c] sm:$0xf] %v1407
        %1409 = vst.msk [vmem:[%s471 + $0xa0] sm:$0xf] %vm462, %v1229
        %v1410 = vld [vmem:[%s471 + $0xa4] sm:$0x1]
        %v1411 = vsel %vm474, %v1230, %v1410
        %1412 = vst [vmem:[%s471 + $0xa4] sm:$0x1] %v1411
        %v1413 = vld [vmem:[%s471 + $0xa8] sm:$0xf]
        %v1414 = vsel %vm1314, %v1237, %v1413
        %1415 = vst [vmem:[%s471 + $0xa8] sm:$0xf] %v1414
        %1416 = vst.msk [vmem:[%s471 + $0xac] sm:$0xf] %vm462, %v1246
        %v1417 = vld [vmem:[%s471 + $0xb0] sm:$0x1]
        %v1418 = vsel %vm474, %v1247, %v1417
        %1419 = vst [vmem:[%s471 + $0xb0] sm:$0x1] %v1418
        %v1420 = vld [vmem:[%s471 + $0xb4] sm:$0xf]
        %v1421 = vsel %vm1314, %v1254, %v1420
        %1422 = vst [vmem:[%s471 + $0xb4] sm:$0xf] %v1421
        %1423 = vst.msk [vmem:[%s471 + $0xb8] sm:$0xf] %vm462, %v1263
        %v1424 = vld [vmem:[%s471 + $0xbc] sm:$0x1]
        %v1425 = vsel %vm474, %v1264, %v1424
        %1426 = vst [vmem:[%s471 + $0xbc] sm:$0x1] %v1425
        %v1427 = vld [vmem:[#allocation2] sm:$0xf]
        %v1428 = vld [vmem:[#allocation2 + $0x4] sm:$0xf]
        %v1429 = vld [vmem:[#allocation2 + $0xc] sm:$0xf]
        %v1430 = vld [vmem:[#allocation2 + $0x10] sm:$0xf]
        %v1431 = vld [vmem:[#allocation2 + $0x18] sm:$0xf]
        %v1432 = vld [vmem:[#allocation2 + $0x1c] sm:$0xf]
        %v1433 = vld [vmem:[#allocation2 + $0x24] sm:$0xf]
        %v1434 = vld [vmem:[#allocation2 + $0x28] sm:$0xf]
        %v1435 = vld [vmem:[#allocation2 + $0x30] sm:$0xf]
        %v1436 = vld [vmem:[#allocation2 + $0x34] sm:$0xf]
        %v1437 = vld [vmem:[#allocation2 + $0x3c] sm:$0xf]
        %v1438 = vld [vmem:[#allocation2 + $0x40] sm:$0xf]
        %v1439 = vld [vmem:[#allocation2 + $0x48] sm:$0xf]
        %v1440 = vld [vmem:[#allocation2 + $0x4c] sm:$0xf]
        %v1441 = vld [vmem:[#allocation2 + $0x54] sm:$0xf]
        %v1442 = vld [vmem:[#allocation2 + $0x58] sm:$0xf]
        %v1443 = vld [vmem:[#allocation2 + $0x60] sm:$0xf]
        %v1444 = vld [vmem:[#allocation2 + $0x64] sm:$0xf]
        %v1445 = vld [vmem:[#allocation2 + $0x6c] sm:$0xf]
        %v1446 = vld [vmem:[#allocation2 + $0x70] sm:$0xf]
        %v1447 = vld [vmem:[#allocation2 + $0x78] sm:$0xf]
        %v1448 = vld [vmem:[#allocation2 + $0x7c] sm:$0xf]
        %v1449 = vld [vmem:[#allocation2 + $0x84] sm:$0xf]
        %v1450 = vld [vmem:[#allocation2 + $0x88] sm:$0xf]
        %v1451 = vld [vmem:[#allocation2 + $0x90] sm:$0xf]
        %v1452 = vld [vmem:[#allocation2 + $0x94] sm:$0xf]
        %v1453 = vld [vmem:[#allocation2 + $0x9c] sm:$0xf]
        %v1454 = vld [vmem:[#allocation2 + $0xa0] sm:$0xf]
        %v1455 = vld [vmem:[#allocation2 + $0xa8] sm:$0xf]
        %v1456 = vld [vmem:[#allocation2 + $0xac] sm:$0xf]
        %v1457 = vld [vmem:[#allocation2 + $0xb4] sm:$0xf]
        %v1458 = vld [vmem:[#allocation2 + $0xb8] sm:$0xf]
        %v1459 = vld [vmem:[#allocation2 + $0x8] sm:$0x1]
        %v1460 = vld [vmem:[#allocation2 + $0x14] sm:$0x1]
        %v1461 = vld [vmem:[#allocation2 + $0x20] sm:$0x1]
        %v1462 = vld [vmem:[#allocation2 + $0x2c] sm:$0x1]
        %v1463 = vld [vmem:[#allocation2 + $0x38] sm:$0x1]
        %v1464 = vld [vmem:[#allocation2 + $0x44] sm:$0x1]
        %v1465 = vld [vmem:[#allocation2 + $0x50] sm:$0x1]
        %v1466 = vld [vmem:[#allocation2 + $0x5c] sm:$0x1]
        %v1467 = vld [vmem:[#allocation2 + $0x68] sm:$0x1]
        %v1468 = vld [vmem:[#allocation2 + $0x74] sm:$0x1]
        %v1469 = vld [vmem:[#allocation2 + $0x80] sm:$0x1]
        %v1470 = vld [vmem:[#allocation2 + $0x8c] sm:$0x1]
        %v1471 = vld [vmem:[#allocation2 + $0x98] sm:$0x1]
        %v1472 = vld [vmem:[#allocation2 + $0xa4] sm:$0x1]
        %v1473 = vld [vmem:[#allocation2 + $0xb0] sm:$0x1]
        %v1474 = vld [vmem:[#allocation2 + $0xbc] sm:$0x1]
        %v1475 = vld [vmem:[#allocation2] sm:$0xe]
        %v1476 = vld [vmem:[#allocation2 + $0xc] sm:$0xe]
        %v1477 = vld [vmem:[#allocation2 + $0x18] sm:$0xe]
        %v1478 = vld [vmem:[#allocation2 + $0x24] sm:$0xe]
        %v1479 = vld [vmem:[#allocation2 + $0x30] sm:$0xe]
        %v1480 = vld [vmem:[#allocation2 + $0x3c] sm:$0xe]
        %v1481 = vld [vmem:[#allocation2 + $0x48] sm:$0xe]
        %v1482 = vld [vmem:[#allocation2 + $0x54] sm:$0xe]
        %v1483 = vld [vmem:[#allocation2 + $0x60] sm:$0xe]
        %v1484 = vld [vmem:[#allocation2 + $0x6c] sm:$0xe]
        %v1485 = vld [vmem:[#allocation2 + $0x78] sm:$0xe]
        %v1486 = vld [vmem:[#allocation2 + $0x84] sm:$0xe]
        %v1487 = vld [vmem:[#allocation2 + $0x90] sm:$0xe]
        %v1488 = vld [vmem:[#allocation2 + $0x9c] sm:$0xe]
        %v1489 = vld [vmem:[#allocation2 + $0xa8] sm:$0xe]
        %v1490 = vld [vmem:[#allocation2 + $0xb4] sm:$0xe]
        %v1523 = vunpack.c.l.b16 %v1427
        %v1524 = vunpack.c.l.b16 %v1428
        %v1525 = vunpack.c.l.b16 %v1429
        %v1526 = vunpack.c.l.b16 %v1430
        %v1527 = vunpack.c.l.b16 %v1431
        %v1528 = vunpack.c.l.b16 %v1432
        %v1529 = vunpack.c.l.b16 %v1433
        %v1530 = vunpack.c.l.b16 %v1434
        %v1531 = vunpack.c.l.b16 %v1435
        %v1532 = vunpack.c.l.b16 %v1436
        %v1533 = vunpack.c.l.b16 %v1437
        %v1534 = vunpack.c.l.b16 %v1438
        %v1535 = vunpack.c.l.b16 %v1439
        %v1536 = vunpack.c.l.b16 %v1440
        %v1537 = vunpack.c.l.b16 %v1441
        %v1538 = vunpack.c.l.b16 %v1442
        %v1539 = vunpack.c.l.b16 %v1443
        %v1540 = vunpack.c.l.b16 %v1444
        %v1541 = vunpack.c.l.b16 %v1445
        %v1542 = vunpack.c.l.b16 %v1446
        %v1543 = vunpack.c.l.b16 %v1447
        %v1544 = vunpack.c.l.b16 %v1448
        %v1545 = vunpack.c.l.b16 %v1449
        %v1546 = vunpack.c.l.b16 %v1450
        %v1547 = vunpack.c.l.b16 %v1451
        %v1548 = vunpack.c.l.b16 %v1452
        %v1549 = vunpack.c.l.b16 %v1453
        %v1550 = vunpack.c.l.b16 %v1454
        %v1551 = vunpack.c.l.b16 %v1455
        %v1552 = vunpack.c.l.b16 %v1456
        %v1553 = vunpack.c.l.b16 %v1457
        %v1554 = vunpack.c.l.b16 %v1458
        %v1555 = vpack.c.b16 %v1524, %v1523
        %v1556 = vpack.c.b16 %v1526, %v1525
        %v1557 = vpack.c.b16 %v1528, %v1527
        %v1558 = vpack.c.b16 %v1530, %v1529
        %v1559 = vpack.c.b16 %v1532, %v1531
        %v1560 = vpack.c.b16 %v1534, %v1533
        %v1561 = vpack.c.b16 %v1536, %v1535
        %v1562 = vpack.c.b16 %v1538, %v1537
        %v1563 = vpack.c.b16 %v1540, %v1539
        %v1564 = vpack.c.b16 %v1542, %v1541
        %v1565 = vpack.c.b16 %v1544, %v1543
        %v1566 = vpack.c.b16 %v1546, %v1545
        %v1567 = vpack.c.b16 %v1548, %v1547
        %v1568 = vpack.c.b16 %v1550, %v1549
        %v1569 = vpack.c.b16 %v1552, %v1551
        %v1570 = vpack.c.b16 %v1554, %v1553
        %v1587 = vunpack.c.l.b16 %v1459
        %v1588 = vunpack.c.l.b16 %v1460
        %v1589 = vunpack.c.l.b16 %v1461
        %v1590 = vunpack.c.l.b16 %v1462
        %v1591 = vunpack.c.l.b16 %v1463
        %v1592 = vunpack.c.l.b16 %v1464
        %v1593 = vunpack.c.l.b16 %v1465
        %v1594 = vunpack.c.l.b16 %v1466
        %v1595 = vunpack.c.l.b16 %v1467
        %v1596 = vunpack.c.l.b16 %v1468
        %v1597 = vunpack.c.l.b16 %v1469
        %v1598 = vunpack.c.l.b16 %v1470
        %v1599 = vunpack.c.l.b16 %v1471
        %v1600 = vunpack.c.l.b16 %v1472
        %v1601 = vunpack.c.l.b16 %v1473
        %v1602 = vunpack.c.l.b16 %v1474
        %v1603 = vpack.c.b16 %v1587, %v1587
        %v1604 = vpack.c.b16 %v1588, %v1588
        %v1605 = vpack.c.b16 %v1589, %v1589
        %v1606 = vpack.c.b16 %v1590, %v1590
        %v1607 = vpack.c.b16 %v1591, %v1591
        %v1608 = vpack.c.b16 %v1592, %v1592
        %v1609 = vpack.c.b16 %v1593, %v1593
        %v1610 = vpack.c.b16 %v1594, %v1594
        %v1611 = vpack.c.b16 %v1595, %v1595
        %v1612 = vpack.c.b16 %v1596, %v1596
        %v1613 = vpack.c.b16 %v1597, %v1597
        %v1614 = vpack.c.b16 %v1598, %v1598
        %v1615 = vpack.c.b16 %v1599, %v1599
        %v1616 = vpack.c.b16 %v1600, %v1600
        %v1617 = vpack.c.b16 %v1601, %v1601
        %v1618 = vpack.c.b16 %v1602, %v1602
        %vm1619 = vsmask.f32 7424
        %v1621 = vshrl.u32 %v1555, 16
        %v1623 = vshll.u32 %v1555, 16
        %v1625 = vrot.slane %v1623, 1
        %v1626 = vor.u32 %v1621, %v1625
        %v1628 = vshll.u32 %v1603, 16
        %v1630 = vrot.slane %v1628, 1
        %v1631 = vsel %vm1619, %v1626, %v1630
        %v1633 = vshrl.u32 %v1556, 16
        %v1635 = vshll.u32 %v1556, 16
        %v1637 = vrot.slane %v1635, 1
        %v1638 = vor.u32 %v1633, %v1637
        %v1640 = vshll.u32 %v1604, 16
        %v1642 = vrot.slane %v1640, 1
        %v1643 = vsel %vm1619, %v1638, %v1642
        %v1645 = vshrl.u32 %v1557, 16
        %v1647 = vshll.u32 %v1557, 16
        %v1649 = vrot.slane %v1647, 1
        %v1650 = vor.u32 %v1645, %v1649
        %v1652 = vshll.u32 %v1605, 16
        %v1654 = vrot.slane %v1652, 1
        %v1655 = vsel %vm1619, %v1650, %v1654
        %v1657 = vshrl.u32 %v1558, 16
        %v1659 = vshll.u32 %v1558, 16
        %v1661 = vrot.slane %v1659, 1
        %v1662 = vor.u32 %v1657, %v1661
        %v1664 = vshll.u32 %v1606, 16
        %v1666 = vrot.slane %v1664, 1
        %v1667 = vsel %vm1619, %v1662, %v1666
        %v1669 = vshrl.u32 %v1559, 16
        %v1671 = vshll.u32 %v1559, 16
        %v1673 = vrot.slane %v1671, 1
        %v1674 = vor.u32 %v1669, %v1673
        %v1676 = vshll.u32 %v1607, 16
        %v1678 = vrot.slane %v1676, 1
        %v1679 = vsel %vm1619, %v1674, %v1678
        %v1681 = vshrl.u32 %v1560, 16
        %v1683 = vshll.u32 %v1560, 16
        %v1685 = vrot.slane %v1683, 1
        %v1686 = vor.u32 %v1681, %v1685
        %v1688 = vshll.u32 %v1608, 16
        %v1690 = vrot.slane %v1688, 1
        %v1691 = vsel %vm1619, %v1686, %v1690
        %v1693 = vshrl.u32 %v1561, 16
        %v1695 = vshll.u32 %v1561, 16
        %v1697 = vrot.slane %v1695, 1
        %v1698 = vor.u32 %v1693, %v1697
        %v1700 = vshll.u32 %v1609, 16
        %v1702 = vrot.slane %v1700, 1
        %v1703 = vsel %vm1619, %v1698, %v1702
        %v1705 = vshrl.u32 %v1562, 16
        %v1707 = vshll.u32 %v1562, 16
        %v1709 = vrot.slane %v1707, 1
        %v1710 = vor.u32 %v1705, %v1709
        %v1712 = vshll.u32 %v1610, 16
        %v1714 = vrot.slane %v1712, 1
        %v1715 = vsel %vm1619, %v1710, %v1714
        %v1717 = vshrl.u32 %v1563, 16
        %v1719 = vshll.u32 %v1563, 16
        %v1721 = vrot.slane %v1719, 1
        %v1722 = vor.u32 %v1717, %v1721
        %v1724 = vshll.u32 %v1611, 16
        %v1726 = vrot.slane %v1724, 1
        %v1727 = vsel %vm1619, %v1722, %v1726
        %v1729 = vshrl.u32 %v1564, 16
        %v1731 = vshll.u32 %v1564, 16
        %v1733 = vrot.slane %v1731, 1
        %v1734 = vor.u32 %v1729, %v1733
        %v1736 = vshll.u32 %v1612, 16
        %v1738 = vrot.slane %v1736, 1
        %v1739 = vsel %vm1619, %v1734, %v1738
        %v1741 = vshrl.u32 %v1565, 16
        %v1743 = vshll.u32 %v1565, 16
        %v1745 = vrot.slane %v1743, 1
        %v1746 = vor.u32 %v1741, %v1745
        %v1748 = vshll.u32 %v1613, 16
        %v1750 = vrot.slane %v1748, 1
        %v1751 = vsel %vm1619, %v1746, %v1750
        %v1753 = vshrl.u32 %v1566, 16
        %v1755 = vshll.u32 %v1566, 16
        %v1757 = vrot.slane %v1755, 1
        %v1758 = vor.u32 %v1753, %v1757
        %v1760 = vshll.u32 %v1614, 16
        %v1762 = vrot.slane %v1760, 1
        %v1763 = vsel %vm1619, %v1758, %v1762
        %v1765 = vshrl.u32 %v1567, 16
        %v1767 = vshll.u32 %v1567, 16
        %v1769 = vrot.slane %v1767, 1
        %v1770 = vor.u32 %v1765, %v1769
        %v1772 = vshll.u32 %v1615, 16
        %v1774 = vrot.slane %v1772, 1
        %v1775 = vsel %vm1619, %v1770, %v1774
        %v1777 = vshrl.u32 %v1568, 16
        %v1779 = vshll.u32 %v1568, 16
        %v1781 = vrot.slane %v1779, 1
        %v1782 = vor.u32 %v1777, %v1781
        %v1784 = vshll.u32 %v1616, 16
        %v1786 = vrot.slane %v1784, 1
        %v1787 = vsel %vm1619, %v1782, %v1786
        %v1789 = vshrl.u32 %v1569, 16
        %v1791 = vshll.u32 %v1569, 16
        %v1793 = vrot.slane %v1791, 1
        %v1794 = vor.u32 %v1789, %v1793
        %v1796 = vshll.u32 %v1617, 16
        %v1798 = vrot.slane %v1796, 1
        %v1799 = vsel %vm1619, %v1794, %v1798
        %v1801 = vshrl.u32 %v1570, 16
        %v1803 = vshll.u32 %v1570, 16
        %v1805 = vrot.slane %v1803, 1
        %v1806 = vor.u32 %v1801, %v1805
        %v1808 = vshll.u32 %v1618, 16
        %v1810 = vrot.slane %v1808, 1
        %v1811 = vsel %vm1619, %v1806, %v1810
        %1812 = vrot.lane.b32.xlu0 %v1631, 32
        %v1813 = vpop.permute.xlu0 %1812
        %1814 = vrot.lane.b32.xlu0 %v1643, 32
        %v1815 = vpop.permute.xlu0 %1814
        %1816 = vrot.lane.b32.xlu0 %v1655, 32
        %v1817 = vpop.permute.xlu0 %1816
        %1818 = vrot.lane.b32.xlu0 %v1667, 32
        %v1819 = vpop.permute.xlu0 %1818
        %1820 = vrot.lane.b32.xlu0 %v1679, 32
        %v1821 = vpop.permute.xlu0 %1820
        %1822 = vrot.lane.b32.xlu0 %v1691, 32
        %v1823 = vpop.permute.xlu0 %1822
        %1824 = vrot.lane.b32.xlu0 %v1703, 32
        %v1825 = vpop.permute.xlu0 %1824
        %1826 = vrot.lane.b32.xlu0 %v1715, 32
        %v1827 = vpop.permute.xlu0 %1826
        %1828 = vrot.lane.b32.xlu0 %v1727, 32
        %v1829 = vpop.permute.xlu0 %1828
        %1830 = vrot.lane.b32.xlu0 %v1739, 32
        %v1831 = vpop.permute.xlu0 %1830
        %1832 = vrot.lane.b32.xlu0 %v1751, 32
        %v1833 = vpop.permute.xlu0 %1832
        %1834 = vrot.lane.b32.xlu0 %v1763, 32
        %v1835 = vpop.permute.xlu0 %1834
        %1836 = vrot.lane.b32.xlu0 %v1775, 32
        %v1837 = vpop.permute.xlu0 %1836
        %1838 = vrot.lane.b32.xlu0 %v1787, 32
        %v1839 = vpop.permute.xlu0 %1838
        %1840 = vrot.lane.b32.xlu0 %v1799, 32
        %v1841 = vpop.permute.xlu0 %1840
        %1842 = vrot.lane.b32.xlu0 %v1811, 32
        %v1843 = vpop.permute.xlu0 %1842
        %v1860 = vunpack.c.l.b16 %v1475
        %v1861 = vunpack.c.l.b16 %v1476
        %v1862 = vunpack.c.l.b16 %v1477
        %v1863 = vunpack.c.l.b16 %v1478
        %v1864 = vunpack.c.l.b16 %v1479
        %v1865 = vunpack.c.l.b16 %v1480
        %v1866 = vunpack.c.l.b16 %v1481
        %v1867 = vunpack.c.l.b16 %v1482
        %v1868 = vunpack.c.l.b16 %v1483
        %v1869 = vunpack.c.l.b16 %v1484
        %v1870 = vunpack.c.l.b16 %v1485
        %v1871 = vunpack.c.l.b16 %v1486
        %v1872 = vunpack.c.l.b16 %v1487
        %v1873 = vunpack.c.l.b16 %v1488
        %v1874 = vunpack.c.l.b16 %v1489
        %v1875 = vunpack.c.l.b16 %v1490
        %v1876 = vpack.c.b16 %v1524, %v1860
        %v1877 = vpack.c.b16 %v1526, %v1861
        %v1878 = vpack.c.b16 %v1528, %v1862
        %v1879 = vpack.c.b16 %v1530, %v1863
        %v1880 = vpack.c.b16 %v1532, %v1864
        %v1881 = vpack.c.b16 %v1534, %v1865
        %v1882 = vpack.c.b16 %v1536, %v1866
        %v1883 = vpack.c.b16 %v1538, %v1867
        %v1884 = vpack.c.b16 %v1540, %v1868
        %v1885 = vpack.c.b16 %v1542, %v1869
        %v1886 = vpack.c.b16 %v1544, %v1870
        %v1887 = vpack.c.b16 %v1546, %v1871
        %v1888 = vpack.c.b16 %v1548, %v1872
        %v1889 = vpack.c.b16 %v1550, %v1873
        %v1890 = vpack.c.b16 %v1552, %v1874
        %v1891 = vpack.c.b16 %v1554, %v1875
        %vm1892 = vcmask 1046528
        %v1893 = vrot.slane %v1876, 1
        %v1894 = vrot.slane %v1603, 1
        %v1895 = vsel %vm1892, %v1893, %v1894
        %v1896 = vrot.slane %v1877, 1
        %v1897 = vrot.slane %v1604, 1
        %v1898 = vsel %vm1892, %v1896, %v1897
        %v1899 = vrot.slane %v1878, 1
        %v1900 = vrot.slane %v1605, 1
        %v1901 = vsel %vm1892, %v1899, %v1900
        %v1902 = vrot.slane %v1879, 1
        %v1903 = vrot.slane %v1606, 1
        %v1904 = vsel %vm1892, %v1902, %v1903
        %v1905 = vrot.slane %v1880, 1
        %v1906 = vrot.slane %v1607, 1
        %v1907 = vsel %vm1892, %v1905, %v1906
        %v1908 = vrot.slane %v1881, 1
        %v1909 = vrot.slane %v1608, 1
        %v1910 = vsel %vm1892, %v1908, %v1909
        %v1911 = vrot.slane %v1882, 1
        %v1912 = vrot.slane %v1609, 1
        %v1913 = vsel %vm1892, %v1911, %v1912
        %v1914 = vrot.slane %v1883, 1
        %v1915 = vrot.slane %v1610, 1
        %v1916 = vsel %vm1892, %v1914, %v1915
        %v1917 = vrot.slane %v1884, 1
        %v1918 = vrot.slane %v1611, 1
        %v1919 = vsel %vm1892, %v1917, %v1918
        %v1920 = vrot.slane %v1885, 1
        %v1921 = vrot.slane %v1612, 1
        %v1922 = vsel %vm1892, %v1920, %v1921
        %v1923 = vrot.slane %v1886, 1
        %v1924 = vrot.slane %v1613, 1
        %v1925 = vsel %vm1892, %v1923, %v1924
        %v1926 = vrot.slane %v1887, 1
        %v1927 = vrot.slane %v1614, 1
        %v1928 = vsel %vm1892, %v1926, %v1927
        %v1929 = vrot.slane %v1888, 1
        %v1930 = vrot.slane %v1615, 1
        %v1931 = vsel %vm1892, %v1929, %v1930
        %v1932 = vrot.slane %v1889, 1
        %v1933 = vrot.slane %v1616, 1
        %v1934 = vsel %vm1892, %v1932, %v1933
        %v1935 = vrot.slane %v1890, 1
        %v1936 = vrot.slane %v1617, 1
        %v1937 = vsel %vm1892, %v1935, %v1936
        %v1938 = vrot.slane %v1891, 1
        %v1939 = vrot.slane %v1618, 1
        %v1940 = vsel %vm1892, %v1938, %v1939
        %1941 = vrot.lane.b32.xlu0 %v1895, 64
        %v1942 = vpop.permute.xlu0 %1941
        %1943 = vrot.lane.b32.xlu0 %v1898, 64
        %v1944 = vpop.permute.xlu0 %1943
        %1945 = vrot.lane.b32.xlu0 %v1901, 64
        %v1946 = vpop.permute.xlu0 %1945
        %1947 = vrot.lane.b32.xlu0 %v1904, 64
        %v1948 = vpop.permute.xlu0 %1947
        %1949 = vrot.lane.b32.xlu0 %v1907, 64
        %v1950 = vpop.permute.xlu0 %1949
        %1951 = vrot.lane.b32.xlu0 %v1910, 64
        %v1952 = vpop.permute.xlu0 %1951
        %1953 = vrot.lane.b32.xlu0 %v1913, 64
        %v1954 = vpop.permute.xlu0 %1953
        %1955 = vrot.lane.b32.xlu0 %v1916, 64
        %v1956 = vpop.permute.xlu0 %1955
        %1957 = vrot.lane.b32.xlu0 %v1919, 64
        %v1958 = vpop.permute.xlu0 %1957
        %1959 = vrot.lane.b32.xlu0 %v1922, 64
        %v1960 = vpop.permute.xlu0 %1959
        %1961 = vrot.lane.b32.xlu0 %v1925, 64
        %v1962 = vpop.permute.xlu0 %1961
        %1963 = vrot.lane.b32.xlu0 %v1928, 64
        %v1964 = vpop.permute.xlu0 %1963
        %1965 = vrot.lane.b32.xlu0 %v1931, 64
        %v1966 = vpop.permute.xlu0 %1965
        %1967 = vrot.lane.b32.xlu0 %v1934, 64
        %v1968 = vpop.permute.xlu0 %1967
        %1969 = vrot.lane.b32.xlu0 %v1937, 64
        %v1970 = vpop.permute.xlu0 %1969
        %1971 = vrot.lane.b32.xlu0 %v1940, 64
        %v1972 = vpop.permute.xlu0 %1971
        %vm1973 = vcmask 261120
        %v1975 = vsel %vm1973, %v1555, %v1813
        %v1977 = vsel %vm1973, %v1556, %v1815
        %v1979 = vsel %vm1973, %v1557, %v1817
        %v1981 = vsel %vm1973, %v1558, %v1819
        %v1983 = vsel %vm1973, %v1559, %v1821
        %v1985 = vsel %vm1973, %v1560, %v1823
        %v1987 = vsel %vm1973, %v1561, %v1825
        %v1989 = vsel %vm1973, %v1562, %v1827
        %v1991 = vsel %vm1973, %v1563, %v1829
        %v1993 = vsel %vm1973, %v1564, %v1831
        %v1995 = vsel %vm1973, %v1565, %v1833
        %v1997 = vsel %vm1973, %v1566, %v1835
        %v1999 = vsel %vm1973, %v1567, %v1837
        %v2001 = vsel %vm1973, %v1568, %v1839
        %v2003 = vsel %vm1973, %v1569, %v1841
        %v2005 = vsel %vm1973, %v1570, %v1843
        %v2007 = vsel %vm717, %v1975, %v1942
        %v2009 = vsel %vm717, %v1977, %v1944
        %v2011 = vsel %vm717, %v1979, %v1946
        %v2013 = vsel %vm717, %v1981, %v1948
        %v2015 = vsel %vm717, %v1983, %v1950
        %v2017 = vsel %vm717, %v1985, %v1952
        %v2019 = vsel %vm717, %v1987, %v1954
        %v2021 = vsel %vm717, %v1989, %v1956
        %v2023 = vsel %vm717, %v1991, %v1958
        %v2025 = vsel %vm717, %v1993, %v1960
        %v2027 = vsel %vm717, %v1995, %v1962
        %v2029 = vsel %vm717, %v1997, %v1964
        %v2031 = vsel %vm717, %v1999, %v1966
        %v2033 = vsel %vm717, %v2001, %v1968
        %v2035 = vsel %vm717, %v2003, %v1970
        %v2037 = vsel %vm717, %v2005, %v1972
        %v2038 = vld [vmem:[%s4] sm:$0xf]
        %v2039 = vld [vmem:[%s4 + $0x4] sm:$0xf]
        %v2040 = vld [vmem:[%s4 + $0x8] sm:$0xf]
        %v2041 = vld [vmem:[%s4 + $0xc] sm:$0xf]
        %v2042 = vld [vmem:[%s4 + $0x10] sm:$0xf]
        %v2043 = vld [vmem:[%s4 + $0x14] sm:$0xf]
        %v2044 = vld [vmem:[%s4 + $0x18] sm:$0xf]
        %v2045 = vld [vmem:[%s4 + $0x1c] sm:$0xf]
        %v2046 = vld [vmem:[%s4 + $0x20] sm:$0xf]
        %v2047 = vld [vmem:[%s4 + $0x24] sm:$0xf]
        %v2048 = vld [vmem:[%s4 + $0x28] sm:$0xf]
        %v2049 = vld [vmem:[%s4 + $0x2c] sm:$0xf]
        %v2050 = vld [vmem:[%s471] sm:$0xf]
        %v2051 = vld [vmem:[%s471 + $0x4] sm:$0xf]
        %v2052 = vld [vmem:[%s471 + $0xc] sm:$0xf]
        %v2053 = vld [vmem:[%s471 + $0x10] sm:$0xf]
        %v2054 = vld [vmem:[%s471 + $0x18] sm:$0xf]
        %v2055 = vld [vmem:[%s471 + $0x1c] sm:$0xf]
        %v2056 = vld [vmem:[%s471 + $0x24] sm:$0xf]
        %v2057 = vld [vmem:[%s471 + $0x28] sm:$0xf]
        %v2058 = vld [vmem:[%s471 + $0x30] sm:$0xf]
        %v2059 = vld [vmem:[%s471 + $0x34] sm:$0xf]
        %v2060 = vld [vmem:[%s471 + $0x3c] sm:$0xf]
        %v2061 = vld [vmem:[%s471 + $0x40] sm:$0xf]
        %v2062 = vld [vmem:[%s471 + $0x48] sm:$0xf]
        %v2063 = vld [vmem:[%s471 + $0x4c] sm:$0xf]
        %v2064 = vld [vmem:[%s471 + $0x54] sm:$0xf]
        %v2065 = vld [vmem:[%s471 + $0x58] sm:$0xf]
        %v2066 = vld [vmem:[%s471 + $0x60] sm:$0xf]
        %v2067 = vld [vmem:[%s471 + $0x64] sm:$0xf]
        %v2068 = vld [vmem:[%s471 + $0x6c] sm:$0xf]
        %v2069 = vld [vmem:[%s471 + $0x70] sm:$0xf]
        %v2070 = vld [vmem:[%s471 + $0x78] sm:$0xf]
        %v2071 = vld [vmem:[%s471 + $0x7c] sm:$0xf]
        %v2072 = vld [vmem:[%s471 + $0x84] sm:$0xf]
        %v2073 = vld [vmem:[%s471 + $0x88] sm:$0xf]
        %v2074 = vld [vmem:[%s471 + $0x90] sm:$0xf]
        %v2075 = vld [vmem:[%s471 + $0x94] sm:$0xf]
        %v2076 = vld [vmem:[%s471 + $0x9c] sm:$0xf]
        %v2077 = vld [vmem:[%s471 + $0xa0] sm:$0xf]
        %v2078 = vld [vmem:[%s471 + $0xa8] sm:$0xf]
        %v2079 = vld [vmem:[%s471 + $0xac] sm:$0xf]
        %v2080 = vld [vmem:[%s471 + $0xb4] sm:$0xf]
        %v2081 = vld [vmem:[%s471 + $0xb8] sm:$0xf]
        %v2082 = vld [vmem:[%s471 + $0x8] sm:$0x1]
        %v2083 = vld [vmem:[%s471 + $0x14] sm:$0x1]
        %v2084 = vld [vmem:[%s471 + $0x20] sm:$0x1]
        %v2085 = vld [vmem:[%s471 + $0x2c] sm:$0x1]
        %v2086 = vld [vmem:[%s471 + $0x38] sm:$0x1]
        %v2087 = vld [vmem:[%s471 + $0x44] sm:$0x1]
        %v2088 = vld [vmem:[%s471 + $0x50] sm:$0x1]
        %v2089 = vld [vmem:[%s471 + $0x5c] sm:$0x1]
        %v2090 = vld [vmem:[%s471 + $0x68] sm:$0x1]
        %v2091 = vld [vmem:[%s471 + $0x74] sm:$0x1]
        %v2092 = vld [vmem:[%s471 + $0x80] sm:$0x1]
        %v2093 = vld [vmem:[%s471 + $0x8c] sm:$0x1]
        %v2094 = vld [vmem:[%s471 + $0x98] sm:$0x1]
        %v2095 = vld [vmem:[%s471 + $0xa4] sm:$0x1]
        %v2096 = vld [vmem:[%s471 + $0xb0] sm:$0x1]
        %v2097 = vld [vmem:[%s471 + $0xbc] sm:$0x1]
        %v2098 = vld [vmem:[%s471] sm:$0xe]
        %v2099 = vld [vmem:[%s471 + $0xc] sm:$0xe]
        %v2100 = vld [vmem:[%s471 + $0x18] sm:$0xe]
        %v2101 = vld [vmem:[%s471 + $0x24] sm:$0xe]
        %v2102 = vld [vmem:[%s471 + $0x30] sm:$0xe]
        %v2103 = vld [vmem:[%s471 + $0x3c] sm:$0xe]
        %v2104 = vld [vmem:[%s471 + $0x48] sm:$0xe]
        %v2105 = vld [vmem:[%s471 + $0x54] sm:$0xe]
        %v2106 = vld [vmem:[%s471 + $0x60] sm:$0xe]
        %v2107 = vld [vmem:[%s471 + $0x6c] sm:$0xe]
        %v2108 = vld [vmem:[%s471 + $0x78] sm:$0xe]
        %v2109 = vld [vmem:[%s471 + $0x84] sm:$0xe]
        %v2110 = vld [vmem:[%s471 + $0x90] sm:$0xe]
        %v2111 = vld [vmem:[%s471 + $0x9c] sm:$0xe]
        %v2112 = vld [vmem:[%s471 + $0xa8] sm:$0xe]
        %v2113 = vld [vmem:[%s471 + $0xb4] sm:$0xe]
        %v2146 = vunpack.c.l.b16 %v2050
        %v2147 = vunpack.c.l.b16 %v2051
        %v2148 = vunpack.c.l.b16 %v2052
        %v2149 = vunpack.c.l.b16 %v2053
        %v2150 = vunpack.c.l.b16 %v2054
        %v2151 = vunpack.c.l.b16 %v2055
        %v2152 = vunpack.c.l.b16 %v2056
        %v2153 = vunpack.c.l.b16 %v2057
        %v2154 = vunpack.c.l.b16 %v2058
        %v2155 = vunpack.c.l.b16 %v2059
        %v2156 = vunpack.c.l.b16 %v2060
        %v2157 = vunpack.c.l.b16 %v2061
        %v2158 = vunpack.c.l.b16 %v2062
        %v2159 = vunpack.c.l.b16 %v2063
        %v2160 = vunpack.c.l.b16 %v2064
        %v2161 = vunpack.c.l.b16 %v2065
        %v2162 = vunpack.c.l.b16 %v2066
        %v2163 = vunpack.c.l.b16 %v2067
        %v2164 = vunpack.c.l.b16 %v2068
        %v2165 = vunpack.c.l.b16 %v2069
        %v2166 = vunpack.c.l.b16 %v2070
        %v2167 = vunpack.c.l.b16 %v2071
        %v2168 = vunpack.c.l.b16 %v2072
        %v2169 = vunpack.c.l.b16 %v2073
        %v2170 = vunpack.c.l.b16 %v2074
        %v2171 = vunpack.c.l.b16 %v2075
        %v2172 = vunpack.c.l.b16 %v2076
        %v2173 = vunpack.c.l.b16 %v2077
        %v2174 = vunpack.c.l.b16 %v2078
        %v2175 = vunpack.c.l.b16 %v2079
        %v2176 = vunpack.c.l.b16 %v2080
        %v2177 = vunpack.c.l.b16 %v2081
        %v2178 = vpack.c.b16 %v2147, %v2146
        %v2179 = vpack.c.b16 %v2149, %v2148
        %v2180 = vpack.c.b16 %v2151, %v2150
        %v2181 = vpack.c.b16 %v2153, %v2152
        %v2182 = vpack.c.b16 %v2155, %v2154
        %v2183 = vpack.c.b16 %v2157, %v2156
        %v2184 = vpack.c.b16 %v2159, %v2158
        %v2185 = vpack.c.b16 %v2161, %v2160
        %v2186 = vpack.c.b16 %v2163, %v2162
        %v2187 = vpack.c.b16 %v2165, %v2164
        %v2188 = vpack.c.b16 %v2167, %v2166
        %v2189 = vpack.c.b16 %v2169, %v2168
        %v2190 = vpack.c.b16 %v2171, %v2170
        %v2191 = vpack.c.b16 %v2173, %v2172
        %v2192 = vpack.c.b16 %v2175, %v2174
        %v2193 = vpack.c.b16 %v2177, %v2176
        %v2210 = vunpack.c.l.b16 %v2082
        %v2211 = vunpack.c.l.b16 %v2083
        %v2212 = vunpack.c.l.b16 %v2084
        %v2213 = vunpack.c.l.b16 %v2085
        %v2214 = vunpack.c.l.b16 %v2086
        %v2215 = vunpack.c.l.b16 %v2087
        %v2216 = vunpack.c.l.b16 %v2088
        %v2217 = vunpack.c.l.b16 %v2089
        %v2218 = vunpack.c.l.b16 %v2090
        %v2219 = vunpack.c.l.b16 %v2091
        %v2220 = vunpack.c.l.b16 %v2092
        %v2221 = vunpack.c.l.b16 %v2093
        %v2222 = vunpack.c.l.b16 %v2094
        %v2223 = vunpack.c.l.b16 %v2095
        %v2224 = vunpack.c.l.b16 %v2096
        %v2225 = vunpack.c.l.b16 %v2097
        %v2226 = vpack.c.b16 %v2210, %v2210
        %v2227 = vpack.c.b16 %v2211, %v2211
        %v2228 = vpack.c.b16 %v2212, %v2212
        %v2229 = vpack.c.b16 %v2213, %v2213
        %v2230 = vpack.c.b16 %v2214, %v2214
        %v2231 = vpack.c.b16 %v2215, %v2215
        %v2232 = vpack.c.b16 %v2216, %v2216
        %v2233 = vpack.c.b16 %v2217, %v2217
        %v2234 = vpack.c.b16 %v2218, %v2218
        %v2235 = vpack.c.b16 %v2219, %v2219
        %v2236 = vpack.c.b16 %v2220, %v2220
        %v2237 = vpack.c.b16 %v2221, %v2221
        %v2238 = vpack.c.b16 %v2222, %v2222
        %v2239 = vpack.c.b16 %v2223, %v2223
        %v2240 = vpack.c.b16 %v2224, %v2224
        %v2241 = vpack.c.b16 %v2225, %v2225
        %v2243 = vshrl.u32 %v2178, 16
        %v2245 = vshll.u32 %v2178, 16
        %v2247 = vrot.slane %v2245, 1
        %v2248 = vor.u32 %v2243, %v2247
        %v2250 = vshll.u32 %v2226, 16
        %v2252 = vrot.slane %v2250, 1
        %v2253 = vsel %vm1619, %v2248, %v2252
        %v2255 = vshrl.u32 %v2179, 16
        %v2257 = vshll.u32 %v2179, 16
        %v2259 = vrot.slane %v2257, 1
        %v2260 = vor.u32 %v2255, %v2259
        %v2262 = vshll.u32 %v2227, 16
        %v2264 = vrot.slane %v2262, 1
        %v2265 = vsel %vm1619, %v2260, %v2264
        %v2267 = vshrl.u32 %v2180, 16
        %v2269 = vshll.u32 %v2180, 16
        %v2271 = vrot.slane %v2269, 1
        %v2272 = vor.u32 %v2267, %v2271
        %v2274 = vshll.u32 %v2228, 16
        %v2276 = vrot.slane %v2274, 1
        %v2277 = vsel %vm1619, %v2272, %v2276
        %v2279 = vshrl.u32 %v2181, 16
        %v2281 = vshll.u32 %v2181, 16
        %v2283 = vrot.slane %v2281, 1
        %v2284 = vor.u32 %v2279, %v2283
        %v2286 = vshll.u32 %v2229, 16
        %v2288 = vrot.slane %v2286, 1
        %v2289 = vsel %vm1619, %v2284, %v2288
        %v2291 = vshrl.u32 %v2182, 16
        %v2293 = vshll.u32 %v2182, 16
        %v2295 = vrot.slane %v2293, 1
        %v2296 = vor.u32 %v2291, %v2295
        %v2298 = vshll.u32 %v2230, 16
        %v2300 = vrot.slane %v2298, 1
        %v2301 = vsel %vm1619, %v2296, %v2300
        %v2303 = vshrl.u32 %v2183, 16
        %v2305 = vshll.u32 %v2183, 16
        %v2307 = vrot.slane %v2305, 1
        %v2308 = vor.u32 %v2303, %v2307
        %v2310 = vshll.u32 %v2231, 16
        %v2312 = vrot.slane %v2310, 1
        %v2313 = vsel %vm1619, %v2308, %v2312
        %v2315 = vshrl.u32 %v2184, 16
        %v2317 = vshll.u32 %v2184, 16
        %v2319 = vrot.slane %v2317, 1
        %v2320 = vor.u32 %v2315, %v2319
        %v2322 = vshll.u32 %v2232, 16
        %v2324 = vrot.slane %v2322, 1
        %v2325 = vsel %vm1619, %v2320, %v2324
        %v2327 = vshrl.u32 %v2185, 16
        %v2329 = vshll.u32 %v2185, 16
        %v2331 = vrot.slane %v2329, 1
        %v2332 = vor.u32 %v2327, %v2331
        %v2334 = vshll.u32 %v2233, 16
        %v2336 = vrot.slane %v2334, 1
        %v2337 = vsel %vm1619, %v2332, %v2336
        %v2339 = vshrl.u32 %v2186, 16
        %v2341 = vshll.u32 %v2186, 16
        %v2343 = vrot.slane %v2341, 1
        %v2344 = vor.u32 %v2339, %v2343
        %v2346 = vshll.u32 %v2234, 16
        %v2348 = vrot.slane %v2346, 1
        %v2349 = vsel %vm1619, %v2344, %v2348
        %v2351 = vshrl.u32 %v2187, 16
        %v2353 = vshll.u32 %v2187, 16
        %v2355 = vrot.slane %v2353, 1
        %v2356 = vor.u32 %v2351, %v2355
        %v2358 = vshll.u32 %v2235, 16
        %v2360 = vrot.slane %v2358, 1
        %v2361 = vsel %vm1619, %v2356, %v2360
        %v2363 = vshrl.u32 %v2188, 16
        %v2365 = vshll.u32 %v2188, 16
        %v2367 = vrot.slane %v2365, 1
        %v2368 = vor.u32 %v2363, %v2367
        %v2370 = vshll.u32 %v2236, 16
        %v2372 = vrot.slane %v2370, 1
        %v2373 = vsel %vm1619, %v2368, %v2372
        %v2375 = vshrl.u32 %v2189, 16
        %v2377 = vshll.u32 %v2189, 16
        %v2379 = vrot.slane %v2377, 1
        %v2380 = vor.u32 %v2375, %v2379
        %v2382 = vshll.u32 %v2237, 16
        %v2384 = vrot.slane %v2382, 1
        %v2385 = vsel %vm1619, %v2380, %v2384
        %v2387 = vshrl.u32 %v2190, 16
        %v2389 = vshll.u32 %v2190, 16
        %v2391 = vrot.slane %v2389, 1
        %v2392 = vor.u32 %v2387, %v2391
        %v2394 = vshll.u32 %v2238, 16
        %v2396 = vrot.slane %v2394, 1
        %v2397 = vsel %vm1619, %v2392, %v2396
        %v2399 = vshrl.u32 %v2191, 16
        %v2401 = vshll.u32 %v2191, 16
        %v2403 = vrot.slane %v2401, 1
        %v2404 = vor.u32 %v2399, %v2403
        %v2406 = vshll.u32 %v2239, 16
        %v2408 = vrot.slane %v2406, 1
        %v2409 = vsel %vm1619, %v2404, %v2408
        %v2411 = vshrl.u32 %v2192, 16
        %v2413 = vshll.u32 %v2192, 16
        %v2415 = vrot.slane %v2413, 1
        %v2416 = vor.u32 %v2411, %v2415
        %v2418 = vshll.u32 %v2240, 16
        %v2420 = vrot.slane %v2418, 1
        %v2421 = vsel %vm1619, %v2416, %v2420
        %v2423 = vshrl.u32 %v2193, 16
        %v2425 = vshll.u32 %v2193, 16
        %v2427 = vrot.slane %v2425, 1
        %v2428 = vor.u32 %v2423, %v2427
        %v2430 = vshll.u32 %v2241, 16
        %v2432 = vrot.slane %v2430, 1
        %v2433 = vsel %vm1619, %v2428, %v2432
        %2434 = vrot.lane.b32.xlu0 %v2253, 32
        %v2435 = vpop.permute.xlu0 %2434
        %2436 = vrot.lane.b32.xlu0 %v2265, 32
        %v2437 = vpop.permute.xlu0 %2436
        %2438 = vrot.lane.b32.xlu0 %v2277, 32
        %v2439 = vpop.permute.xlu0 %2438
        %2440 = vrot.lane.b32.xlu0 %v2289, 32
        %v2441 = vpop.permute.xlu0 %2440
        %2442 = vrot.lane.b32.xlu0 %v2301, 32
        %v2443 = vpop.permute.xlu0 %2442
        %2444 = vrot.lane.b32.xlu0 %v2313, 32
        %v2445 = vpop.permute.xlu0 %2444
        %2446 = vrot.lane.b32.xlu0 %v2325, 32
        %v2447 = vpop.permute.xlu0 %2446
        %2448 = vrot.lane.b32.xlu0 %v2337, 32
        %v2449 = vpop.permute.xlu0 %2448
        %2450 = vrot.lane.b32.xlu0 %v2349, 32
        %v2451 = vpop.permute.xlu0 %2450
        %2452 = vrot.lane.b32.xlu0 %v2361, 32
        %v2453 = vpop.permute.xlu0 %2452
        %2454 = vrot.lane.b32.xlu0 %v2373, 32
        %v2455 = vpop.permute.xlu0 %2454
        %2456 = vrot.lane.b32.xlu0 %v2385, 32
        %v2457 = vpop.permute.xlu0 %2456
        %2458 = vrot.lane.b32.xlu0 %v2397, 32
        %v2459 = vpop.permute.xlu0 %2458
        %2460 = vrot.lane.b32.xlu0 %v2409, 32
        %v2461 = vpop.permute.xlu0 %2460
        %2462 = vrot.lane.b32.xlu0 %v2421, 32
        %v2463 = vpop.permute.xlu0 %2462
        %2464 = vrot.lane.b32.xlu0 %v2433, 32
        %v2465 = vpop.permute.xlu0 %2464
        %v2482 = vunpack.c.l.b16 %v2098
        %v2483 = vunpack.c.l.b16 %v2099
        %v2484 = vunpack.c.l.b16 %v2100
        %v2485 = vunpack.c.l.b16 %v2101
        %v2486 = vunpack.c.l.b16 %v2102
        %v2487 = vunpack.c.l.b16 %v2103
        %v2488 = vunpack.c.l.b16 %v2104
        %v2489 = vunpack.c.l.b16 %v2105
        %v2490 = vunpack.c.l.b16 %v2106
        %v2491 = vunpack.c.l.b16 %v2107
        %v2492 = vunpack.c.l.b16 %v2108
        %v2493 = vunpack.c.l.b16 %v2109
        %v2494 = vunpack.c.l.b16 %v2110
        %v2495 = vunpack.c.l.b16 %v2111
        %v2496 = vunpack.c.l.b16 %v2112
        %v2497 = vunpack.c.l.b16 %v2113
        %v2498 = vpack.c.b16 %v2147, %v2482
        %v2499 = vpack.c.b16 %v2149, %v2483
        %v2500 = vpack.c.b16 %v2151, %v2484
        %v2501 = vpack.c.b16 %v2153, %v2485
        %v2502 = vpack.c.b16 %v2155, %v2486
        %v2503 = vpack.c.b16 %v2157, %v2487
        %v2504 = vpack.c.b16 %v2159, %v2488
        %v2505 = vpack.c.b16 %v2161, %v2489
        %v2506 = vpack.c.b16 %v2163, %v2490
        %v2507 = vpack.c.b16 %v2165, %v2491
        %v2508 = vpack.c.b16 %v2167, %v2492
        %v2509 = vpack.c.b16 %v2169, %v2493
        %v2510 = vpack.c.b16 %v2171, %v2494
        %v2511 = vpack.c.b16 %v2173, %v2495
        %v2512 = vpack.c.b16 %v2175, %v2496
        %v2513 = vpack.c.b16 %v2177, %v2497
        %v2514 = vrot.slane %v2498, 1
        %v2515 = vrot.slane %v2226, 1
        %v2516 = vsel %vm1892, %v2514, %v2515
        %v2517 = vrot.slane %v2499, 1
        %v2518 = vrot.slane %v2227, 1
        %v2519 = vsel %vm1892, %v2517, %v2518
        %v2520 = vrot.slane %v2500, 1
        %v2521 = vrot.slane %v2228, 1
        %v2522 = vsel %vm1892, %v2520, %v2521
        %v2523 = vrot.slane %v2501, 1
        %v2524 = vrot.slane %v2229, 1
        %v2525 = vsel %vm1892, %v2523, %v2524
        %v2526 = vrot.slane %v2502, 1
        %v2527 = vrot.slane %v2230, 1
        %v2528 = vsel %vm1892, %v2526, %v2527
        %v2529 = vrot.slane %v2503, 1
        %v2530 = vrot.slane %v2231, 1
        %v2531 = vsel %vm1892, %v2529, %v2530
        %v2532 = vrot.slane %v2504, 1
        %v2533 = vrot.slane %v2232, 1
        %v2534 = vsel %vm1892, %v2532, %v2533
        %v2535 = vrot.slane %v2505, 1
        %v2536 = vrot.slane %v2233, 1
        %v2537 = vsel %vm1892, %v2535, %v2536
        %v2538 = vrot.slane %v2506, 1
        %v2539 = vrot.slane %v2234, 1
        %v2540 = vsel %vm1892, %v2538, %v2539
        %v2541 = vrot.slane %v2507, 1
        %v2542 = vrot.slane %v2235, 1
        %v2543 = vsel %vm1892, %v2541, %v2542
        %v2544 = vrot.slane %v2508, 1
        %v2545 = vrot.slane %v2236, 1
        %v2546 = vsel %vm1892, %v2544, %v2545
        %v2547 = vrot.slane %v2509, 1
        %v2548 = vrot.slane %v2237, 1
        %v2549 = vsel %vm1892, %v2547, %v2548
        %v2550 = vrot.slane %v2510, 1
        %v2551 = vrot.slane %v2238, 1
        %v2552 = vsel %vm1892, %v2550, %v2551
        %v2553 = vrot.slane %v2511, 1
        %v2554 = vrot.slane %v2239, 1
        %v2555 = vsel %vm1892, %v2553, %v2554
        %v2556 = vrot.slane %v2512, 1
        %v2557 = vrot.slane %v2240, 1
        %v2558 = vsel %vm1892, %v2556, %v2557
        %v2559 = vrot.slane %v2513, 1
        %v2560 = vrot.slane %v2241, 1
        %v2561 = vsel %vm1892, %v2559, %v2560
        %2562 = vrot.lane.b32.xlu0 %v2516, 64
        %v2563 = vpop.permute.xlu0 %2562
        %2564 = vrot.lane.b32.xlu0 %v2519, 64
        %v2565 = vpop.permute.xlu0 %2564
        %2566 = vrot.lane.b32.xlu0 %v2522, 64
        %v2567 = vpop.permute.xlu0 %2566
        %2568 = vrot.lane.b32.xlu0 %v2525, 64
        %v2569 = vpop.permute.xlu0 %2568
        %2570 = vrot.lane.b32.xlu0 %v2528, 64
        %v2571 = vpop.permute.xlu0 %2570
        %2572 = vrot.lane.b32.xlu0 %v2531, 64
        %v2573 = vpop.permute.xlu0 %2572
        %2574 = vrot.lane.b32.xlu0 %v2534, 64
        %v2575 = vpop.permute.xlu0 %2574
        %2576 = vrot.lane.b32.xlu0 %v2537, 64
        %v2577 = vpop.permute.xlu0 %2576
        %2578 = vrot.lane.b32.xlu0 %v2540, 64
        %v2579 = vpop.permute.xlu0 %2578
        %2580 = vrot.lane.b32.xlu0 %v2543, 64
        %v2581 = vpop.permute.xlu0 %2580
        %2582 = vrot.lane.b32.xlu0 %v2546, 64
        %v2583 = vpop.permute.xlu0 %2582
        %2584 = vrot.lane.b32.xlu0 %v2549, 64
        %v2585 = vpop.permute.xlu0 %2584
        %2586 = vrot.lane.b32.xlu0 %v2552, 64
        %v2587 = vpop.permute.xlu0 %2586
        %2588 = vrot.lane.b32.xlu0 %v2555, 64
        %v2589 = vpop.permute.xlu0 %2588
        %2590 = vrot.lane.b32.xlu0 %v2558, 64
        %v2591 = vpop.permute.xlu0 %2590
        %2592 = vrot.lane.b32.xlu0 %v2561, 64
        %v2593 = vpop.permute.xlu0 %2592
        %v2595 = vsel %vm1973, %v2178, %v2435
        %v2597 = vsel %vm1973, %v2179, %v2437
        %v2599 = vsel %vm1973, %v2180, %v2439
        %v2601 = vsel %vm1973, %v2181, %v2441
        %v2603 = vsel %vm1973, %v2182, %v2443
        %v2605 = vsel %vm1973, %v2183, %v2445
        %v2607 = vsel %vm1973, %v2184, %v2447
        %v2609 = vsel %vm1973, %v2185, %v2449
        %v2611 = vsel %vm1973, %v2186, %v2451
        %v2613 = vsel %vm1973, %v2187, %v2453
        %v2615 = vsel %vm1973, %v2188, %v2455
        %v2617 = vsel %vm1973, %v2189, %v2457
        %v2619 = vsel %vm1973, %v2190, %v2459
        %v2621 = vsel %vm1973, %v2191, %v2461
        %v2623 = vsel %vm1973, %v2192, %v2463
        %v2625 = vsel %vm1973, %v2193, %v2465
        %v2627 = vsel %vm717, %v2595, %v2563
        %v2629 = vsel %vm717, %v2597, %v2565
        %v2631 = vsel %vm717, %v2599, %v2567
        %v2633 = vsel %vm717, %v2601, %v2569
        %v2635 = vsel %vm717, %v2603, %v2571
        %v2637 = vsel %vm717, %v2605, %v2573
        %v2639 = vsel %vm717, %v2607, %v2575
        %v2641 = vsel %vm717, %v2609, %v2577
        %v2643 = vsel %vm717, %v2611, %v2579
        %v2645 = vsel %vm717, %v2613, %v2581
        %v2647 = vsel %vm717, %v2615, %v2583
        %v2649 = vsel %vm717, %v2617, %v2585
        %v2651 = vsel %vm717, %v2619, %v2587
        %v2653 = vsel %vm717, %v2621, %v2589
        %v2655 = vsel %vm717, %v2623, %v2591
        %v2657 = vsel %vm717, %v2625, %v2593
        %s2658 = scalar_lea.vmem %s4, 48
        %v2659 = vld [vmem:[%s2658] sm:$0xf]
        %v2660 = vld [vmem:[%s2658 + $0x4] sm:$0xf]
        %v2661 = vld [vmem:[%s2658 + $0x8] sm:$0xf]
        %v2662 = vld [vmem:[%s2658 + $0xc] sm:$0xf]
        %v2663 = vld [vmem:[%s2658 + $0x10] sm:$0xf]
        %v2664 = vld [vmem:[%s2658 + $0x14] sm:$0xf]
        %v2665 = vld [vmem:[%s2658 + $0x18] sm:$0xf]
        %v2666 = vld [vmem:[%s2658 + $0x1c] sm:$0xf]
        %v2667 = vld [vmem:[%s2658 + $0x20] sm:$0xf]
        %v2668 = vld [vmem:[%s2658 + $0x24] sm:$0xf]
        %v2669 = vld [vmem:[%s2658 + $0x28] sm:$0xf]
        %v2670 = vld [vmem:[%s2658 + $0x2c] sm:$0xf]
        %v2683 = vunpack.c.l.b16 %v2659
        %v2684 = vunpack.c.l.b16 %v2660
        %v2685 = vunpack.c.l.b16 %v2661
        %v2686 = vunpack.c.l.b16 %v2662
        %v2687 = vunpack.c.l.b16 %v2663
        %v2688 = vunpack.c.l.b16 %v2664
        %v2689 = vunpack.c.l.b16 %v2665
        %v2690 = vunpack.c.l.b16 %v2666
        %v2691 = vunpack.c.l.b16 %v2667
        %v2692 = vunpack.c.l.b16 %v2668
        %v2693 = vunpack.c.l.b16 %v2669
        %v2694 = vunpack.c.l.b16 %v2670
        %v2695 = vpack.c.b16 %v2684, %v2683
        %v2696 = vpack.c.b16 %v2686, %v2685
        %v2697 = vpack.c.b16 %v2688, %v2687
        %v2698 = vpack.c.b16 %v2690, %v2689
        %v2699 = vpack.c.b16 %v2692, %v2691
        %v2700 = vpack.c.b16 %v2694, %v2693
        %vm2707 = vcmask 785408
        %v2708 = vsel %vm2707, %v2627, 0
        %v2710 = vsel %vm2707, %v2629, 0
        %v2712 = vsel %vm2707, %v2631, 0
        %v2714 = vsel %vm2707, %v2633, 0
        %v2716 = vsel %vm2707, %v2635, 0
        %v2718 = vsel %vm2707, %v2637, 0
        %v2720 = vsel %vm2707, %v2639, 0
        %v2722 = vsel %vm2707, %v2641, 0
        %v2724 = vsel %vm2707, %v2643, 0
        %v2726 = vsel %vm2707, %v2645, 0
        %v2728 = vsel %vm2707, %v2647, 0
        %v2730 = vsel %vm2707, %v2649, 0
        %v2732 = vsel %vm2707, %v2651, 0
        %v2734 = vsel %vm2707, %v2653, 0
        %v2736 = vsel %vm2707, %v2655, 0
        %v2738 = vsel %vm2707, %v2657, 0
        %2740 = vmatpush.bf16.msra.mxu0 0
        %2741 = vmatpush.bf16.msra.mxu0 0
        %2742 = vmatpush.bf16.msra.mxu0 %v2700
        %2743 = vmatpush.bf16.msra.mxu0 %v2699
        %2744 = vmatpush.bf16.msra.mxu0 %v2698
        %2745 = vmatpush.bf16.msra.mxu0 %v2697
        %2746 = vmatpush.bf16.msra.mxu0 %v2696
        %2747 = vmatpush.bf16.msra.mxu0 %v2695
        %2748 = vmatmul.bf16.gmra.mxu0 %v2708
        %v2749 = vpop.f32.mrf.mxu0
        %v2750 = vadd.f32 0.0, %v2749
        %v2751 = vpop.f32.mrf.mxu0
        %v2752 = vadd.f32 0.0, %v2751
        %2753 = vmatmul.bf16.gmra.mxu0 %v2710
        %v2754 = vpop.f32.mrf.mxu0
        %v2755 = vadd.f32 0.0, %v2754
        %v2756 = vpop.f32.mrf.mxu0
        %v2757 = vadd.f32 0.0, %v2756
        %2758 = vmatmul.bf16.gmra.mxu0 %v2712
        %v2759 = vpop.f32.mrf.mxu0
        %v2760 = vadd.f32 0.0, %v2759
        %v2761 = vpop.f32.mrf.mxu0
        %v2762 = vadd.f32 0.0, %v2761
        %2763 = vmatmul.bf16.gmra.mxu0 %v2714
        %v2764 = vpop.f32.mrf.mxu0
        %v2765 = vadd.f32 0.0, %v2764
        %v2766 = vpop.f32.mrf.mxu0
        %v2767 = vadd.f32 0.0, %v2766
        %2768 = vmatmul.bf16.gmra.mxu0 %v2716
        %v2769 = vpop.f32.mrf.mxu0
        %v2770 = vadd.f32 0.0, %v2769
        %v2771 = vpop.f32.mrf.mxu0
        %v2772 = vadd.f32 0.0, %v2771
        %2773 = vmatmul.bf16.gmra.mxu0 %v2718
        %v2774 = vpop.f32.mrf.mxu0
        %v2775 = vadd.f32 0.0, %v2774
        %v2776 = vpop.f32.mrf.mxu0
        %v2777 = vadd.f32 0.0, %v2776
        %2778 = vmatmul.bf16.gmra.mxu0 %v2720
        %v2779 = vpop.f32.mrf.mxu0
        %v2780 = vadd.f32 0.0, %v2779
        %v2781 = vpop.f32.mrf.mxu0
        %v2782 = vadd.f32 0.0, %v2781
        %2783 = vmatmul.bf16.gmra.mxu0 %v2722
        %v2784 = vpop.f32.mrf.mxu0
        %v2785 = vadd.f32 0.0, %v2784
        %v2786 = vpop.f32.mrf.mxu0
        %v2787 = vadd.f32 0.0, %v2786
        %2788 = vmatmul.bf16.gmra.mxu0 %v2724
        %v2789 = vpop.f32.mrf.mxu0
        %v2790 = vadd.f32 0.0, %v2789
        %v2791 = vpop.f32.mrf.mxu0
        %v2792 = vadd.f32 0.0, %v2791
        %2793 = vmatmul.bf16.gmra.mxu0 %v2726
        %v2794 = vpop.f32.mrf.mxu0
        %v2795 = vadd.f32 0.0, %v2794
        %v2796 = vpop.f32.mrf.mxu0
        %v2797 = vadd.f32 0.0, %v2796
        %2798 = vmatmul.bf16.gmra.mxu0 %v2728
        %v2799 = vpop.f32.mrf.mxu0
        %v2800 = vadd.f32 0.0, %v2799
        %v2801 = vpop.f32.mrf.mxu0
        %v2802 = vadd.f32 0.0, %v2801
        %2803 = vmatmul.bf16.gmra.mxu0 %v2730
        %v2804 = vpop.f32.mrf.mxu0
        %v2805 = vadd.f32 0.0, %v2804
        %v2806 = vpop.f32.mrf.mxu0
        %v2807 = vadd.f32 0.0, %v2806
        %2808 = vmatmul.bf16.gmra.mxu0 %v2732
        %v2809 = vpop.f32.mrf.mxu0
        %v2810 = vadd.f32 0.0, %v2809
        %v2811 = vpop.f32.mrf.mxu0
        %v2812 = vadd.f32 0.0, %v2811
        %2813 = vmatmul.bf16.gmra.mxu0 %v2734
        %v2814 = vpop.f32.mrf.mxu0
        %v2815 = vadd.f32 0.0, %v2814
        %v2816 = vpop.f32.mrf.mxu0
        %v2817 = vadd.f32 0.0, %v2816
        %2818 = vmatmul.bf16.gmra.mxu0 %v2736
        %v2819 = vpop.f32.mrf.mxu0
        %v2820 = vadd.f32 0.0, %v2819
        %v2821 = vpop.f32.mrf.mxu0
        %v2822 = vadd.f32 0.0, %v2821
        %2823 = vmatmul.bf16.gmra.mxu0 %v2738
        %v2824 = vpop.f32.mrf.mxu0
        %v2825 = vadd.f32 0.0, %v2824
        %v2826 = vpop.f32.mrf.mxu0
        %v2827 = vadd.f32 0.0, %v2826
        %2828 = vdwg.mxu0
        %v2841 = vunpack.c.l.b16 %v2038
        %v2842 = vunpack.c.l.b16 %v2039
        %v2843 = vunpack.c.l.b16 %v2040
        %v2844 = vunpack.c.l.b16 %v2041
        %v2845 = vunpack.c.l.b16 %v2042
        %v2846 = vunpack.c.l.b16 %v2043
        %v2847 = vunpack.c.l.b16 %v2044
        %v2848 = vunpack.c.l.b16 %v2045
        %v2849 = vunpack.c.l.b16 %v2046
        %v2850 = vunpack.c.l.b16 %v2047
        %v2851 = vunpack.c.l.b16 %v2048
        %v2852 = vunpack.c.l.b16 %v2049
        %v2853 = vpack.c.b16 %v2842, %v2841
        %v2854 = vpack.c.b16 %v2844, %v2843
        %v2855 = vpack.c.b16 %v2846, %v2845
        %v2856 = vpack.c.b16 %v2848, %v2847
        %v2857 = vpack.c.b16 %v2850, %v2849
        %v2858 = vpack.c.b16 %v2852, %v2851
        %v2865 = vsel %vm2707, %v2007, 0
        %v2867 = vsel %vm2707, %v2009, 0
        %v2869 = vsel %vm2707, %v2011, 0
        %v2871 = vsel %vm2707, %v2013, 0
        %v2873 = vsel %vm2707, %v2015, 0
        %v2875 = vsel %vm2707, %v2017, 0
        %v2877 = vsel %vm2707, %v2019, 0
        %v2879 = vsel %vm2707, %v2021, 0
        %v2881 = vsel %vm2707, %v2023, 0
        %v2883 = vsel %vm2707, %v2025, 0
        %v2885 = vsel %vm2707, %v2027, 0
        %v2887 = vsel %vm2707, %v2029, 0
        %v2889 = vsel %vm2707, %v2031, 0
        %v2891 = vsel %vm2707, %v2033, 0
        %v2893 = vsel %vm2707, %v2035, 0
        %v2895 = vsel %vm2707, %v2037, 0
        %2897 = vmatpush.bf16.msra.mxu0 0
        %2898 = vmatpush.bf16.msra.mxu0 0
        %2899 = vmatpush.bf16.msra.mxu0 %v2858
        %2900 = vmatpush.bf16.msra.mxu0 %v2857
        %2901 = vmatpush.bf16.msra.mxu0 %v2856
        %2902 = vmatpush.bf16.msra.mxu0 %v2855
        %2903 = vmatpush.bf16.msra.mxu0 %v2854
        %2904 = vmatpush.bf16.msra.mxu0 %v2853
        %2905 = vmatmul.bf16.gmra.mxu0 %v2865
        %v2906 = vpop.f32.mrf.mxu0
        %v2907 = vadd.f32 %v2750, %v2906
        %v2908 = vpop.f32.mrf.mxu0
        %v2909 = vadd.f32 %v2752, %v2908
        %2910 = vmatmul.bf16.gmra.mxu0 %v2867
        %v2911 = vpop.f32.mrf.mxu0
        %v2912 = vadd.f32 %v2755, %v2911
        %v2913 = vpop.f32.mrf.mxu0
        %v2914 = vadd.f32 %v2757, %v2913
        %2915 = vmatmul.bf16.gmra.mxu0 %v2869
        %v2916 = vpop.f32.mrf.mxu0
        %v2917 = vadd.f32 %v2760, %v2916
        %v2918 = vpop.f32.mrf.mxu0
        %v2919 = vadd.f32 %v2762, %v2918
        %2920 = vmatmul.bf16.gmra.mxu0 %v2871
        %v2921 = vpop.f32.mrf.mxu0
        %v2922 = vadd.f32 %v2765, %v2921
        %v2923 = vpop.f32.mrf.mxu0
        %v2924 = vadd.f32 %v2767, %v2923
        %2925 = vmatmul.bf16.gmra.mxu0 %v2873
        %v2926 = vpop.f32.mrf.mxu0
        %v2927 = vadd.f32 %v2770, %v2926
        %v2928 = vpop.f32.mrf.mxu0
        %v2929 = vadd.f32 %v2772, %v2928
        %2930 = vmatmul.bf16.gmra.mxu0 %v2875
        %v2931 = vpop.f32.mrf.mxu0
        %v2932 = vadd.f32 %v2775, %v2931
        %v2933 = vpop.f32.mrf.mxu0
        %v2934 = vadd.f32 %v2777, %v2933
        %2935 = vmatmul.bf16.gmra.mxu0 %v2877
        %v2936 = vpop.f32.mrf.mxu0
        %v2937 = vadd.f32 %v2780, %v2936
        %v2938 = vpop.f32.mrf.mxu0
        %v2939 = vadd.f32 %v2782, %v2938
        %2940 = vmatmul.bf16.gmra.mxu0 %v2879
        %v2941 = vpop.f32.mrf.mxu0
        %v2942 = vadd.f32 %v2785, %v2941
        %v2943 = vpop.f32.mrf.mxu0
        %v2944 = vadd.f32 %v2787, %v2943
        %2945 = vmatmul.bf16.gmra.mxu0 %v2881
        %v2946 = vpop.f32.mrf.mxu0
        %v2947 = vadd.f32 %v2790, %v2946
        %v2948 = vpop.f32.mrf.mxu0
        %v2949 = vadd.f32 %v2792, %v2948
        %2950 = vmatmul.bf16.gmra.mxu0 %v2883
        %v2951 = vpop.f32.mrf.mxu0
        %v2952 = vadd.f32 %v2795, %v2951
        %v2953 = vpop.f32.mrf.mxu0
        %v2954 = vadd.f32 %v2797, %v2953
        %2955 = vmatmul.bf16.gmra.mxu0 %v2885
        %v2956 = vpop.f32.mrf.mxu0
        %v2957 = vadd.f32 %v2800, %v2956
        %v2958 = vpop.f32.mrf.mxu0
        %v2959 = vadd.f32 %v2802, %v2958
        %2960 = vmatmul.bf16.gmra.mxu0 %v2887
        %v2961 = vpop.f32.mrf.mxu0
        %v2962 = vadd.f32 %v2805, %v2961
        %v2963 = vpop.f32.mrf.mxu0
        %v2964 = vadd.f32 %v2807, %v2963
        %2965 = vmatmul.bf16.gmra.mxu0 %v2889
        %v2966 = vpop.f32.mrf.mxu0
        %v2967 = vadd.f32 %v2810, %v2966
        %v2968 = vpop.f32.mrf.mxu0
        %v2969 = vadd.f32 %v2812, %v2968
        %2970 = vmatmul.bf16.gmra.mxu0 %v2891
        %v2971 = vpop.f32.mrf.mxu0
        %v2972 = vadd.f32 %v2815, %v2971
        %v2973 = vpop.f32.mrf.mxu0
        %v2974 = vadd.f32 %v2817, %v2973
        %2975 = vmatmul.bf16.gmra.mxu0 %v2893
        %v2976 = vpop.f32.mrf.mxu0
        %v2977 = vadd.f32 %v2820, %v2976
        %v2978 = vpop.f32.mrf.mxu0
        %v2979 = vadd.f32 %v2822, %v2978
        %2980 = vmatmul.bf16.gmra.mxu0 %v2895
        %v2981 = vpop.f32.mrf.mxu0
        %v2982 = vadd.f32 %v2825, %v2981
        %v2983 = vpop.f32.mrf.mxu0
        %v2984 = vadd.f32 %v2827, %v2983
        %2985 = vdwg.mxu0
        %s2986 = scalar_lea.vmem [#allocation2], 24
        %v2987 = vld [vmem:[%s2986] sm:$0xf]
        %v2988 = vld [vmem:[%s2986 + $0x4] sm:$0xf]
        %v2989 = vld [vmem:[%s2986 + $0xc] sm:$0xf]
        %v2990 = vld [vmem:[%s2986 + $0x10] sm:$0xf]
        %v2991 = vld [vmem:[%s2986 + $0x18] sm:$0xf]
        %v2992 = vld [vmem:[%s2986 + $0x1c] sm:$0xf]
        %v2993 = vld [vmem:[%s2986 + $0x24] sm:$0xf]
        %v2994 = vld [vmem:[%s2986 + $0x28] sm:$0xf]
        %v2995 = vld [vmem:[%s2986 + $0x30] sm:$0xf]
        %v2996 = vld [vmem:[%s2986 + $0x34] sm:$0xf]
        %v2997 = vld [vmem:[%s2986 + $0x3c] sm:$0xf]
        %v2998 = vld [vmem:[%s2986 + $0x40] sm:$0xf]
        %v2999 = vld [vmem:[%s2986 + $0x48] sm:$0xf]
        %v3000 = vld [vmem:[%s2986 + $0x4c] sm:$0xf]
        %v3001 = vld [vmem:[%s2986 + $0x54] sm:$0xf]
        %v3002 = vld [vmem:[%s2986 + $0x58] sm:$0xf]
        %v3003 = vld [vmem:[%s2986 + $0x60] sm:$0xf]
        %v3004 = vld [vmem:[%s2986 + $0x64] sm:$0xf]
        %v3005 = vld [vmem:[%s2986 + $0x6c] sm:$0xf]
        %v3006 = vld [vmem:[%s2986 + $0x70] sm:$0xf]
        %v3007 = vld [vmem:[%s2986 + $0x78] sm:$0xf]
        %v3008 = vld [vmem:[%s2986 + $0x7c] sm:$0xf]
        %v3009 = vld [vmem:[%s2986 + $0x84] sm:$0xf]
        %v3010 = vld [vmem:[%s2986 + $0x88] sm:$0xf]
        %v3011 = vld [vmem:[%s2986 + $0x90] sm:$0xf]
        %v3012 = vld [vmem:[%s2986 + $0x94] sm:$0xf]
        %v3013 = vld [vmem:[%s2986 + $0x9c] sm:$0xf]
        %v3014 = vld [vmem:[%s2986 + $0xa0] sm:$0xf]
        %v3015 = vld [vmem:[%s2986 + $0xa8] sm:$0xf]
        %v3016 = vld [vmem:[%s2986 + $0xac] sm:$0xf]
        %v3017 = vld [vmem:[%s2986 + $0xb4] sm:$0xf]
        %v3018 = vld [vmem:[%s2986 + $0xb8] sm:$0xf]
        %v3019 = vld [vmem:[%s2986 + $0x8] sm:$0x1]
        %v3020 = vld [vmem:[%s2986 + $0x14] sm:$0x1]
        %v3021 = vld [vmem:[%s2986 + $0x20] sm:$0x1]
        %v3022 = vld [vmem:[%s2986 + $0x2c] sm:$0x1]
        %v3023 = vld [vmem:[%s2986 + $0x38] sm:$0x1]
        %v3024 = vld [vmem:[%s2986 + $0x44] sm:$0x1]
        %v3025 = vld [vmem:[%s2986 + $0x50] sm:$0x1]
        %v3026 = vld [vmem:[%s2986 + $0x5c] sm:$0x1]
        %v3027 = vld [vmem:[%s2986 + $0x68] sm:$0x1]
        %v3028 = vld [vmem:[%s2986 + $0x74] sm:$0x1]
        %v3029 = vld [vmem:[%s2986 + $0x80] sm:$0x1]
        %v3030 = vld [vmem:[%s2986 + $0x8c] sm:$0x1]
        %v3031 = vld [vmem:[%s2986 + $0x98] sm:$0x1]
        %v3032 = vld [vmem:[%s2986 + $0xa4] sm:$0x1]
        %v3033 = vld [vmem:[%s2986 + $0xb0] sm:$0x1]
        %v3034 = vld [vmem:[%s2986 + $0xbc] sm:$0x1]
        %v3035 = vld [vmem:[%s2986] sm:$0xe]
        %v3036 = vld [vmem:[%s2986 + $0xc] sm:$0xe]
        %v3037 = vld [vmem:[%s2986 + $0x18] sm:$0xe]
        %v3038 = vld [vmem:[%s2986 + $0x24] sm:$0xe]
        %v3039 = vld [vmem:[%s2986 + $0x30] sm:$0xe]
        %v3040 = vld [vmem:[%s2986 + $0x3c] sm:$0xe]
        %v3041 = vld [vmem:[%s2986 + $0x48] sm:$0xe]
        %v3042 = vld [vmem:[%s2986 + $0x54] sm:$0xe]
        %v3043 = vld [vmem:[%s2986 + $0x60] sm:$0xe]
        %v3044 = vld [vmem:[%s2986 + $0x6c] sm:$0xe]
        %v3045 = vld [vmem:[%s2986 + $0x78] sm:$0xe]
        %v3046 = vld [vmem:[%s2986 + $0x84] sm:$0xe]
        %v3047 = vld [vmem:[%s2986 + $0x90] sm:$0xe]
        %v3048 = vld [vmem:[%s2986 + $0x9c] sm:$0xe]
        %v3049 = vld [vmem:[%s2986 + $0xa8] sm:$0xe]
        %v3050 = vld [vmem:[%s2986 + $0xb4] sm:$0xe]
        %v3083 = vunpack.c.l.b16 %v2987
        %v3084 = vunpack.c.l.b16 %v2988
        %v3085 = vunpack.c.l.b16 %v2989
        %v3086 = vunpack.c.l.b16 %v2990
        %v3087 = vunpack.c.l.b16 %v2991
        %v3088 = vunpack.c.l.b16 %v2992
        %v3089 = vunpack.c.l.b16 %v2993
        %v3090 = vunpack.c.l.b16 %v2994
        %v3091 = vunpack.c.l.b16 %v2995
        %v3092 = vunpack.c.l.b16 %v2996
        %v3093 = vunpack.c.l.b16 %v2997
        %v3094 = vunpack.c.l.b16 %v2998
        %v3095 = vunpack.c.l.b16 %v2999
        %v3096 = vunpack.c.l.b16 %v3000
        %v3097 = vunpack.c.l.b16 %v3001
        %v3098 = vunpack.c.l.b16 %v3002
        %v3099 = vunpack.c.l.b16 %v3003
        %v3100 = vunpack.c.l.b16 %v3004
        %v3101 = vunpack.c.l.b16 %v3005
        %v3102 = vunpack.c.l.b16 %v3006
        %v3103 = vunpack.c.l.b16 %v3007
        %v3104 = vunpack.c.l.b16 %v3008
        %v3105 = vunpack.c.l.b16 %v3009
        %v3106 = vunpack.c.l.b16 %v3010
        %v3107 = vunpack.c.l.b16 %v3011
        %v3108 = vunpack.c.l.b16 %v3012
        %v3109 = vunpack.c.l.b16 %v3013
        %v3110 = vunpack.c.l.b16 %v3014
        %v3111 = vunpack.c.l.b16 %v3015
        %v3112 = vunpack.c.l.b16 %v3016
        %v3113 = vunpack.c.l.b16 %v3017
        %v3114 = vunpack.c.l.b16 %v3018
        %v3115 = vpack.c.b16 %v3084, %v3083
        %v3116 = vpack.c.b16 %v3086, %v3085
        %v3117 = vpack.c.b16 %v3088, %v3087
        %v3118 = vpack.c.b16 %v3090, %v3089
        %v3119 = vpack.c.b16 %v3092, %v3091
        %v3120 = vpack.c.b16 %v3094, %v3093
        %v3121 = vpack.c.b16 %v3096, %v3095
        %v3122 = vpack.c.b16 %v3098, %v3097
        %v3123 = vpack.c.b16 %v3100, %v3099
        %v3124 = vpack.c.b16 %v3102, %v3101
        %v3125 = vpack.c.b16 %v3104, %v3103
        %v3126 = vpack.c.b16 %v3106, %v3105
        %v3127 = vpack.c.b16 %v3108, %v3107
        %v3128 = vpack.c.b16 %v3110, %v3109
        %v3129 = vpack.c.b16 %v3112, %v3111
        %v3130 = vpack.c.b16 %v3114, %v3113
        %v3147 = vunpack.c.l.b16 %v3019
        %v3148 = vunpack.c.l.b16 %v3020
        %v3149 = vunpack.c.l.b16 %v3021
        %v3150 = vunpack.c.l.b16 %v3022
        %v3151 = vunpack.c.l.b16 %v3023
        %v3152 = vunpack.c.l.b16 %v3024
        %v3153 = vunpack.c.l.b16 %v3025
        %v3154 = vunpack.c.l.b16 %v3026
        %v3155 = vunpack.c.l.b16 %v3027
        %v3156 = vunpack.c.l.b16 %v3028
        %v3157 = vunpack.c.l.b16 %v3029
        %v3158 = vunpack.c.l.b16 %v3030
        %v3159 = vunpack.c.l.b16 %v3031
        %v3160 = vunpack.c.l.b16 %v3032
        %v3161 = vunpack.c.l.b16 %v3033
        %v3162 = vunpack.c.l.b16 %v3034
        %v3163 = vpack.c.b16 %v3147, %v3147
        %v3164 = vpack.c.b16 %v3148, %v3148
        %v3165 = vpack.c.b16 %v3149, %v3149
        %v3166 = vpack.c.b16 %v3150, %v3150
        %v3167 = vpack.c.b16 %v3151, %v3151
        %v3168 = vpack.c.b16 %v3152, %v3152
        %v3169 = vpack.c.b16 %v3153, %v3153
        %v3170 = vpack.c.b16 %v3154, %v3154
        %v3171 = vpack.c.b16 %v3155, %v3155
        %v3172 = vpack.c.b16 %v3156, %v3156
        %v3173 = vpack.c.b16 %v3157, %v3157
        %v3174 = vpack.c.b16 %v3158, %v3158
        %v3175 = vpack.c.b16 %v3159, %v3159
        %v3176 = vpack.c.b16 %v3160, %v3160
        %v3177 = vpack.c.b16 %v3161, %v3161
        %v3178 = vpack.c.b16 %v3162, %v3162
        %v3180 = vshrl.u32 %v3115, 16
        %v3182 = vshll.u32 %v3115, 16
        %v3184 = vrot.slane %v3182, 1
        %v3185 = vor.u32 %v3180, %v3184
        %v3187 = vshll.u32 %v3163, 16
        %v3189 = vrot.slane %v3187, 1
        %v3190 = vsel %vm1619, %v3185, %v3189
        %v3192 = vshrl.u32 %v3116, 16
        %v3194 = vshll.u32 %v3116, 16
        %v3196 = vrot.slane %v3194, 1
        %v3197 = vor.u32 %v3192, %v3196
        %v3199 = vshll.u32 %v3164, 16
        %v3201 = vrot.slane %v3199, 1
        %v3202 = vsel %vm1619, %v3197, %v3201
        %v3204 = vshrl.u32 %v3117, 16
        %v3206 = vshll.u32 %v3117, 16
        %v3208 = vrot.slane %v3206, 1
        %v3209 = vor.u32 %v3204, %v3208
        %v3211 = vshll.u32 %v3165, 16
        %v3213 = vrot.slane %v3211, 1
        %v3214 = vsel %vm1619, %v3209, %v3213
        %v3216 = vshrl.u32 %v3118, 16
        %v3218 = vshll.u32 %v3118, 16
        %v3220 = vrot.slane %v3218, 1
        %v3221 = vor.u32 %v3216, %v3220
        %v3223 = vshll.u32 %v3166, 16
        %v3225 = vrot.slane %v3223, 1
        %v3226 = vsel %vm1619, %v3221, %v3225
        %v3228 = vshrl.u32 %v3119, 16
        %v3230 = vshll.u32 %v3119, 16
        %v3232 = vrot.slane %v3230, 1
        %v3233 = vor.u32 %v3228, %v3232
        %v3235 = vshll.u32 %v3167, 16
        %v3237 = vrot.slane %v3235, 1
        %v3238 = vsel %vm1619, %v3233, %v3237
        %v3240 = vshrl.u32 %v3120, 16
        %v3242 = vshll.u32 %v3120, 16
        %v3244 = vrot.slane %v3242, 1
        %v3245 = vor.u32 %v3240, %v3244
        %v3247 = vshll.u32 %v3168, 16
        %v3249 = vrot.slane %v3247, 1
        %v3250 = vsel %vm1619, %v3245, %v3249
        %v3252 = vshrl.u32 %v3121, 16
        %v3254 = vshll.u32 %v3121, 16
        %v3256 = vrot.slane %v3254, 1
        %v3257 = vor.u32 %v3252, %v3256
        %v3259 = vshll.u32 %v3169, 16
        %v3261 = vrot.slane %v3259, 1
        %v3262 = vsel %vm1619, %v3257, %v3261
        %v3264 = vshrl.u32 %v3122, 16
        %v3266 = vshll.u32 %v3122, 16
        %v3268 = vrot.slane %v3266, 1
        %v3269 = vor.u32 %v3264, %v3268
        %v3271 = vshll.u32 %v3170, 16
        %v3273 = vrot.slane %v3271, 1
        %v3274 = vsel %vm1619, %v3269, %v3273
        %v3276 = vshrl.u32 %v3123, 16
        %v3278 = vshll.u32 %v3123, 16
        %v3280 = vrot.slane %v3278, 1
        %v3281 = vor.u32 %v3276, %v3280
        %v3283 = vshll.u32 %v3171, 16
        %v3285 = vrot.slane %v3283, 1
        %v3286 = vsel %vm1619, %v3281, %v3285
        %v3288 = vshrl.u32 %v3124, 16
        %v3290 = vshll.u32 %v3124, 16
        %v3292 = vrot.slane %v3290, 1
        %v3293 = vor.u32 %v3288, %v3292
        %v3295 = vshll.u32 %v3172, 16
        %v3297 = vrot.slane %v3295, 1
        %v3298 = vsel %vm1619, %v3293, %v3297
        %v3300 = vshrl.u32 %v3125, 16
        %v3302 = vshll.u32 %v3125, 16
        %v3304 = vrot.slane %v3302, 1
        %v3305 = vor.u32 %v3300, %v3304
        %v3307 = vshll.u32 %v3173, 16
        %v3309 = vrot.slane %v3307, 1
        %v3310 = vsel %vm1619, %v3305, %v3309
        %v3312 = vshrl.u32 %v3126, 16
        %v3314 = vshll.u32 %v3126, 16
        %v3316 = vrot.slane %v3314, 1
        %v3317 = vor.u32 %v3312, %v3316
        %v3319 = vshll.u32 %v3174, 16
        %v3321 = vrot.slane %v3319, 1
        %v3322 = vsel %vm1619, %v3317, %v3321
        %v3324 = vshrl.u32 %v3127, 16
        %v3326 = vshll.u32 %v3127, 16
        %v3328 = vrot.slane %v3326, 1
        %v3329 = vor.u32 %v3324, %v3328
        %v3331 = vshll.u32 %v3175, 16
        %v3333 = vrot.slane %v3331, 1
        %v3334 = vsel %vm1619, %v3329, %v3333
        %v3336 = vshrl.u32 %v3128, 16
        %v3338 = vshll.u32 %v3128, 16
        %v3340 = vrot.slane %v3338, 1
        %v3341 = vor.u32 %v3336, %v3340
        %v3343 = vshll.u32 %v3176, 16
        %v3345 = vrot.slane %v3343, 1
        %v3346 = vsel %vm1619, %v3341, %v3345
        %v3348 = vshrl.u32 %v3129, 16
        %v3350 = vshll.u32 %v3129, 16
        %v3352 = vrot.slane %v3350, 1
        %v3353 = vor.u32 %v3348, %v3352
        %v3355 = vshll.u32 %v3177, 16
        %v3357 = vrot.slane %v3355, 1
        %v3358 = vsel %vm1619, %v3353, %v3357
        %v3360 = vshrl.u32 %v3130, 16
        %v3362 = vshll.u32 %v3130, 16
        %v3364 = vrot.slane %v3362, 1
        %v3365 = vor.u32 %v3360, %v3364
        %v3367 = vshll.u32 %v3178, 16
        %v3369 = vrot.slane %v3367, 1
        %v3370 = vsel %vm1619, %v3365, %v3369
        %3371 = vrot.lane.b32.xlu0 %v3190, 32
        %v3372 = vpop.permute.xlu0 %3371
        %3373 = vrot.lane.b32.xlu0 %v3202, 32
        %v3374 = vpop.permute.xlu0 %3373
        %3375 = vrot.lane.b32.xlu0 %v3214, 32
        %v3376 = vpop.permute.xlu0 %3375
        %3377 = vrot.lane.b32.xlu0 %v3226, 32
        %v3378 = vpop.permute.xlu0 %3377
        %3379 = vrot.lane.b32.xlu0 %v3238, 32
        %v3380 = vpop.permute.xlu0 %3379
        %3381 = vrot.lane.b32.xlu0 %v3250, 32
        %v3382 = vpop.permute.xlu0 %3381
        %3383 = vrot.lane.b32.xlu0 %v3262, 32
        %v3384 = vpop.permute.xlu0 %3383
        %3385 = vrot.lane.b32.xlu0 %v3274, 32
        %v3386 = vpop.permute.xlu0 %3385
        %3387 = vrot.lane.b32.xlu0 %v3286, 32
        %v3388 = vpop.permute.xlu0 %3387
        %3389 = vrot.lane.b32.xlu0 %v3298, 32
        %v3390 = vpop.permute.xlu0 %3389
        %3391 = vrot.lane.b32.xlu0 %v3310, 32
        %v3392 = vpop.permute.xlu0 %3391
        %3393 = vrot.lane.b32.xlu0 %v3322, 32
        %v3394 = vpop.permute.xlu0 %3393
        %3395 = vrot.lane.b32.xlu0 %v3334, 32
        %v3396 = vpop.permute.xlu0 %3395
        %3397 = vrot.lane.b32.xlu0 %v3346, 32
        %v3398 = vpop.permute.xlu0 %3397
        %3399 = vrot.lane.b32.xlu0 %v3358, 32
        %v3400 = vpop.permute.xlu0 %3399
        %3401 = vrot.lane.b32.xlu0 %v3370, 32
        %v3402 = vpop.permute.xlu0 %3401
        %v3419 = vunpack.c.l.b16 %v3035
        %v3420 = vunpack.c.l.b16 %v3036
        %v3421 = vunpack.c.l.b16 %v3037
        %v3422 = vunpack.c.l.b16 %v3038
        %v3423 = vunpack.c.l.b16 %v3039
        %v3424 = vunpack.c.l.b16 %v3040
        %v3425 = vunpack.c.l.b16 %v3041
        %v3426 = vunpack.c.l.b16 %v3042
        %v3427 = vunpack.c.l.b16 %v3043
        %v3428 = vunpack.c.l.b16 %v3044
        %v3429 = vunpack.c.l.b16 %v3045
        %v3430 = vunpack.c.l.b16 %v3046
        %v3431 = vunpack.c.l.b16 %v3047
        %v3432 = vunpack.c.l.b16 %v3048
        %v3433 = vunpack.c.l.b16 %v3049
        %v3434 = vunpack.c.l.b16 %v3050
        %v3435 = vpack.c.b16 %v3084, %v3419
        %v3436 = vpack.c.b16 %v3086, %v3420
        %v3437 = vpack.c.b16 %v3088, %v3421
        %v3438 = vpack.c.b16 %v3090, %v3422
        %v3439 = vpack.c.b16 %v3092, %v3423
        %v3440 = vpack.c.b16 %v3094, %v3424
        %v3441 = vpack.c.b16 %v3096, %v3425
        %v3442 = vpack.c.b16 %v3098, %v3426
        %v3443 = vpack.c.b16 %v3100, %v3427
        %v3444 = vpack.c.b16 %v3102, %v3428
        %v3445 = vpack.c.b16 %v3104, %v3429
        %v3446 = vpack.c.b16 %v3106, %v3430
        %v3447 = vpack.c.b16 %v3108, %v3431
        %v3448 = vpack.c.b16 %v3110, %v3432
        %v3449 = vpack.c.b16 %v3112, %v3433
        %v3450 = vpack.c.b16 %v3114, %v3434
        %v3451 = vrot.slane %v3435, 1
        %v3452 = vrot.slane %v3163, 1
        %v3453 = vsel %vm1892, %v3451, %v3452
        %v3454 = vrot.slane %v3436, 1
        %v3455 = vrot.slane %v3164, 1
        %v3456 = vsel %vm1892, %v3454, %v3455
        %v3457 = vrot.slane %v3437, 1
        %v3458 = vrot.slane %v3165, 1
        %v3459 = vsel %vm1892, %v3457, %v3458
        %v3460 = vrot.slane %v3438, 1
        %v3461 = vrot.slane %v3166, 1
        %v3462 = vsel %vm1892, %v3460, %v3461
        %v3463 = vrot.slane %v3439, 1
        %v3464 = vrot.slane %v3167, 1
        %v3465 = vsel %vm1892, %v3463, %v3464
        %v3466 = vrot.slane %v3440, 1
        %v3467 = vrot.slane %v3168, 1
        %v3468 = vsel %vm1892, %v3466, %v3467
        %v3469 = vrot.slane %v3441, 1
        %v3470 = vrot.slane %v3169, 1
        %v3471 = vsel %vm1892, %v3469, %v3470
        %v3472 = vrot.slane %v3442, 1
        %v3473 = vrot.slane %v3170, 1
        %v3474 = vsel %vm1892, %v3472, %v3473
        %v3475 = vrot.slane %v3443, 1
        %v3476 = vrot.slane %v3171, 1
        %v3477 = vsel %vm1892, %v3475, %v3476
        %v3478 = vrot.slane %v3444, 1
        %v3479 = vrot.slane %v3172, 1
        %v3480 = vsel %vm1892, %v3478, %v3479
        %v3481 = vrot.slane %v3445, 1
        %v3482 = vrot.slane %v3173, 1
        %v3483 = vsel %vm1892, %v3481, %v3482
        %v3484 = vrot.slane %v3446, 1
        %v3485 = vrot.slane %v3174, 1
        %v3486 = vsel %vm1892, %v3484, %v3485
        %v3487 = vrot.slane %v3447, 1
        %v3488 = vrot.slane %v3175, 1
        %v3489 = vsel %vm1892, %v3487, %v3488
        %v3490 = vrot.slane %v3448, 1
        %v3491 = vrot.slane %v3176, 1
        %v3492 = vsel %vm1892, %v3490, %v3491
        %v3493 = vrot.slane %v3449, 1
        %v3494 = vrot.slane %v3177, 1
        %v3495 = vsel %vm1892, %v3493, %v3494
        %v3496 = vrot.slane %v3450, 1
        %v3497 = vrot.slane %v3178, 1
        %v3498 = vsel %vm1892, %v3496, %v3497
        %3499 = vrot.lane.b32.xlu0 %v3453, 64
        %v3500 = vpop.permute.xlu0 %3499
        %3501 = vrot.lane.b32.xlu0 %v3456, 64
        %v3502 = vpop.permute.xlu0 %3501
        %3503 = vrot.lane.b32.xlu0 %v3459, 64
        %v3504 = vpop.permute.xlu0 %3503
        %3505 = vrot.lane.b32.xlu0 %v3462, 64
        %v3506 = vpop.permute.xlu0 %3505
        %3507 = vrot.lane.b32.xlu0 %v3465, 64
        %v3508 = vpop.permute.xlu0 %3507
        %3509 = vrot.lane.b32.xlu0 %v3468, 64
        %v3510 = vpop.permute.xlu0 %3509
        %3511 = vrot.lane.b32.xlu0 %v3471, 64
        %v3512 = vpop.permute.xlu0 %3511
        %3513 = vrot.lane.b32.xlu0 %v3474, 64
        %v3514 = vpop.permute.xlu0 %3513
        %3515 = vrot.lane.b32.xlu0 %v3477, 64
        %v3516 = vpop.permute.xlu0 %3515
        %3517 = vrot.lane.b32.xlu0 %v3480, 64
        %v3518 = vpop.permute.xlu0 %3517
        %3519 = vrot.lane.b32.xlu0 %v3483, 64
        %v3520 = vpop.permute.xlu0 %3519
        %3521 = vrot.lane.b32.xlu0 %v3486, 64
        %v3522 = vpop.permute.xlu0 %3521
        %3523 = vrot.lane.b32.xlu0 %v3489, 64
        %v3524 = vpop.permute.xlu0 %3523
        %3525 = vrot.lane.b32.xlu0 %v3492, 64
        %v3526 = vpop.permute.xlu0 %3525
        %3527 = vrot.lane.b32.xlu0 %v3495, 64
        %v3528 = vpop.permute.xlu0 %3527
        %3529 = vrot.lane.b32.xlu0 %v3498, 64
        %v3530 = vpop.permute.xlu0 %3529
        %v3532 = vsel %vm1973, %v3115, %v3372
        %v3534 = vsel %vm1973, %v3116, %v3374
        %v3536 = vsel %vm1973, %v3117, %v3376
        %v3538 = vsel %vm1973, %v3118, %v3378
        %v3540 = vsel %vm1973, %v3119, %v3380
        %v3542 = vsel %vm1973, %v3120, %v3382
        %v3544 = vsel %vm1973, %v3121, %v3384
        %v3546 = vsel %vm1973, %v3122, %v3386
        %v3548 = vsel %vm1973, %v3123, %v3388
        %v3550 = vsel %vm1973, %v3124, %v3390
        %v3552 = vsel %vm1973, %v3125, %v3392
        %v3554 = vsel %vm1973, %v3126, %v3394
        %v3556 = vsel %vm1973, %v3127, %v3396
        %v3558 = vsel %vm1973, %v3128, %v3398
        %v3560 = vsel %vm1973, %v3129, %v3400
        %v3562 = vsel %vm1973, %v3130, %v3402
        %v3564 = vsel %vm717, %v3532, %v3500
        %v3566 = vsel %vm717, %v3534, %v3502
        %v3568 = vsel %vm717, %v3536, %v3504
        %v3570 = vsel %vm717, %v3538, %v3506
        %v3572 = vsel %vm717, %v3540, %v3508
        %v3574 = vsel %vm717, %v3542, %v3510
        %v3576 = vsel %vm717, %v3544, %v3512
        %v3578 = vsel %vm717, %v3546, %v3514
        %v3580 = vsel %vm717, %v3548, %v3516
        %v3582 = vsel %vm717, %v3550, %v3518
        %v3584 = vsel %vm717, %v3552, %v3520
        %v3586 = vsel %vm717, %v3554, %v3522
        %v3588 = vsel %vm717, %v3556, %v3524
        %v3590 = vsel %vm717, %v3558, %v3526
        %v3592 = vsel %vm717, %v3560, %v3528
        %v3594 = vsel %vm717, %v3562, %v3530
        %s3595 = scalar_lea.vmem %s4, 96
        %v3596 = vld [vmem:[%s3595] sm:$0xf]
        %v3597 = vld [vmem:[%s3595 + $0x4] sm:$0xf]
        %v3598 = vld [vmem:[%s3595 + $0x8] sm:$0xf]
        %v3599 = vld [vmem:[%s3595 + $0xc] sm:$0xf]
        %v3600 = vld [vmem:[%s3595 + $0x10] sm:$0xf]
        %v3601 = vld [vmem:[%s3595 + $0x14] sm:$0xf]
        %v3602 = vld [vmem:[%s3595 + $0x18] sm:$0xf]
        %v3603 = vld [vmem:[%s3595 + $0x1c] sm:$0xf]
        %v3604 = vld [vmem:[%s3595 + $0x20] sm:$0xf]
        %v3605 = vld [vmem:[%s3595 + $0x24] sm:$0xf]
        %v3606 = vld [vmem:[%s3595 + $0x28] sm:$0xf]
        %v3607 = vld [vmem:[%s3595 + $0x2c] sm:$0xf]
        %v3620 = vunpack.c.l.b16 %v3596
        %v3621 = vunpack.c.l.b16 %v3597
        %v3622 = vunpack.c.l.b16 %v3598
        %v3623 = vunpack.c.l.b16 %v3599
        %v3624 = vunpack.c.l.b16 %v3600
        %v3625 = vunpack.c.l.b16 %v3601
        %v3626 = vunpack.c.l.b16 %v3602
        %v3627 = vunpack.c.l.b16 %v3603
        %v3628 = vunpack.c.l.b16 %v3604
        %v3629 = vunpack.c.l.b16 %v3605
        %v3630 = vunpack.c.l.b16 %v3606
        %v3631 = vunpack.c.l.b16 %v3607
        %v3632 = vpack.c.b16 %v3621, %v3620
        %v3633 = vpack.c.b16 %v3623, %v3622
        %v3634 = vpack.c.b16 %v3625, %v3624
        %v3635 = vpack.c.b16 %v3627, %v3626
        %v3636 = vpack.c.b16 %v3629, %v3628
        %v3637 = vpack.c.b16 %v3631, %v3630
        %v3644 = vsel %vm2707, %v3564, 0
        %v3646 = vsel %vm2707, %v3566, 0
        %v3648 = vsel %vm2707, %v3568, 0
        %v3650 = vsel %vm2707, %v3570, 0
        %v3652 = vsel %vm2707, %v3572, 0
        %v3654 = vsel %vm2707, %v3574, 0
        %v3656 = vsel %vm2707, %v3576, 0
        %v3658 = vsel %vm2707, %v3578, 0
        %v3660 = vsel %vm2707, %v3580, 0
        %v3662 = vsel %vm2707, %v3582, 0
        %v3664 = vsel %vm2707, %v3584, 0
        %v3666 = vsel %vm2707, %v3586, 0
        %v3668 = vsel %vm2707, %v3588, 0
        %v3670 = vsel %vm2707, %v3590, 0
        %v3672 = vsel %vm2707, %v3592, 0
        %v3674 = vsel %vm2707, %v3594, 0
        %3676 = vmatpush.bf16.msra.mxu0 0
        %3677 = vmatpush.bf16.msra.mxu0 0
        %3678 = vmatpush.bf16.msra.mxu0 %v3637
        %3679 = vmatpush.bf16.msra.mxu0 %v3636
        %3680 = vmatpush.bf16.msra.mxu0 %v3635
        %3681 = vmatpush.bf16.msra.mxu0 %v3634
        %3682 = vmatpush.bf16.msra.mxu0 %v3633
        %3683 = vmatpush.bf16.msra.mxu0 %v3632
        %3684 = vmatmul.bf16.gmra.mxu0 %v3644
        %v3685 = vpop.f32.mrf.mxu0
        %v3686 = vadd.f32 0.0, %v3685
        %v3687 = vpop.f32.mrf.mxu0
        %v3688 = vadd.f32 0.0, %v3687
        %3689 = vmatmul.bf16.gmra.mxu0 %v3646
        %v3690 = vpop.f32.mrf.mxu0
        %v3691 = vadd.f32 0.0, %v3690
        %v3692 = vpop.f32.mrf.mxu0
        %v3693 = vadd.f32 0.0, %v3692
        %3694 = vmatmul.bf16.gmra.mxu0 %v3648
        %v3695 = vpop.f32.mrf.mxu0
        %v3696 = vadd.f32 0.0, %v3695
        %v3697 = vpop.f32.mrf.mxu0
        %v3698 = vadd.f32 0.0, %v3697
        %3699 = vmatmul.bf16.gmra.mxu0 %v3650
        %v3700 = vpop.f32.mrf.mxu0
        %v3701 = vadd.f32 0.0, %v3700
        %v3702 = vpop.f32.mrf.mxu0
        %v3703 = vadd.f32 0.0, %v3702
        %3704 = vmatmul.bf16.gmra.mxu0 %v3652
        %v3705 = vpop.f32.mrf.mxu0
        %v3706 = vadd.f32 0.0, %v3705
        %v3707 = vpop.f32.mrf.mxu0
        %v3708 = vadd.f32 0.0, %v3707
        %3709 = vmatmul.bf16.gmra.mxu0 %v3654
        %v3710 = vpop.f32.mrf.mxu0
        %v3711 = vadd.f32 0.0, %v3710
        %v3712 = vpop.f32.mrf.mxu0
        %v3713 = vadd.f32 0.0, %v3712
        %3714 = vmatmul.bf16.gmra.mxu0 %v3656
        %v3715 = vpop.f32.mrf.mxu0
        %v3716 = vadd.f32 0.0, %v3715
        %v3717 = vpop.f32.mrf.mxu0
        %v3718 = vadd.f32 0.0, %v3717
        %3719 = vmatmul.bf16.gmra.mxu0 %v3658
        %v3720 = vpop.f32.mrf.mxu0
        %v3721 = vadd.f32 0.0, %v3720
        %v3722 = vpop.f32.mrf.mxu0
        %v3723 = vadd.f32 0.0, %v3722
        %3724 = vmatmul.bf16.gmra.mxu0 %v3660
        %v3725 = vpop.f32.mrf.mxu0
        %v3726 = vadd.f32 0.0, %v3725
        %v3727 = vpop.f32.mrf.mxu0
        %v3728 = vadd.f32 0.0, %v3727
        %3729 = vmatmul.bf16.gmra.mxu0 %v3662
        %v3730 = vpop.f32.mrf.mxu0
        %v3731 = vadd.f32 0.0, %v3730
        %v3732 = vpop.f32.mrf.mxu0
        %v3733 = vadd.f32 0.0, %v3732
        %3734 = vmatmul.bf16.gmra.mxu0 %v3664
        %v3735 = vpop.f32.mrf.mxu0
        %v3736 = vadd.f32 0.0, %v3735
        %v3737 = vpop.f32.mrf.mxu0
        %v3738 = vadd.f32 0.0, %v3737
        %3739 = vmatmul.bf16.gmra.mxu0 %v3666
        %v3740 = vpop.f32.mrf.mxu0
        %v3741 = vadd.f32 0.0, %v3740
        %v3742 = vpop.f32.mrf.mxu0
        %v3743 = vadd.f32 0.0, %v3742
        %3744 = vmatmul.bf16.gmra.mxu0 %v3668
        %v3745 = vpop.f32.mrf.mxu0
        %v3746 = vadd.f32 0.0, %v3745
        %v3747 = vpop.f32.mrf.mxu0
        %v3748 = vadd.f32 0.0, %v3747
        %3749 = vmatmul.bf16.gmra.mxu0 %v3670
        %v3750 = vpop.f32.mrf.mxu0
        %v3751 = vadd.f32 0.0, %v3750
        %v3752 = vpop.f32.mrf.mxu0
        %v3753 = vadd.f32 0.0, %v3752
        %3754 = vmatmul.bf16.gmra.mxu0 %v3672
        %v3755 = vpop.f32.mrf.mxu0
        %v3756 = vadd.f32 0.0, %v3755
        %v3757 = vpop.f32.mrf.mxu0
        %v3758 = vadd.f32 0.0, %v3757
        %3759 = vmatmul.bf16.gmra.mxu0 %v3674
        %v3760 = vpop.f32.mrf.mxu0
        %v3761 = vadd.f32 0.0, %v3760
        %v3762 = vpop.f32.mrf.mxu0
        %v3763 = vadd.f32 0.0, %v3762
        %3764 = vdwg.mxu0
        %v3765 = vadd.f32 %v2907, %v3686
        %v3766 = vadd.f32 %v2909, %v3688
        %v3767 = vadd.f32 %v2912, %v3691
        %v3768 = vadd.f32 %v2914, %v3693
        %v3769 = vadd.f32 %v2917, %v3696
        %v3770 = vadd.f32 %v2919, %v3698
        %v3771 = vadd.f32 %v2922, %v3701
        %v3772 = vadd.f32 %v2924, %v3703
        %v3773 = vadd.f32 %v2927, %v3706
        %v3774 = vadd.f32 %v2929, %v3708
        %v3775 = vadd.f32 %v2932, %v3711
        %v3776 = vadd.f32 %v2934, %v3713
        %v3777 = vadd.f32 %v2937, %v3716
        %v3778 = vadd.f32 %v2939, %v3718
        %v3779 = vadd.f32 %v2942, %v3721
        %v3780 = vadd.f32 %v2944, %v3723
        %v3781 = vadd.f32 %v2947, %v3726
        %v3782 = vadd.f32 %v2949, %v3728
        %v3783 = vadd.f32 %v2952, %v3731
        %v3784 = vadd.f32 %v2954, %v3733
        %v3785 = vadd.f32 %v2957, %v3736
        %v3786 = vadd.f32 %v2959, %v3738
        %v3787 = vadd.f32 %v2962, %v3741
        %v3788 = vadd.f32 %v2964, %v3743
        %v3789 = vadd.f32 %v2967, %v3746
        %v3790 = vadd.f32 %v2969, %v3748
        %v3791 = vadd.f32 %v2972, %v3751
        %v3792 = vadd.f32 %v2974, %v3753
        %v3793 = vadd.f32 %v2977, %v3756
        %v3794 = vadd.f32 %v2979, %v3758
        %v3795 = vadd.f32 %v2982, %v3761
        %v3796 = vadd.f32 %v2984, %v3763
        %v3797 = vld [vmem:[%s5] sm:$0x1]
        %v3799 = vperm.slane %v3797, 0
        %v3801 = vmul.f32 %v3765, %v3799
        %v3802 = vmul.f32 %v3766, %v3799
        %v3803 = vmul.f32 %v3767, %v3799
        %v3804 = vmul.f32 %v3768, %v3799
        %v3805 = vmul.f32 %v3769, %v3799
        %v3806 = vmul.f32 %v3770, %v3799
        %v3807 = vmul.f32 %v3771, %v3799
        %v3808 = vmul.f32 %v3772, %v3799
        %v3809 = vmul.f32 %v3773, %v3799
        %v3810 = vmul.f32 %v3774, %v3799
        %v3811 = vmul.f32 %v3775, %v3799
        %v3812 = vmul.f32 %v3776, %v3799
        %v3813 = vmul.f32 %v3777, %v3799
        %v3814 = vmul.f32 %v3778, %v3799
        %v3815 = vmul.f32 %v3779, %v3799
        %v3816 = vmul.f32 %v3780, %v3799
        %v3817 = vmul.f32 %v3781, %v3799
        %v3818 = vmul.f32 %v3782, %v3799
        %v3819 = vmul.f32 %v3783, %v3799
        %v3820 = vmul.f32 %v3784, %v3799
        %v3821 = vmul.f32 %v3785, %v3799
        %v3822 = vmul.f32 %v3786, %v3799
        %v3823 = vmul.f32 %v3787, %v3799
        %v3824 = vmul.f32 %v3788, %v3799
        %v3825 = vmul.f32 %v3789, %v3799
        %v3826 = vmul.f32 %v3790, %v3799
        %v3827 = vmul.f32 %v3791, %v3799
        %v3828 = vmul.f32 %v3792, %v3799
        %v3829 = vmul.f32 %v3793, %v3799
        %v3830 = vmul.f32 %v3794, %v3799
        %v3831 = vmul.f32 %v3795, %v3799
        %v3832 = vmul.f32 %v3796, %v3799
        %v3833 = vld [vmem:[%s6] sm:$0x1]
        %v3835 = vperm.slane %v3833, 0
        %v3837 = vadd.f32 %v3801, %v3835
        %v3838 = vadd.f32 %v3802, %v3835
        %v3839 = vadd.f32 %v3803, %v3835
        %v3840 = vadd.f32 %v3804, %v3835
        %v3841 = vadd.f32 %v3805, %v3835
        %v3842 = vadd.f32 %v3806, %v3835
        %v3843 = vadd.f32 %v3807, %v3835
        %v3844 = vadd.f32 %v3808, %v3835
        %v3845 = vadd.f32 %v3809, %v3835
        %v3846 = vadd.f32 %v3810, %v3835
        %v3847 = vadd.f32 %v3811, %v3835
        %v3848 = vadd.f32 %v3812, %v3835
        %v3849 = vadd.f32 %v3813, %v3835
        %v3850 = vadd.f32 %v3814, %v3835
        %v3851 = vadd.f32 %v3815, %v3835
        %v3852 = vadd.f32 %v3816, %v3835
        %v3853 = vadd.f32 %v3817, %v3835
        %v3854 = vadd.f32 %v3818, %v3835
        %v3855 = vadd.f32 %v3819, %v3835
        %v3856 = vadd.f32 %v3820, %v3835
        %v3857 = vadd.f32 %v3821, %v3835
        %v3858 = vadd.f32 %v3822, %v3835
        %v3859 = vadd.f32 %v3823, %v3835
        %v3860 = vadd.f32 %v3824, %v3835
        %v3861 = vadd.f32 %v3825, %v3835
        %v3862 = vadd.f32 %v3826, %v3835
        %v3863 = vadd.f32 %v3827, %v3835
        %v3864 = vadd.f32 %v3828, %v3835
        %v3865 = vadd.f32 %v3829, %v3835
        %v3866 = vadd.f32 %v3830, %v3835
        %v3867 = vadd.f32 %v3831, %v3835
        %v3868 = vadd.f32 %v3832, %v3835
        %v3869 = vmax.f32 %v3837, 0.0
        %v3870 = vmax.f32 %v3838, 0.0
        %v3871 = vmax.f32 %v3839, 0.0
        %v3872 = vmax.f32 %v3840, 0.0
        %v3873 = vmax.f32 %v3841, 0.0
        %v3874 = vmax.f32 %v3842, 0.0
        %v3875 = vmax.f32 %v3843, 0.0
        %v3876 = vmax.f32 %v3844, 0.0
        %v3877 = vmax.f32 %v3845, 0.0
        %v3878 = vmax.f32 %v3846, 0.0
        %v3879 = vmax.f32 %v3847, 0.0
        %v3880 = vmax.f32 %v3848, 0.0
        %v3881 = vmax.f32 %v3849, 0.0
        %v3882 = vmax.f32 %v3850, 0.0
        %v3883 = vmax.f32 %v3851, 0.0
        %v3884 = vmax.f32 %v3852, 0.0
        %v3885 = vmax.f32 %v3853, 0.0
        %v3886 = vmax.f32 %v3854, 0.0
        %v3887 = vmax.f32 %v3855, 0.0
        %v3888 = vmax.f32 %v3856, 0.0
        %v3889 = vmax.f32 %v3857, 0.0
        %v3890 = vmax.f32 %v3858, 0.0
        %v3891 = vmax.f32 %v3859, 0.0
        %v3892 = vmax.f32 %v3860, 0.0
        %v3893 = vmax.f32 %v3861, 0.0
        %v3894 = vmax.f32 %v3862, 0.0
        %v3895 = vmax.f32 %v3863, 0.0
        %v3896 = vmax.f32 %v3864, 0.0
        %v3897 = vmax.f32 %v3865, 0.0
        %v3898 = vmax.f32 %v3866, 0.0
        %v3899 = vmax.f32 %v3867, 0.0
        %v3900 = vmax.f32 %v3868, 0.0
        %v3901 = vpack.c.bf16 %v3870, %v3869
        %v3902 = vpack.c.bf16 %v3872, %v3871
        %v3903 = vpack.c.bf16 %v3874, %v3873
        %v3904 = vpack.c.bf16 %v3876, %v3875
        %v3905 = vpack.c.bf16 %v3878, %v3877
        %v3906 = vpack.c.bf16 %v3880, %v3879
        %v3907 = vpack.c.bf16 %v3882, %v3881
        %v3908 = vpack.c.bf16 %v3884, %v3883
        %v3909 = vpack.c.bf16 %v3886, %v3885
        %v3910 = vpack.c.bf16 %v3888, %v3887
        %v3911 = vpack.c.bf16 %v3890, %v3889
        %v3912 = vpack.c.bf16 %v3892, %v3891
        %v3913 = vpack.c.bf16 %v3894, %v3893
        %v3914 = vpack.c.bf16 %v3896, %v3895
        %v3915 = vpack.c.bf16 %v3898, %v3897
        %v3916 = vpack.c.bf16 %v3900, %v3899
        %v3917 = vld [vmem:[%s7] sm:$0xf]
        %v3918 = vld [vmem:[%s7 + $0x4] sm:$0xf]
        %v3919 = vld [vmem:[%s7 + $0x8] sm:$0xf]
        %v3920 = vld [vmem:[%s7 + $0xc] sm:$0xf]
        %v3925 = vunpack.c.l.b16 %v3917
        %v3926 = vunpack.c.l.b16 %v3918
        %v3927 = vunpack.c.l.b16 %v3919
        %v3928 = vunpack.c.l.b16 %v3920
        %v3929 = vpack.c.b16 %v3926, %v3925
        %v3930 = vpack.c.b16 %v3928, %v3927
        %v3934 = vsel %vm1973, %v3901, 0
        %v3937 = vsel %vm1973, %v3902, 0
        %v3940 = vsel %vm1973, %v3903, 0
        %v3943 = vsel %vm1973, %v3904, 0
        %v3946 = vsel %vm1973, %v3905, 0
        %v3949 = vsel %vm1973, %v3906, 0
        %v3952 = vsel %vm1973, %v3907, 0
        %v3955 = vsel %vm1973, %v3908, 0
        %v3958 = vsel %vm1973, %v3909, 0
        %v3961 = vsel %vm1973, %v3910, 0
        %v3964 = vsel %vm1973, %v3911, 0
        %v3967 = vsel %vm1973, %v3912, 0
        %v3970 = vsel %vm1973, %v3913, 0
        %v3973 = vsel %vm1973, %v3914, 0
        %v3976 = vsel %vm1973, %v3915, 0
        %v3979 = vsel %vm1973, %v3916, 0
        %3981 = vmatpush.bf16.msra.mxu0 0
        %3982 = vmatpush.bf16.msra.mxu0 0
        %3983 = vmatpush.bf16.msra.mxu0 0
        %3984 = vmatpush.bf16.msra.mxu0 0
        %3985 = vmatpush.bf16.msra.mxu0 0
        %3986 = vmatpush.bf16.msra.mxu0 0
        %3987 = vmatpush.bf16.msra.mxu0 %v3930
        %3988 = vmatpush.bf16.msra.mxu0 %v3929
        %3989 = vmatmul.bf16.gmra.mxu0 %v3934
        %v3990 = vpop.f32.mrf.mxu0
        %v3991 = vadd.f32 0.0, %v3990
        %v3992 = vpop.f32.mrf.mxu0
        %v3993 = vadd.f32 0.0, %v3992
        %3994 = vmatmul.bf16.gmra.mxu0 %v3937
        %v3995 = vpop.f32.mrf.mxu0
        %v3996 = vadd.f32 0.0, %v3995
        %v3997 = vpop.f32.mrf.mxu0
        %v3998 = vadd.f32 0.0, %v3997
        %3999 = vmatmul.bf16.gmra.mxu0 %v3940
        %v4000 = vpop.f32.mrf.mxu0
        %v4001 = vadd.f32 0.0, %v4000
        %v4002 = vpop.f32.mrf.mxu0
        %v4003 = vadd.f32 0.0, %v4002
        %4004 = vmatmul.bf16.gmra.mxu0 %v3943
        %v4005 = vpop.f32.mrf.mxu0
        %v4006 = vadd.f32 0.0, %v4005
        %v4007 = vpop.f32.mrf.mxu0
        %v4008 = vadd.f32 0.0, %v4007
        %4009 = vmatmul.bf16.gmra.mxu0 %v3946
        %v4010 = vpop.f32.mrf.mxu0
        %v4011 = vadd.f32 0.0, %v4010
        %v4012 = vpop.f32.mrf.mxu0
        %v4013 = vadd.f32 0.0, %v4012
        %4014 = vmatmul.bf16.gmra.mxu0 %v3949
        %v4015 = vpop.f32.mrf.mxu0
        %v4016 = vadd.f32 0.0, %v4015
        %v4017 = vpop.f32.mrf.mxu0
        %v4018 = vadd.f32 0.0, %v4017
        %4019 = vmatmul.bf16.gmra.mxu0 %v3952
        %v4020 = vpop.f32.mrf.mxu0
        %v4021 = vadd.f32 0.0, %v4020
        %v4022 = vpop.f32.mrf.mxu0
        %v4023 = vadd.f32 0.0, %v4022
        %4024 = vmatmul.bf16.gmra.mxu0 %v3955
        %v4025 = vpop.f32.mrf.mxu0
        %v4026 = vadd.f32 0.0, %v4025
        %v4027 = vpop.f32.mrf.mxu0
        %v4028 = vadd.f32 0.0, %v4027
        %4029 = vmatmul.bf16.gmra.mxu0 %v3958
        %v4030 = vpop.f32.mrf.mxu0
        %v4031 = vadd.f32 0.0, %v4030
        %v4032 = vpop.f32.mrf.mxu0
        %v4033 = vadd.f32 0.0, %v4032
        %4034 = vmatmul.bf16.gmra.mxu0 %v3961
        %v4035 = vpop.f32.mrf.mxu0
        %v4036 = vadd.f32 0.0, %v4035
        %v4037 = vpop.f32.mrf.mxu0
        %v4038 = vadd.f32 0.0, %v4037
        %4039 = vmatmul.bf16.gmra.mxu0 %v3964
        %v4040 = vpop.f32.mrf.mxu0
        %v4041 = vadd.f32 0.0, %v4040
        %v4042 = vpop.f32.mrf.mxu0
        %v4043 = vadd.f32 0.0, %v4042
        %4044 = vmatmul.bf16.gmra.mxu0 %v3967
        %v4045 = vpop.f32.mrf.mxu0
        %v4046 = vadd.f32 0.0, %v4045
        %v4047 = vpop.f32.mrf.mxu0
        %v4048 = vadd.f32 0.0, %v4047
        %4049 = vmatmul.bf16.gmra.mxu0 %v3970
        %v4050 = vpop.f32.mrf.mxu0
        %v4051 = vadd.f32 0.0, %v4050
        %v4052 = vpop.f32.mrf.mxu0
        %v4053 = vadd.f32 0.0, %v4052
        %4054 = vmatmul.bf16.gmra.mxu0 %v3973
        %v4055 = vpop.f32.mrf.mxu0
        %v4056 = vadd.f32 0.0, %v4055
        %v4057 = vpop.f32.mrf.mxu0
        %v4058 = vadd.f32 0.0, %v4057
        %4059 = vmatmul.bf16.gmra.mxu0 %v3976
        %v4060 = vpop.f32.mrf.mxu0
        %v4061 = vadd.f32 0.0, %v4060
        %v4062 = vpop.f32.mrf.mxu0
        %v4063 = vadd.f32 0.0, %v4062
        %4064 = vmatmul.bf16.gmra.mxu0 %v3979
        %v4065 = vpop.f32.mrf.mxu0
        %v4066 = vadd.f32 0.0, %v4065
        %v4067 = vpop.f32.mrf.mxu0
        %v4068 = vadd.f32 0.0, %v4067
        %4069 = vdwg.mxu0
        %v4070 = vld [vmem:[%s8] sm:$0x1]
        %v4072 = vperm.slane %v4070, 0
        %v4074 = vmul.f32 %v3991, %v4072
        %v4075 = vmul.f32 %v3993, %v4072
        %v4076 = vmul.f32 %v3996, %v4072
        %v4077 = vmul.f32 %v3998, %v4072
        %v4078 = vmul.f32 %v4001, %v4072
        %v4079 = vmul.f32 %v4003, %v4072
        %v4080 = vmul.f32 %v4006, %v4072
        %v4081 = vmul.f32 %v4008, %v4072
        %v4082 = vmul.f32 %v4011, %v4072
        %v4083 = vmul.f32 %v4013, %v4072
        %v4084 = vmul.f32 %v4016, %v4072
        %v4085 = vmul.f32 %v4018, %v4072
        %v4086 = vmul.f32 %v4021, %v4072
        %v4087 = vmul.f32 %v4023, %v4072
        %v4088 = vmul.f32 %v4026, %v4072
        %v4089 = vmul.f32 %v4028, %v4072
        %v4090 = vmul.f32 %v4031, %v4072
        %v4091 = vmul.f32 %v4033, %v4072
        %v4092 = vmul.f32 %v4036, %v4072
        %v4093 = vmul.f32 %v4038, %v4072
        %v4094 = vmul.f32 %v4041, %v4072
        %v4095 = vmul.f32 %v4043, %v4072
        %v4096 = vmul.f32 %v4046, %v4072
        %v4097 = vmul.f32 %v4048, %v4072
        %v4098 = vmul.f32 %v4051, %v4072
        %v4099 = vmul.f32 %v4053, %v4072
        %v4100 = vmul.f32 %v4056, %v4072
        %v4101 = vmul.f32 %v4058, %v4072
        %v4102 = vmul.f32 %v4061, %v4072
        %v4103 = vmul.f32 %v4063, %v4072
        %v4104 = vmul.f32 %v4066, %v4072
        %v4105 = vmul.f32 %v4068, %v4072
        %v4106 = vld [vmem:[%s9] sm:$0x1]
        %v4108 = vperm.slane %v4106, 0
        %v4110 = vadd.f32 %v4074, %v4108
        %v4111 = vadd.f32 %v4075, %v4108
        %v4112 = vadd.f32 %v4076, %v4108
        %v4113 = vadd.f32 %v4077, %v4108
        %v4114 = vadd.f32 %v4078, %v4108
        %v4115 = vadd.f32 %v4079, %v4108
        %v4116 = vadd.f32 %v4080, %v4108
        %v4117 = vadd.f32 %v4081, %v4108
        %v4118 = vadd.f32 %v4082, %v4108
        %v4119 = vadd.f32 %v4083, %v4108
        %v4120 = vadd.f32 %v4084, %v4108
        %v4121 = vadd.f32 %v4085, %v4108
        %v4122 = vadd.f32 %v4086, %v4108
        %v4123 = vadd.f32 %v4087, %v4108
        %v4124 = vadd.f32 %v4088, %v4108
        %v4125 = vadd.f32 %v4089, %v4108
        %v4126 = vadd.f32 %v4090, %v4108
        %v4127 = vadd.f32 %v4091, %v4108
        %v4128 = vadd.f32 %v4092, %v4108
        %v4129 = vadd.f32 %v4093, %v4108
        %v4130 = vadd.f32 %v4094, %v4108
        %v4131 = vadd.f32 %v4095, %v4108
        %v4132 = vadd.f32 %v4096, %v4108
        %v4133 = vadd.f32 %v4097, %v4108
        %v4134 = vadd.f32 %v4098, %v4108
        %v4135 = vadd.f32 %v4099, %v4108
        %v4136 = vadd.f32 %v4100, %v4108
        %v4137 = vadd.f32 %v4101, %v4108
        %v4138 = vadd.f32 %v4102, %v4108
        %v4139 = vadd.f32 %v4103, %v4108
        %v4140 = vadd.f32 %v4104, %v4108
        %v4141 = vadd.f32 %v4105, %v4108
        %v4142 = vld [vmem:[%s10] sm:$0xf]
        %v4143 = vld [vmem:[%s10 + $0x4] sm:$0xf]
        %v4144 = vld [vmem:[%s10 + $0x8] sm:$0xf]
        %v4145 = vld [vmem:[%s10 + $0xc] sm:$0xf]
        %v4146 = vld [vmem:[%s10 + $0x10] sm:$0xf]
        %v4147 = vld [vmem:[%s10 + $0x14] sm:$0xf]
        %v4148 = vld [vmem:[%s10 + $0x18] sm:$0xf]
        %v4149 = vld [vmem:[%s10 + $0x1c] sm:$0xf]
        %v4158 = vunpack.c.l.b16 %v4142
        %v4159 = vunpack.c.l.b16 %v4143
        %v4160 = vunpack.c.l.b16 %v4144
        %v4161 = vunpack.c.l.b16 %v4145
        %v4162 = vunpack.c.l.b16 %v4146
        %v4163 = vunpack.c.l.b16 %v4147
        %v4164 = vunpack.c.l.b16 %v4148
        %v4165 = vunpack.c.l.b16 %v4149
        %v4166 = vpack.c.b16 %v4159, %v4158
        %v4167 = vpack.c.b16 %v4161, %v4160
        %v4168 = vpack.c.b16 %v4163, %v4162
        %v4169 = vpack.c.b16 %v4165, %v4164
        %4174 = vmatpush.bf16.msra.mxu0 0
        %4175 = vmatpush.bf16.msra.mxu0 0
        %4176 = vmatpush.bf16.msra.mxu0 0
        %4177 = vmatpush.bf16.msra.mxu0 0
        %4178 = vmatpush.bf16.msra.mxu0 %v4169
        %4179 = vmatpush.bf16.msra.mxu0 %v4168
        %4180 = vmatpush.bf16.msra.mxu0 %v4167
        %4181 = vmatpush.bf16.msra.mxu0 %v4166
        %4182 = vmatmul.bf16.gmra.mxu0 %v719
        %v4183 = vpop.f32.mrf.mxu0
        %v4184 = vadd.f32 0.0, %v4183
        %v4185 = vpop.f32.mrf.mxu0
        %v4186 = vadd.f32 0.0, %v4185
        %4187 = vmatmul.bf16.gmra.mxu0 %v722
        %v4188 = vpop.f32.mrf.mxu0
        %v4189 = vadd.f32 0.0, %v4188
        %v4190 = vpop.f32.mrf.mxu0
        %v4191 = vadd.f32 0.0, %v4190
        %4192 = vmatmul.bf16.gmra.mxu0 %v725
        %v4193 = vpop.f32.mrf.mxu0
        %v4194 = vadd.f32 0.0, %v4193
        %v4195 = vpop.f32.mrf.mxu0
        %v4196 = vadd.f32 0.0, %v4195
        %4197 = vmatmul.bf16.gmra.mxu0 %v728
        %v4198 = vpop.f32.mrf.mxu0
        %v4199 = vadd.f32 0.0, %v4198
        %v4200 = vpop.f32.mrf.mxu0
        %v4201 = vadd.f32 0.0, %v4200
        %4202 = vmatmul.bf16.gmra.mxu0 %v731
        %v4203 = vpop.f32.mrf.mxu0
        %v4204 = vadd.f32 0.0, %v4203
        %v4205 = vpop.f32.mrf.mxu0
        %v4206 = vadd.f32 0.0, %v4205
        %4207 = vmatmul.bf16.gmra.mxu0 %v734
        %v4208 = vpop.f32.mrf.mxu0
        %v4209 = vadd.f32 0.0, %v4208
        %v4210 = vpop.f32.mrf.mxu0
        %v4211 = vadd.f32 0.0, %v4210
        %4212 = vmatmul.bf16.gmra.mxu0 %v737
        %v4213 = vpop.f32.mrf.mxu0
        %v4214 = vadd.f32 0.0, %v4213
        %v4215 = vpop.f32.mrf.mxu0
        %v4216 = vadd.f32 0.0, %v4215
        %4217 = vmatmul.bf16.gmra.mxu0 %v740
        %v4218 = vpop.f32.mrf.mxu0
        %v4219 = vadd.f32 0.0, %v4218
        %v4220 = vpop.f32.mrf.mxu0
        %v4221 = vadd.f32 0.0, %v4220
        %4222 = vmatmul.bf16.gmra.mxu0 %v743
        %v4223 = vpop.f32.mrf.mxu0
        %v4224 = vadd.f32 0.0, %v4223
        %v4225 = vpop.f32.mrf.mxu0
        %v4226 = vadd.f32 0.0, %v4225
        %4227 = vmatmul.bf16.gmra.mxu0 %v746
        %v4228 = vpop.f32.mrf.mxu0
        %v4229 = vadd.f32 0.0, %v4228
        %v4230 = vpop.f32.mrf.mxu0
        %v4231 = vadd.f32 0.0, %v4230
        %4232 = vmatmul.bf16.gmra.mxu0 %v749
        %v4233 = vpop.f32.mrf.mxu0
        %v4234 = vadd.f32 0.0, %v4233
        %v4235 = vpop.f32.mrf.mxu0
        %v4236 = vadd.f32 0.0, %v4235
        %4237 = vmatmul.bf16.gmra.mxu0 %v752
        %v4238 = vpop.f32.mrf.mxu0
        %v4239 = vadd.f32 0.0, %v4238
        %v4240 = vpop.f32.mrf.mxu0
        %v4241 = vadd.f32 0.0, %v4240
        %4242 = vmatmul.bf16.gmra.mxu0 %v755
        %v4243 = vpop.f32.mrf.mxu0
        %v4244 = vadd.f32 0.0, %v4243
        %v4245 = vpop.f32.mrf.mxu0
        %v4246 = vadd.f32 0.0, %v4245
        %4247 = vmatmul.bf16.gmra.mxu0 %v758
        %v4248 = vpop.f32.mrf.mxu0
        %v4249 = vadd.f32 0.0, %v4248
        %v4250 = vpop.f32.mrf.mxu0
        %v4251 = vadd.f32 0.0, %v4250
        %4252 = vmatmul.bf16.gmra.mxu0 %v761
        %v4253 = vpop.f32.mrf.mxu0
        %v4254 = vadd.f32 0.0, %v4253
        %v4255 = vpop.f32.mrf.mxu0
        %v4256 = vadd.f32 0.0, %v4255
        %4257 = vmatmul.bf16.gmra.mxu0 %v764
        %v4258 = vpop.f32.mrf.mxu0
        %v4259 = vadd.f32 0.0, %v4258
        %v4260 = vpop.f32.mrf.mxu0
        %v4261 = vadd.f32 0.0, %v4260
        %4262 = vdwg.mxu0
        %v4263 = vld [vmem:[%s11] sm:$0x1]
        %v4265 = vperm.slane %v4263, 0
        %v4267 = vmul.f32 %v4184, %v4265
        %v4268 = vmul.f32 %v4186, %v4265
        %v4269 = vmul.f32 %v4189, %v4265
        %v4270 = vmul.f32 %v4191, %v4265
        %v4271 = vmul.f32 %v4194, %v4265
        %v4272 = vmul.f32 %v4196, %v4265
        %v4273 = vmul.f32 %v4199, %v4265
        %v4274 = vmul.f32 %v4201, %v4265
        %v4275 = vmul.f32 %v4204, %v4265
        %v4276 = vmul.f32 %v4206, %v4265
        %v4277 = vmul.f32 %v4209, %v4265
        %v4278 = vmul.f32 %v4211, %v4265
        %v4279 = vmul.f32 %v4214, %v4265
        %v4280 = vmul.f32 %v4216, %v4265
        %v4281 = vmul.f32 %v4219, %v4265
        %v4282 = vmul.f32 %v4221, %v4265
        %v4283 = vmul.f32 %v4224, %v4265
        %v4284 = vmul.f32 %v4226, %v4265
        %v4285 = vmul.f32 %v4229, %v4265
        %v4286 = vmul.f32 %v4231, %v4265
        %v4287 = vmul.f32 %v4234, %v4265
        %v4288 = vmul.f32 %v4236, %v4265
        %v4289 = vmul.f32 %v4239, %v4265
        %v4290 = vmul.f32 %v4241, %v4265
        %v4291 = vmul.f32 %v4244, %v4265
        %v4292 = vmul.f32 %v4246, %v4265
        %v4293 = vmul.f32 %v4249, %v4265
        %v4294 = vmul.f32 %v4251, %v4265
        %v4295 = vmul.f32 %v4254, %v4265
        %v4296 = vmul.f32 %v4256, %v4265
        %v4297 = vmul.f32 %v4259, %v4265
        %v4298 = vmul.f32 %v4261, %v4265
        %v4299 = vld [vmem:[%s12] sm:$0x1]
        %v4301 = vperm.slane %v4299, 0
        %v4303 = vadd.f32 %v4267, %v4301
        %v4304 = vadd.f32 %v4268, %v4301
        %v4305 = vadd.f32 %v4269, %v4301
        %v4306 = vadd.f32 %v4270, %v4301
        %v4307 = vadd.f32 %v4271, %v4301
        %v4308 = vadd.f32 %v4272, %v4301
        %v4309 = vadd.f32 %v4273, %v4301
        %v4310 = vadd.f32 %v4274, %v4301
        %v4311 = vadd.f32 %v4275, %v4301
        %v4312 = vadd.f32 %v4276, %v4301
        %v4313 = vadd.f32 %v4277, %v4301
        %v4314 = vadd.f32 %v4278, %v4301
        %v4315 = vadd.f32 %v4279, %v4301
        %v4316 = vadd.f32 %v4280, %v4301
        %v4317 = vadd.f32 %v4281, %v4301
        %v4318 = vadd.f32 %v4282, %v4301
        %v4319 = vadd.f32 %v4283, %v4301
        %v4320 = vadd.f32 %v4284, %v4301
        %v4321 = vadd.f32 %v4285, %v4301
        %v4322 = vadd.f32 %v4286, %v4301
        %v4323 = vadd.f32 %v4287, %v4301
        %v4324 = vadd.f32 %v4288, %v4301
        %v4325 = vadd.f32 %v4289, %v4301
        %v4326 = vadd.f32 %v4290, %v4301
        %v4327 = vadd.f32 %v4291, %v4301
        %v4328 = vadd.f32 %v4292, %v4301
        %v4329 = vadd.f32 %v4293, %v4301
        %v4330 = vadd.f32 %v4294, %v4301
        %v4331 = vadd.f32 %v4295, %v4301
        %v4332 = vadd.f32 %v4296, %v4301
        %v4333 = vadd.f32 %v4297, %v4301
        %v4334 = vadd.f32 %v4298, %v4301
        %v4335 = vadd.f32 %v4110, %v4303
        %v4336 = vadd.f32 %v4111, %v4304
        %v4337 = vadd.f32 %v4112, %v4305
        %v4338 = vadd.f32 %v4113, %v4306
        %v4339 = vadd.f32 %v4114, %v4307
        %v4340 = vadd.f32 %v4115, %v4308
        %v4341 = vadd.f32 %v4116, %v4309
        %v4342 = vadd.f32 %v4117, %v4310
        %v4343 = vadd.f32 %v4118, %v4311
        %v4344 = vadd.f32 %v4119, %v4312
        %v4345 = vadd.f32 %v4120, %v4313
        %v4346 = vadd.f32 %v4121, %v4314
        %v4347 = vadd.f32 %v4122, %v4315
        %v4348 = vadd.f32 %v4123, %v4316
        %v4349 = vadd.f32 %v4124, %v4317
        %v4350 = vadd.f32 %v4125, %v4318
        %v4351 = vadd.f32 %v4126, %v4319
        %v4352 = vadd.f32 %v4127, %v4320
        %v4353 = vadd.f32 %v4128, %v4321
        %v4354 = vadd.f32 %v4129, %v4322
        %v4355 = vadd.f32 %v4130, %v4323
        %v4356 = vadd.f32 %v4131, %v4324
        %v4357 = vadd.f32 %v4132, %v4325
        %v4358 = vadd.f32 %v4133, %v4326
        %v4359 = vadd.f32 %v4134, %v4327
        %v4360 = vadd.f32 %v4135, %v4328
        %v4361 = vadd.f32 %v4136, %v4329
        %v4362 = vadd.f32 %v4137, %v4330
        %v4363 = vadd.f32 %v4138, %v4331
        %v4364 = vadd.f32 %v4139, %v4332
        %v4365 = vadd.f32 %v4140, %v4333
        %v4366 = vadd.f32 %v4141, %v4334
        %v4367 = vmax.f32 %v4335, 0.0
        %v4368 = vmax.f32 %v4336, 0.0
        %v4369 = vmax.f32 %v4337, 0.0
        %v4370 = vmax.f32 %v4338, 0.0
        %v4371 = vmax.f32 %v4339, 0.0
        %v4372 = vmax.f32 %v4340, 0.0
        %v4373 = vmax.f32 %v4341, 0.0
        %v4374 = vmax.f32 %v4342, 0.0
        %v4375 = vmax.f32 %v4343, 0.0
        %v4376 = vmax.f32 %v4344, 0.0
        %v4377 = vmax.f32 %v4345, 0.0
        %v4378 = vmax.f32 %v4346, 0.0
        %v4379 = vmax.f32 %v4347, 0.0
        %v4380 = vmax.f32 %v4348, 0.0
        %v4381 = vmax.f32 %v4349, 0.0
        %v4382 = vmax.f32 %v4350, 0.0
        %v4383 = vmax.f32 %v4351, 0.0
        %v4384 = vmax.f32 %v4352, 0.0
        %v4385 = vmax.f32 %v4353, 0.0
        %v4386 = vmax.f32 %v4354, 0.0
        %v4387 = vmax.f32 %v4355, 0.0
        %v4388 = vmax.f32 %v4356, 0.0
        %v4389 = vmax.f32 %v4357, 0.0
        %v4390 = vmax.f32 %v4358, 0.0
        %v4391 = vmax.f32 %v4359, 0.0
        %v4392 = vmax.f32 %v4360, 0.0
        %v4393 = vmax.f32 %v4361, 0.0
        %v4394 = vmax.f32 %v4362, 0.0
        %v4395 = vmax.f32 %v4363, 0.0
        %v4396 = vmax.f32 %v4364, 0.0
        %v4397 = vmax.f32 %v4365, 0.0
        %v4398 = vmax.f32 %v4366, 0.0
        %4399 = vst [vmem:[%s460] sm:$0xff] %v4367
        %4400 = vst [vmem:[%s460 + $0x8] sm:$0xff] %v4368
        %4401 = vst [vmem:[%s460 + $0x10] sm:$0xff] %v4369
        %4402 = vst [vmem:[%s460 + $0x18] sm:$0xff] %v4370
        %4403 = vst [vmem:[%s460 + $0x20] sm:$0xff] %v4371
        %4404 = vst [vmem:[%s460 + $0x28] sm:$0xff] %v4372
        %4405 = vst [vmem:[%s460 + $0x30] sm:$0xff] %v4373
        %4406 = vst [vmem:[%s460 + $0x38] sm:$0xff] %v4374
        %4407 = vst [vmem:[%s460 + $0x40] sm:$0xff] %v4375
        %4408 = vst [vmem:[%s460 + $0x48] sm:$0xff] %v4376
        %4409 = vst [vmem:[%s460 + $0x50] sm:$0xff] %v4377
        %4410 = vst [vmem:[%s460 + $0x58] sm:$0xff] %v4378
        %4411 = vst [vmem:[%s460 + $0x60] sm:$0xff] %v4379
        %4412 = vst [vmem:[%s460 + $0x68] sm:$0xff] %v4380
        %4413 = vst [vmem:[%s460 + $0x70] sm:$0xff] %v4381
        %4414 = vst [vmem:[%s460 + $0x78] sm:$0xff] %v4382
        %4415 = vst [vmem:[%s460 + $0x80] sm:$0xff] %v4383
        %4416 = vst [vmem:[%s460 + $0x88] sm:$0xff] %v4384
        %4417 = vst [vmem:[%s460 + $0x90] sm:$0xff] %v4385
        %4418 = vst [vmem:[%s460 + $0x98] sm:$0xff] %v4386
        %4419 = vst [vmem:[%s460 + $0xa0] sm:$0xff] %v4387
        %4420 = vst [vmem:[%s460 + $0xa8] sm:$0xff] %v4388
        %4421 = vst [vmem:[%s460 + $0xb0] sm:$0xff] %v4389
        %4422 = vst [vmem:[%s460 + $0xb8] sm:$0xff] %v4390
        %4423 = vst [vmem:[%s460 + $0xc0] sm:$0xff] %v4391
        %4424 = vst [vmem:[%s460 + $0xc8] sm:$0xff] %v4392
        %4425 = vst [vmem:[%s460 + $0xd0] sm:$0xff] %v4393
        %4426 = vst [vmem:[%s460 + $0xd8] sm:$0xff] %v4394
        %4427 = vst [vmem:[%s460 + $0xe0] sm:$0xff] %v4395
        %4428 = vst [vmem:[%s460 + $0xe8] sm:$0xff] %v4396
        %4429 = vst [vmem:[%s460 + $0xf0] sm:$0xff] %v4397
        %4430 = vst [vmem:[%s460 + $0xf8] sm:$0xff] %v4398
        %s4431 = sand.u32 %s316, 1
        %s4432 = scalar_lea.sflag [#allocation5], %s4431
        %s4433 = sand.u32 %s316, 1
        %s4434 = smul.addr %s4433, 256
        %s4435 = scalar_lea.vmem [#allocation6], %s4434
        // Predicated region
        $region77: #{tpu_custom_call.1} parent=71 // pred_check
          %p4436 = pneg %p326
        $region78: #{tpu_custom_call.1} parent=71 // pred_check_branch
          %4438 = sbr.rel (%p4436) target = $region80
        $region79: #{tpu_custom_call.1} parent=71 // pred_region
          %4440 = vsyncadd %s4432, 0
          %s4441 = smul.addr %s30, 32
          %s4442 = smul.addr %s4441, 8
          %s4443 = scalar_lea.hbm %s13, %s4442
          %s4444 = sshll.u32 %s4435, 4
          %s4445 = int_to_ptr.vmem [resolvable:$true] %s4444
          %s4446 = sshll.u32 %s4443, 4
          %s4447 = int_to_ptr.hbm [resolvable:$true] %s4446
          %4452 = dma.vmem_to_hbm [thread:$0]  %s4445, 4096, %s4447, %s4432, 128, 128, 8
        $region80: #{tpu_custom_call.1} parent=71 // pred_fallthru
          _
      $region72: #{tpu_custom_call.1} parent=5 // pred_fallthru
        _
      %p4453 = scmp.le.s32.totalorder 2, %s25
      // Predicated region
      $region81: #{tpu_custom_call.1} parent=5 // pred_check
        %p4454 = pneg %p4453
      $region82: #{tpu_custom_call.1} parent=5 // pred_check_branch
        %4456 = sbr.rel (%p4454) target = $region84
      $region83: #{tpu_custom_call.1} parent=5 // pred_region
        %s4457 = ssub.s32 %s25, 2
        // Predicated region
        $region85: #{tpu_custom_call.1} parent=83 // pred_check
          %p4458 = pneg %p332
        $region86: #{tpu_custom_call.1} parent=83 // pred_check_branch
          %4460 = sbr.rel (%p4458) target = $region88
        $region87: #{tpu_custom_call.1} parent=83 // pred_region
          %s4461 = sand.u32 %s317, 1
          %s4462 = scalar_lea.sflag [#allocation5], %s4461
          %s4463 = sand.u32 %s317, 1
          %s4464 = smul.addr %s4463, 256
          %s4465 = scalar_lea.vmem [#allocation6], %s4464
          %4467 = dma.done %s4462, 4096
        $region88: #{tpu_custom_call.1} parent=83 // pred_fallthru
          _
      $region84: #{tpu_custom_call.1} parent=5 // pred_fallthru
        _
    $region6: #{tpu_custom_call.1} parent=1 // loop_footer
      %s29 = sadd.s32 1, %s25
    $region7: #{tpu_custom_call.1} parent=1 // loop_footer_branch
      %24 = sbr.rel target = $region3
    $region8: #{tpu_custom_call.1} parent=1 // loop_exit
      _
    %4468 = vsyncpa [#allocation4], 1
    %s4469 = scalar_lea.sflag [#allocation4], 1
    %4470 = vsyncpa %s4469, 1
    %4471 = vsyncpa [#allocation5], 1
    %s4472 = scalar_lea.sflag [#allocation5], 1
    %4473 = vsyncpa %s4472, 1

</llo_original>
